<compile_context>
chip_gen: v7x
topology: tpu7x:2x2x1
jax: 0.10.0
libtpu: 0.0.40
codegen_flags: <defaults>
</compile_context>

<pallas_src>
import jax
import jax.numpy as jnp
from jax.experimental import pallas as pl
from jax.experimental.pallas import tpu as pltpu

NEG_SLOPE = 0.01          # nn.LeakyReLU default negative_slope
EPS = 1e-5                # nn.InstanceNorm2d default eps
USE_BF16_MXU = False      # flip to feed the v6e/v7x MXU bf16 (f32 accumulate);
                          # kept off to stay bit-close to the f32 reference.


def _leaky(x):
    return jnp.where(x > 0, x, NEG_SLOPE * x)


def _mm(a, b):
    if USE_BF16_MXU:
        a = a.astype(jnp.bfloat16)
        b = b.astype(jnp.bfloat16)
    return jnp.dot(a, b, preferred_element_type=jnp.float32)


# ----------------------------- fused cell kernel -----------------------------

def _make_cell_kernel(C, Ho, Wo):
    Hp, Wp = Ho + 2, Wo + 2
    L = Hp * Wp                      # padded-flat frame length
    Lw = (Ho - 1) * Wp + Wo          # working accumulator length (has junk cols)
    lo = Wp + 1                      # flat offset of output pixel (0,0) in a frame
    inv_cnt = 1.0 / float(Ho * Wo)   # InstanceNorm spatial count
    taps = [(ki, kj) for ki in range(3) for kj in range(3)]

    def conv3x3_inorm(x, w_ref, mask):
        # x: (C_in, L) padded-flat frame; w_ref: (9, C_out, C_in) tap-major.
        # Returns (C_out, Lw), InstanceNorm'd (affine=False); junk cols not yet zeroed.
        xr = _leaky(x)
        acc = None
        for t, (ki, kj) in enumerate(taps):
            off = ki * Wp + kj
            part = _mm(w_ref[t], xr[:, off:off + Lw])
            acc = part if acc is None else acc + part
        accm = acc * mask                                   # masked once, reused
        m = jnp.sum(accm, axis=1, keepdims=True) * inv_cnt
        ex2 = jnp.sum(accm * acc, axis=1, keepdims=True) * inv_cnt
        var = jnp.maximum(ex2 - m * m, 0.0)
        return (acc - m) * jax.lax.rsqrt(var + EPS)

    def avgpool3x3(x):
        # x: (C, L) padded-flat frame -> (C, Lw); count_include_pad=True semantics.
        acc = None
        for (ki, kj) in taps:
            off = ki * Wp + kj
            part = x[:, off:off + Lw]
            acc = part if acc is None else acc + part
        return acc * (1.0 / 9.0)

    def kernel(s0eo_ref, s1_ref, wfr_ref, g_ref, b_ref,
               wA_ref, wB_ref, wC_ref, mask_ref, out_ref, n0_ref):
        mask = mask_ref[...]                           # (1, Lw): 1 on real columns

        # zero all frame borders / junk once; interiors are overwritten below
        out_ref[...] = jnp.zeros(out_ref.shape, jnp.float32)
        n0_ref[...] = jnp.zeros(n0_ref.shape, jnp.float32)

        # --- both FactorizedReduce edges: one shared LeakyReLU + one matmul ---
        s0r = _leaky(s0eo_ref[0])                      # (2C, L), pad positions stay 0
        y = _mm(wfr_ref[...], s0r)                     # (2C, L); rows 0:C -> edge_s0_0
        # padded positions of y are exactly zero, so plain sums == masked sums
        m = jnp.sum(y, axis=1, keepdims=True) * inv_cnt
        ex2 = jnp.sum(y * y, axis=1, keepdims=True) * inv_cnt
        var = jnp.maximum(ex2 - m * m, 0.0)
        yn = (y - m) * jax.lax.rsqrt(var + EPS) * g_ref[...] + b_ref[...]
        fr0 = yn[0:C, lo:lo + Lw]                      # edge_s0_0 output slab
        fr1 = yn[C:2 * C, lo:lo + Lw]                  # edge_s0_1 output slab

        # node_0 = FactorizedReduce(s0) + ReluConvBn(s1; k3 s2 p2 d2)
        rcb0 = conv3x3_inorm(s1_ref[0], wA_ref, mask)
        n0_ref[:, lo:lo + Lw] = (fr0 + rcb0) * mask

        # node_1 = FactorizedReduce(s0) + AvgPool3x3(node_0)
        p0 = avgpool3x3(n0_ref[...])
        out_ref[0, 0:C, lo:lo + Lw] = (fr1 + p0) * mask

        # node_2 = node_0 + ReluConvBn(node_1; k3 s1 p1)
        rcb1 = conv3x3_inorm(out_ref[0, 0:C, :], wB_ref, mask)
        out_ref[0, C:2 * C, lo:lo + Lw] = (n0_ref[:, lo:lo + Lw] + rcb1) * mask

        # node_3 = ReluConvBn(node_0; k3 s1 p1) + AvgPool3x3(node_2)
        rcb2 = conv3x3_inorm(n0_ref[...], wC_ref, mask)
        p2 = avgpool3x3(out_ref[0, C:2 * C, :])
        out_ref[0, 2 * C:3 * C, lo:lo + Lw] = (rcb2 + p2) * mask

    return kernel


# --------------------------------- wrapper -----------------------------------

def reduction_cell(s0, s1, params):
    N, C, H, W = s0.shape
    assert s1.shape == (N, C, H, W)
    assert H % 2 == 0 and W % 2 == 0 and C % 2 == 0
    Ho, Wo = H // 2, W // 2
    Hp, Wp = Ho + 2, Wo + 2
    L = Hp * Wp
    Lw = (Ho - 1) * Wp + Wo
    Ch = C // 2
    f32 = jnp.float32

    s0 = s0.astype(f32)
    s1 = s1.astype(f32)

    # ---- host-side layout prep: strided slices / 1-pixel pads, no data blow-up ----
    s0e = s0[:, :, 0::2, 0::2]                         # conv_1 sampling grid
    s0o = s0[:, :, 1::2, 1::2]                         # conv_2 sampling grid
    s0eo = jnp.concatenate([s0e, s0o], axis=1)         # (N, 2C, Ho, Wo)
    s0eo_pf = jnp.pad(s0eo, ((0, 0), (0, 0), (1, 1), (1, 1))).reshape(N, 2 * C, L)
    # the k3/s2/p2/d2 conv only touches even rows/cols of the 2-padded input:
    s1sub = jnp.pad(s1, ((0, 0), (0, 0), (2, 2), (2, 2)))[:, :, 0::2, 0::2]
    s1sub_pf = s1sub.reshape(N, C, L)                  # (N, C, Hp*Wp), zero border

    def fr_block(w1, w2):
        # merge both 1x1 convs of one FactorizedReduce into a block-diagonal (C, 2C)
        w1 = w1.reshape(Ch, C).astype(f32)
        w2 = w2.reshape(Ch, C).astype(f32)
        z = jnp.zeros((Ch, C), f32)
        return jnp.concatenate(
            [jnp.concatenate([w1, z], axis=1),
             jnp.concatenate([z, w2], axis=1)], axis=0)

    def conv_weight(w):
        # (C_out, C_in, 3, 3) -> (9, C_out, C_in), tap-major; no in-kernel transpose
        co, ci = w.shape[0], w.shape[1]
        return jnp.transpose(w.astype(f32), (2, 3, 0, 1)).reshape(9, co, ci)

    # both FactorizedReduce edges row-stacked into a single (2C, 2C) matmul weight
    wfr = jnp.concatenate(
        [fr_block(params["s0_0_w1"], params["s0_0_w2"]),
         fr_block(params["s0_1_w1"], params["s0_1_w2"])], axis=0)
    g = jnp.concatenate([params["s0_0_gamma"].astype(f32),
                         params["s0_1_gamma"].astype(f32)]).reshape(2 * C, 1)
    b = jnp.concatenate([params["s0_0_beta"].astype(f32),
                         params["s0_1_beta"].astype(f32)]).reshape(2 * C, 1)
    wA = conv_weight(params["s1_0_w"])
    wB = conv_weight(params["e1_2_w"])
    wC = conv_weight(params["e0_3_w"])

    cols = jnp.arange(Lw, dtype=jnp.int32) % Wp
    mask_w = (cols < Wo).astype(f32).reshape(1, Lw)    # 1 on real output columns

    kernel = _make_cell_kernel(C, Ho, Wo)

    def rep(shape):
        nd = len(shape)
        return pl.BlockSpec(shape, lambda n, nd=nd: (0,) * nd)

    out_pf = pl.pallas_call(
        kernel,
        out_shape=jax.ShapeDtypeStruct((N, 3 * C, L), f32),
        grid=(N,),
        in_specs=[
            pl.BlockSpec((1, 2 * C, L), lambda n: (n, 0, 0)),
            pl.BlockSpec((1, C, L), lambda n: (n, 0, 0)),
            rep((2 * C, 2 * C)), rep((2 * C, 1)), rep((2 * C, 1)),
            rep((9, C, C)), rep((9, C, C)), rep((9, C, C)),
            rep((1, Lw)),
        ],
        out_specs=pl.BlockSpec((1, 3 * C, L), lambda n: (n, 0, 0)),
        scratch_shapes=[pltpu.VMEM((C, L), f32)],      # node_0 frame stays in VMEM
        compiler_params=pltpu.CompilerParams(dimension_semantics=("parallel",)),
    )(s0eo_pf, s1sub_pf, wfr, g, b, wA, wB, wC, mask_w)

    # drop the 1-pixel frame border: (N, 3C, Hp, Wp) -> (N, 3C, Ho, Wo)
    return out_pf.reshape(N, 3 * C, Hp, Wp)[:, :, 1:-1, 1:-1]


# --------------------------- pure-JAX reference -------------------------------

def _ref_inorm(y, gamma=None, beta=None):
    mean = jnp.mean(y, axis=(2, 3), keepdims=True)
    var = jnp.mean((y - mean) ** 2, axis=(2, 3), keepdims=True)
    out = (y - mean) * jax.lax.rsqrt(var + EPS)
    if gamma is not None:
        out = out * gamma.reshape(1, -1, 1, 1) + beta.reshape(1, -1, 1, 1)
    return out


def _ref_conv(x, w, stride, padding, dilation=1):
    return jax.lax.conv_general_dilated(
        x, w, window_strides=(stride, stride),
        padding=((padding, padding), (padding, padding)),
        rhs_dilation=(dilation, dilation),
        dimension_numbers=("NCHW", "OIHW", "NCHW"))


def _ref_rcb(x, w, stride, padding, dilation=1):
    return _ref_inorm(_ref_conv(_leaky(x), w, stride, padding, dilation))


def _ref_fr(x, w1, w2, gamma, beta):
    xr = _leaky(x)
    o1 = _ref_conv(xr, w1, 2, 0)
    o2 = _ref_conv(xr[:, :, 1:, 1:], w2, 2, 0)
    return _ref_inorm(jnp.concatenate([o1, o2], axis=1), gamma, beta)


def _ref_avgpool3(x):
    n, c, h, w = x.shape
    xp = jnp.pad(x, ((0, 0), (0, 0), (1, 1), (1, 1)))
    acc = jnp.zeros_like(x)
    for i in range(3):
        for j in range(3):
            acc = acc + xp[:, :, i:i + h, j:j + w]
    return acc / 9.0


def reduction_cell_reference(s0, s1, params):
    n0 = (_ref_fr(s0, params["s0_0_w1"], params["s0_0_w2"],
                  params["s0_0_gamma"], params["s0_0_beta"])
          + _ref_rcb(s1, params["s1_0_w"], 2, 2, 2))
    n1 = (_ref_fr(s0, params["s0_1_w1"], params["s0_1_w2"],
                  params["s0_1_gamma"], params["s0_1_beta"])
          + _ref_avgpool3(n0))
    n2 = n0 + _ref_rcb(n1, params["e1_2_w"], 1, 1)
    n3 = _ref_rcb(n0, params["e0_3_w"], 1, 1) + _ref_avgpool3(n2)
    return jnp.concatenate([n1, n2, n3], axis=1)


# ----------------------------------- demo ------------------------------------

if __name__ == "__main__":
    N, C, H, W = 2, 4, 16, 16
    key = jax.random.PRNGKey(0)
    ks = jax.random.split(key, 9)
    s0 = jax.random.normal(ks[0], (N, C, H, W), jnp.float32)
    s1 = jax.random.normal(ks[1], (N, C, H, W), jnp.float32)
    params = {
        # FactorizedReduce edge_s0_0 (InstanceNorm affine=True -> identity init)
        "s0_0_w1": 0.1 * jax.random.normal(ks[2], (C // 2, C, 1, 1), jnp.float32),
        "s0_0_w2": 0.1 * jax.random.normal(ks[3], (C // 2, C, 1, 1), jnp.float32),
        "s0_0_gamma": jnp.ones((C,), jnp.float32),
        "s0_0_beta": jnp.zeros((C,), jnp.float32),
        # ReluConvBn edge_s1_0 (k=3, s=2, p=2, d=2; InstanceNorm affine=False)
        "s1_0_w": 0.1 * jax.random.normal(ks[4], (C, C, 3, 3), jnp.float32),
        # FactorizedReduce edge_s0_1
        "s0_1_w1": 0.1 * jax.random.normal(ks[5], (C // 2, C, 1, 1), jnp.float32),
        "s0_1_w2": 0.1 * jax.random.normal(ks[6], (C // 2, C, 1, 1), jnp.float32),
        "s0_1_gamma": jnp.ones((C,), jnp.float32),
        "s0_1_beta": jnp.zeros((C,), jnp.float32),
        # ReluConvBn edge_1_2 / edge_0_3 (k=3, s=1, p=1)
        "e1_2_w": 0.1 * jax.random.normal(ks[7], (C, C, 3, 3), jnp.float32),
        "e0_3_w": 0.1 * jax.random.normal(ks[8], (C, C, 3, 3), jnp.float32),
    }

    out = jax.jit(reduction_cell)(s0, s1, params)
    out = jax.block_until_ready(out)
    assert out.shape == (N, 3 * C, H // 2, W // 2), out.shape
    assert bool(jnp.all(jnp.isfinite(out)))

    ref = jax.jit(reduction_cell_reference)(s0, s1, params)
    err = float(jnp.max(jnp.abs(out - ref)))
    assert err < 2e-3, f"mismatch vs reference: max|diff|={err}"
    print("KERNEL_OK")
</pallas_src>

<mosaic_0001>
module attributes {stable_mosaic.version = 11 : i64} {
  func.func @kernel(%arg0: i32, %arg1: memref<1x8x100xf32, #tpu.memory_space<vmem>>, %arg2: memref<1x4x100xf32, #tpu.memory_space<vmem>>, %arg3: memref<8x8xf32, #tpu.memory_space<vmem>>, %arg4: memref<8x1xf32, #tpu.memory_space<vmem>>, %arg5: memref<8x1xf32, #tpu.memory_space<vmem>>, %arg6: memref<9x4x4xf32, #tpu.memory_space<vmem>>, %arg7: memref<9x4x4xf32, #tpu.memory_space<vmem>>, %arg8: memref<9x4x4xf32, #tpu.memory_space<vmem>>, %arg9: memref<1x78xf32, #tpu.memory_space<vmem>>, %arg10: memref<1x12x100xf32, #tpu.memory_space<vmem>>, %arg11: memref<4x100xf32, #tpu.memory_space<vmem>>) attributes {dimension_semantics = [#tpu.dimension_semantics<parallel>], iteration_bounds = array<i64: 2>, scalar_prefetch = 0 : i64, scratch_operands = 1 : i64, tpu.core_type = #tpu.core_type<tc>, window_params = [{transform_indices = @transform_0, window_bounds = array<i64: 1, 8, 100>}, {transform_indices = @transform_1, window_bounds = array<i64: 1, 4, 100>}, {pipeline_mode = #tpu.pipeline_mode<synchronous>, transform_indices = @transform_2, window_bounds = array<i64: 8, 8>}, {pipeline_mode = #tpu.pipeline_mode<synchronous>, transform_indices = @transform_3, window_bounds = array<i64: 8, 1>}, {pipeline_mode = #tpu.pipeline_mode<synchronous>, transform_indices = @transform_4, window_bounds = array<i64: 8, 1>}, {pipeline_mode = #tpu.pipeline_mode<synchronous>, transform_indices = @transform_5, window_bounds = array<i64: 9, 4, 4>}, {pipeline_mode = #tpu.pipeline_mode<synchronous>, transform_indices = @transform_6, window_bounds = array<i64: 9, 4, 4>}, {pipeline_mode = #tpu.pipeline_mode<synchronous>, transform_indices = @transform_7, window_bounds = array<i64: 9, 4, 4>}, {pipeline_mode = #tpu.pipeline_mode<synchronous>, transform_indices = @transform_8, window_bounds = array<i64: 1, 78>}, {transform_indices = @transform_9, window_bounds = array<i64: 1, 12, 100>}]} {
    %c0 = arith.constant 0 : index
    %c0_0 = arith.constant 0 : index
    %0 = vector.load %arg9[%c0, %c0_0] : memref<1x78xf32, #tpu.memory_space<vmem>>, vector<1x78xf32>
    %cst = arith.constant 0.000000e+00 : f32
    %1 = vector.broadcast %cst : f32 to vector<1x12x100xf32>
    %c0_1 = arith.constant 0 : index
    %c0_2 = arith.constant 0 : index
    %c0_3 = arith.constant 0 : index
    %2 = vector.load %arg10[%c0_1, %c0_2, %c0_3] : memref<1x12x100xf32, #tpu.memory_space<vmem>>, vector<1x12x100xf32>
    tpu.vector_store %arg10[%c0_1, %c0_2, %c0_3], %1 {strides = array<i32>} : memref<1x12x100xf32, #tpu.memory_space<vmem>>, vector<1x12x100xf32>,
    %cst_4 = arith.constant 0.000000e+00 : f32
    %3 = vector.broadcast %cst_4 : f32 to vector<4x100xf32>
    %c0_5 = arith.constant 0 : index
    %c0_6 = arith.constant 0 : index
    %4 = vector.load %arg11[%c0_5, %c0_6] : memref<4x100xf32, #tpu.memory_space<vmem>>, vector<4x100xf32>
    tpu.vector_store %arg11[%c0_5, %c0_6], %3 {strides = array<i32>} : memref<4x100xf32, #tpu.memory_space<vmem>>, vector<4x100xf32>,
    %c0_7 = arith.constant 0 : index
    %c0_8 = arith.constant 0 : index
    %c0_9 = arith.constant 0 : index
    %5 = vector.load %arg1[%c0_7, %c0_8, %c0_9] : memref<1x8x100xf32, #tpu.memory_space<vmem>>, vector<1x8x100xf32>
    %6 = vector.shape_cast %5 : vector<1x8x100xf32> to vector<8x100xf32>
    %cst_10 = arith.constant 0.000000e+00 : f32
    %7 = vector.broadcast %cst_10 : f32 to vector<8x100xf32>
    %8 = arith.cmpf ogt, %6, %7 : vector<8x100xf32>
    %cst_11 = arith.constant 0.00999999977 : f32
    %9 = vector.broadcast %cst_11 : f32 to vector<8x100xf32>
    %10 = arith.mulf %9, %6 : vector<8x100xf32>
    %11 = arith.select %8, %6, %10 : vector<8x100xi1>, vector<8x100xf32>
    %c0_12 = arith.constant 0 : index
    %c0_13 = arith.constant 0 : index
    %12 = vector.load %arg3[%c0_12, %c0_13] : memref<8x8xf32, #tpu.memory_space<vmem>>, vector<8x8xf32>
    %cst_14 = arith.constant dense<0.000000e+00> : vector<8x100xf32>
    %13 = tpu.matmul %12, %11, %cst_14 {dimension_numbers = #tpu.dot_dimension_numbers<[1], [0], [0], [1], [0, 0, 1, 1], [], []>} : vector<8x8xf32>, vector<8x100xf32>, vector<8x100xf32> -> vector<8x100xf32>
    %cst_15 = arith.constant dense<0.000000e+00> : vector<8xf32>
    %14 = vector.multi_reduction <add>, %13, %cst_15 [1] : vector<8x100xf32> to vector<8xf32>
    %15 = vector.shape_cast %14 : vector<8xf32> to vector<8x1xf32>
    %cst_16 = arith.constant 1.562500e-02 : f32
    %16 = vector.broadcast %cst_16 : f32 to vector<8x1xf32>
    %17 = arith.mulf %15, %16 : vector<8x1xf32>
    %18 = arith.mulf %13, %13 : vector<8x100xf32>
    %cst_17 = arith.constant dense<0.000000e+00> : vector<8xf32>
    %19 = vector.multi_reduction <add>, %18, %cst_17 [1] : vector<8x100xf32> to vector<8xf32>
    %20 = vector.shape_cast %19 : vector<8xf32> to vector<8x1xf32>
    %cst_18 = arith.constant 1.562500e-02 : f32
    %21 = vector.broadcast %cst_18 : f32 to vector<8x1xf32>
    %22 = arith.mulf %20, %21 : vector<8x1xf32>
    %23 = arith.mulf %17, %17 : vector<8x1xf32>
    %24 = arith.subf %22, %23 : vector<8x1xf32>
    %cst_19 = arith.constant 0.000000e+00 : f32
    %25 = vector.broadcast %cst_19 : f32 to vector<8x1xf32>
    %26 = arith.maximumf %24, %25 : vector<8x1xf32>
    %27 = vector.broadcast %17 : vector<8x1xf32> to vector<8x100xf32>
    %28 = arith.subf %13, %27 : vector<8x100xf32>
    %cst_20 = arith.constant 9.99999974E-6 : f32
    %29 = vector.broadcast %cst_20 : f32 to vector<8x1xf32>
    %30 = arith.addf %26, %29 : vector<8x1xf32>
    %31 = math.rsqrt %30 : vector<8x1xf32>
    %32 = vector.broadcast %31 : vector<8x1xf32> to vector<8x100xf32>
    %33 = arith.mulf %28, %32 : vector<8x100xf32>
    %c0_21 = arith.constant 0 : index
    %c0_22 = arith.constant 0 : index
    %34 = vector.load %arg4[%c0_21, %c0_22] : memref<8x1xf32, #tpu.memory_space<vmem>>, vector<8x1xf32>
    %35 = vector.broadcast %34 : vector<8x1xf32> to vector<8x100xf32>
    %36 = arith.mulf %33, %35 : vector<8x100xf32>
    %c0_23 = arith.constant 0 : index
    %c0_24 = arith.constant 0 : index
    %37 = vector.load %arg5[%c0_23, %c0_24] : memref<8x1xf32, #tpu.memory_space<vmem>>, vector<8x1xf32>
    %38 = vector.broadcast %37 : vector<8x1xf32> to vector<8x100xf32>
    %39 = arith.addf %36, %38 : vector<8x100xf32>
    %40 = vector.extract_strided_slice %39 {offsets = [0, 11], sizes = [4, 78], strides = [1, 1]} : vector<8x100xf32> to vector<4x78xf32>
    %41 = vector.extract_strided_slice %39 {offsets = [4, 11], sizes = [4, 78], strides = [1, 1]} : vector<8x100xf32> to vector<4x78xf32>
    %c0_25 = arith.constant 0 : index
    %c0_26 = arith.constant 0 : index
    %c0_27 = arith.constant 0 : index
    %42 = vector.load %arg2[%c0_25, %c0_26, %c0_27] : memref<1x4x100xf32, #tpu.memory_space<vmem>>, vector<1x4x100xf32>
    %43 = vector.shape_cast %42 : vector<1x4x100xf32> to vector<4x100xf32>
    %cst_28 = arith.constant 0.000000e+00 : f32
    %44 = vector.broadcast %cst_28 : f32 to vector<4x100xf32>
    %45 = arith.cmpf ogt, %43, %44 : vector<4x100xf32>
    %cst_29 = arith.constant 0.00999999977 : f32
    %46 = vector.broadcast %cst_29 : f32 to vector<4x100xf32>
    %47 = arith.mulf %46, %43 : vector<4x100xf32>
    %48 = arith.select %45, %43, %47 : vector<4x100xi1>, vector<4x100xf32>
    %c0_30 = arith.constant 0 : index
    %c0_31 = arith.constant 0 : index
    %c0_32 = arith.constant 0 : index
    %49 = vector.load %arg6[%c0_30, %c0_31, %c0_32] : memref<9x4x4xf32, #tpu.memory_space<vmem>>, vector<1x4x4xf32>
    %50 = vector.shape_cast %49 : vector<1x4x4xf32> to vector<4x4xf32>
    %51 = vector.extract_strided_slice %48 {offsets = [0, 0], sizes = [4, 78], strides = [1, 1]} : vector<4x100xf32> to vector<4x78xf32>
    %cst_33 = arith.constant dense<0.000000e+00> : vector<4x78xf32>
    %52 = tpu.matmul %50, %51, %cst_33 {dimension_numbers = #tpu.dot_dimension_numbers<[1], [0], [0], [1], [0, 0, 1, 1], [], []>} : vector<4x4xf32>, vector<4x78xf32>, vector<4x78xf32> -> vector<4x78xf32>
    %c1 = arith.constant 1 : index
    %c0_34 = arith.constant 0 : index
    %c0_35 = arith.constant 0 : index
    %53 = vector.load %arg6[%c1, %c0_34, %c0_35] : memref<9x4x4xf32, #tpu.memory_space<vmem>>, vector<1x4x4xf32>
    %54 = vector.shape_cast %53 : vector<1x4x4xf32> to vector<4x4xf32>
    %55 = vector.extract_strided_slice %48 {offsets = [0, 1], sizes = [4, 78], strides = [1, 1]} : vector<4x100xf32> to vector<4x78xf32>
    %cst_36 = arith.constant dense<0.000000e+00> : vector<4x78xf32>
    %56 = tpu.matmul %54, %55, %cst_36 {dimension_numbers = #tpu.dot_dimension_numbers<[1], [0], [0], [1], [0, 0, 1, 1], [], []>} : vector<4x4xf32>, vector<4x78xf32>, vector<4x78xf32> -> vector<4x78xf32>
    %57 = arith.addf %52, %56 : vector<4x78xf32>
    %c2 = arith.constant 2 : index
    %c0_37 = arith.constant 0 : index
    %c0_38 = arith.constant 0 : index
    %58 = vector.load %arg6[%c2, %c0_37, %c0_38] : memref<9x4x4xf32, #tpu.memory_space<vmem>>, vector<1x4x4xf32>
    %59 = vector.shape_cast %58 : vector<1x4x4xf32> to vector<4x4xf32>
    %60 = vector.extract_strided_slice %48 {offsets = [0, 2], sizes = [4, 78], strides = [1, 1]} : vector<4x100xf32> to vector<4x78xf32>
    %cst_39 = arith.constant dense<0.000000e+00> : vector<4x78xf32>
    %61 = tpu.matmul %59, %60, %cst_39 {dimension_numbers = #tpu.dot_dimension_numbers<[1], [0], [0], [1], [0, 0, 1, 1], [], []>} : vector<4x4xf32>, vector<4x78xf32>, vector<4x78xf32> -> vector<4x78xf32>
    %62 = arith.addf %57, %61 : vector<4x78xf32>
    %c3 = arith.constant 3 : index
    %c0_40 = arith.constant 0 : index
    %c0_41 = arith.constant 0 : index
    %63 = vector.load %arg6[%c3, %c0_40, %c0_41] : memref<9x4x4xf32, #tpu.memory_space<vmem>>, vector<1x4x4xf32>
    %64 = vector.shape_cast %63 : vector<1x4x4xf32> to vector<4x4xf32>
    %65 = vector.extract_strided_slice %48 {offsets = [0, 10], sizes = [4, 78], strides = [1, 1]} : vector<4x100xf32> to vector<4x78xf32>
    %cst_42 = arith.constant dense<0.000000e+00> : vector<4x78xf32>
    %66 = tpu.matmul %64, %65, %cst_42 {dimension_numbers = #tpu.dot_dimension_numbers<[1], [0], [0], [1], [0, 0, 1, 1], [], []>} : vector<4x4xf32>, vector<4x78xf32>, vector<4x78xf32> -> vector<4x78xf32>
    %67 = arith.addf %62, %66 : vector<4x78xf32>
    %c4 = arith.constant 4 : index
    %c0_43 = arith.constant 0 : index
    %c0_44 = arith.constant 0 : index
    %68 = vector.load %arg6[%c4, %c0_43, %c0_44] : memref<9x4x4xf32, #tpu.memory_space<vmem>>, vector<1x4x4xf32>
    %69 = vector.shape_cast %68 : vector<1x4x4xf32> to vector<4x4xf32>
    %70 = vector.extract_strided_slice %48 {offsets = [0, 11], sizes = [4, 78], strides = [1, 1]} : vector<4x100xf32> to vector<4x78xf32>
    %cst_45 = arith.constant dense<0.000000e+00> : vector<4x78xf32>
    %71 = tpu.matmul %69, %70, %cst_45 {dimension_numbers = #tpu.dot_dimension_numbers<[1], [0], [0], [1], [0, 0, 1, 1], [], []>} : vector<4x4xf32>, vector<4x78xf32>, vector<4x78xf32> -> vector<4x78xf32>
    %72 = arith.addf %67, %71 : vector<4x78xf32>
    %c5 = arith.constant 5 : index
    %c0_46 = arith.constant 0 : index
    %c0_47 = arith.constant 0 : index
    %73 = vector.load %arg6[%c5, %c0_46, %c0_47] : memref<9x4x4xf32, #tpu.memory_space<vmem>>, vector<1x4x4xf32>
    %74 = vector.shape_cast %73 : vector<1x4x4xf32> to vector<4x4xf32>
    %75 = vector.extract_strided_slice %48 {offsets = [0, 12], sizes = [4, 78], strides = [1, 1]} : vector<4x100xf32> to vector<4x78xf32>
    %cst_48 = arith.constant dense<0.000000e+00> : vector<4x78xf32>
    %76 = tpu.matmul %74, %75, %cst_48 {dimension_numbers = #tpu.dot_dimension_numbers<[1], [0], [0], [1], [0, 0, 1, 1], [], []>} : vector<4x4xf32>, vector<4x78xf32>, vector<4x78xf32> -> vector<4x78xf32>
    %77 = arith.addf %72, %76 : vector<4x78xf32>
    %c6 = arith.constant 6 : index
    %c0_49 = arith.constant 0 : index
    %c0_50 = arith.constant 0 : index
    %78 = vector.load %arg6[%c6, %c0_49, %c0_50] : memref<9x4x4xf32, #tpu.memory_space<vmem>>, vector<1x4x4xf32>
    %79 = vector.shape_cast %78 : vector<1x4x4xf32> to vector<4x4xf32>
    %80 = vector.extract_strided_slice %48 {offsets = [0, 20], sizes = [4, 78], strides = [1, 1]} : vector<4x100xf32> to vector<4x78xf32>
    %cst_51 = arith.constant dense<0.000000e+00> : vector<4x78xf32>
    %81 = tpu.matmul %79, %80, %cst_51 {dimension_numbers = #tpu.dot_dimension_numbers<[1], [0], [0], [1], [0, 0, 1, 1], [], []>} : vector<4x4xf32>, vector<4x78xf32>, vector<4x78xf32> -> vector<4x78xf32>
    %82 = arith.addf %77, %81 : vector<4x78xf32>
    %c7 = arith.constant 7 : index
    %c0_52 = arith.constant 0 : index
    %c0_53 = arith.constant 0 : index
    %83 = vector.load %arg6[%c7, %c0_52, %c0_53] : memref<9x4x4xf32, #tpu.memory_space<vmem>>, vector<1x4x4xf32>
    %84 = vector.shape_cast %83 : vector<1x4x4xf32> to vector<4x4xf32>
    %85 = vector.extract_strided_slice %48 {offsets = [0, 21], sizes = [4, 78], strides = [1, 1]} : vector<4x100xf32> to vector<4x78xf32>
    %cst_54 = arith.constant dense<0.000000e+00> : vector<4x78xf32>
    %86 = tpu.matmul %84, %85, %cst_54 {dimension_numbers = #tpu.dot_dimension_numbers<[1], [0], [0], [1], [0, 0, 1, 1], [], []>} : vector<4x4xf32>, vector<4x78xf32>, vector<4x78xf32> -> vector<4x78xf32>
    %87 = arith.addf %82, %86 : vector<4x78xf32>
    %c8 = arith.constant 8 : index
    %c0_55 = arith.constant 0 : index
    %c0_56 = arith.constant 0 : index
    %88 = vector.load %arg6[%c8, %c0_55, %c0_56] : memref<9x4x4xf32, #tpu.memory_space<vmem>>, vector<1x4x4xf32>
    %89 = vector.shape_cast %88 : vector<1x4x4xf32> to vector<4x4xf32>
    %90 = vector.extract_strided_slice %48 {offsets = [0, 22], sizes = [4, 78], strides = [1, 1]} : vector<4x100xf32> to vector<4x78xf32>
    %cst_57 = arith.constant dense<0.000000e+00> : vector<4x78xf32>
    %91 = tpu.matmul %89, %90, %cst_57 {dimension_numbers = #tpu.dot_dimension_numbers<[1], [0], [0], [1], [0, 0, 1, 1], [], []>} : vector<4x4xf32>, vector<4x78xf32>, vector<4x78xf32> -> vector<4x78xf32>
    %92 = arith.addf %87, %91 : vector<4x78xf32>
    %93 = vector.broadcast %0 : vector<1x78xf32> to vector<4x78xf32>
    %94 = arith.mulf %92, %93 : vector<4x78xf32>
    %cst_58 = arith.constant dense<0.000000e+00> : vector<4xf32>
    %95 = vector.multi_reduction <add>, %94, %cst_58 [1] : vector<4x78xf32> to vector<4xf32>
    %96 = vector.shape_cast %95 : vector<4xf32> to vector<4x1xf32>
    %cst_59 = arith.constant 1.562500e-02 : f32
    %97 = vector.broadcast %cst_59 : f32 to vector<4x1xf32>
    %98 = arith.mulf %96, %97 : vector<4x1xf32>
    %99 = arith.mulf %94, %92 : vector<4x78xf32>
    %cst_60 = arith.constant dense<0.000000e+00> : vector<4xf32>
    %100 = vector.multi_reduction <add>, %99, %cst_60 [1] : vector<4x78xf32> to vector<4xf32>
    %101 = vector.shape_cast %100 : vector<4xf32> to vector<4x1xf32>
    %cst_61 = arith.constant 1.562500e-02 : f32
    %102 = vector.broadcast %cst_61 : f32 to vector<4x1xf32>
    %103 = arith.mulf %101, %102 : vector<4x1xf32>
    %104 = arith.mulf %98, %98 : vector<4x1xf32>
    %105 = arith.subf %103, %104 : vector<4x1xf32>
    %cst_62 = arith.constant 0.000000e+00 : f32
    %106 = vector.broadcast %cst_62 : f32 to vector<4x1xf32>
    %107 = arith.maximumf %105, %106 : vector<4x1xf32>
    %108 = vector.broadcast %98 : vector<4x1xf32> to vector<4x78xf32>
    %109 = arith.subf %92, %108 : vector<4x78xf32>
    %cst_63 = arith.constant 9.99999974E-6 : f32
    %110 = vector.broadcast %cst_63 : f32 to vector<4x1xf32>
    %111 = arith.addf %107, %110 : vector<4x1xf32>
    %112 = math.rsqrt %111 : vector<4x1xf32>
    %113 = vector.broadcast %112 : vector<4x1xf32> to vector<4x78xf32>
    %114 = arith.mulf %109, %113 : vector<4x78xf32>
    %115 = arith.addf %40, %114 : vector<4x78xf32>
    %116 = vector.broadcast %0 : vector<1x78xf32> to vector<4x78xf32>
    %117 = arith.mulf %115, %116 : vector<4x78xf32>
    %c0_64 = arith.constant 0 : index
    %c11 = arith.constant 11 : index
    %118 = vector.load %arg11[%c0_64, %c11] : memref<4x100xf32, #tpu.memory_space<vmem>>, vector<4x78xf32>
    tpu.vector_store %arg11[%c0_64, %c11], %117 {strides = array<i32>} : memref<4x100xf32, #tpu.memory_space<vmem>>, vector<4x78xf32>,
    %c0_65 = arith.constant 0 : index
    %c0_66 = arith.constant 0 : index
    %119 = vector.load %arg11[%c0_65, %c0_66] : memref<4x100xf32, #tpu.memory_space<vmem>>, vector<4x100xf32>
    %120 = vector.extract_strided_slice %119 {offsets = [0, 0], sizes = [4, 78], strides = [1, 1]} : vector<4x100xf32> to vector<4x78xf32>
    %121 = vector.extract_strided_slice %119 {offsets = [0, 1], sizes = [4, 78], strides = [1, 1]} : vector<4x100xf32> to vector<4x78xf32>
    %122 = arith.addf %120, %121 : vector<4x78xf32>
    %123 = vector.extract_strided_slice %119 {offsets = [0, 2], sizes = [4, 78], strides = [1, 1]} : vector<4x100xf32> to vector<4x78xf32>
    %124 = arith.addf %122, %123 : vector<4x78xf32>
    %125 = vector.extract_strided_slice %119 {offsets = [0, 10], sizes = [4, 78], strides = [1, 1]} : vector<4x100xf32> to vector<4x78xf32>
    %126 = arith.addf %124, %125 : vector<4x78xf32>
    %127 = vector.extract_strided_slice %119 {offsets = [0, 11], sizes = [4, 78], strides = [1, 1]} : vector<4x100xf32> to vector<4x78xf32>
    %128 = arith.addf %126, %127 : vector<4x78xf32>
    %129 = vector.extract_strided_slice %119 {offsets = [0, 12], sizes = [4, 78], strides = [1, 1]} : vector<4x100xf32> to vector<4x78xf32>
    %130 = arith.addf %128, %129 : vector<4x78xf32>
    %131 = vector.extract_strided_slice %119 {offsets = [0, 20], sizes = [4, 78], strides = [1, 1]} : vector<4x100xf32> to vector<4x78xf32>
    %132 = arith.addf %130, %131 : vector<4x78xf32>
    %133 = vector.extract_strided_slice %119 {offsets = [0, 21], sizes = [4, 78], strides = [1, 1]} : vector<4x100xf32> to vector<4x78xf32>
    %134 = arith.addf %132, %133 : vector<4x78xf32>
    %135 = vector.extract_strided_slice %119 {offsets = [0, 22], sizes = [4, 78], strides = [1, 1]} : vector<4x100xf32> to vector<4x78xf32>
    %136 = arith.addf %134, %135 : vector<4x78xf32>
    %cst_67 = arith.constant 0.111111112 : f32
    %137 = vector.broadcast %cst_67 : f32 to vector<4x78xf32>
    %138 = arith.mulf %136, %137 : vector<4x78xf32>
    %139 = arith.addf %41, %138 : vector<4x78xf32>
    %140 = vector.broadcast %0 : vector<1x78xf32> to vector<4x78xf32>
    %141 = arith.mulf %139, %140 : vector<4x78xf32>
    %c0_68 = arith.constant 0 : index
    %c0_69 = arith.constant 0 : index
    %c11_70 = arith.constant 11 : index
    %142 = vector.load %arg10[%c0_68, %c0_69, %c11_70] : memref<1x12x100xf32, #tpu.memory_space<vmem>>, vector<1x4x78xf32>
    %143 = vector.shape_cast %142 : vector<1x4x78xf32> to vector<4x78xf32>
    %144 = vector.shape_cast %141 : vector<4x78xf32> to vector<1x4x78xf32>
    tpu.vector_store %arg10[%c0_68, %c0_69, %c11_70], %144 {strides = array<i32>} : memref<1x12x100xf32, #tpu.memory_space<vmem>>, vector<1x4x78xf32>,
    %c0_71 = arith.constant 0 : index
    %c0_72 = arith.constant 0 : index
    %c0_73 = arith.constant 0 : index
    %145 = vector.load %arg10[%c0_71, %c0_72, %c0_73] : memref<1x12x100xf32, #tpu.memory_space<vmem>>, vector<1x4x100xf32>
    %146 = vector.shape_cast %145 : vector<1x4x100xf32> to vector<4x100xf32>
    %cst_74 = arith.constant 0.000000e+00 : f32
    %147 = vector.broadcast %cst_74 : f32 to vector<4x100xf32>
    %148 = arith.cmpf ogt, %146, %147 : vector<4x100xf32>
    %cst_75 = arith.constant 0.00999999977 : f32
    %149 = vector.broadcast %cst_75 : f32 to vector<4x100xf32>
    %150 = arith.mulf %149, %146 : vector<4x100xf32>
    %151 = arith.select %148, %146, %150 : vector<4x100xi1>, vector<4x100xf32>
    %c0_76 = arith.constant 0 : index
    %c0_77 = arith.constant 0 : index
    %c0_78 = arith.constant 0 : index
    %152 = vector.load %arg7[%c0_76, %c0_77, %c0_78] : memref<9x4x4xf32, #tpu.memory_space<vmem>>, vector<1x4x4xf32>
    %153 = vector.shape_cast %152 : vector<1x4x4xf32> to vector<4x4xf32>
    %154 = vector.extract_strided_slice %151 {offsets = [0, 0], sizes = [4, 78], strides = [1, 1]} : vector<4x100xf32> to vector<4x78xf32>
    %cst_79 = arith.constant dense<0.000000e+00> : vector<4x78xf32>
    %155 = tpu.matmul %153, %154, %cst_79 {dimension_numbers = #tpu.dot_dimension_numbers<[1], [0], [0], [1], [0, 0, 1, 1], [], []>} : vector<4x4xf32>, vector<4x78xf32>, vector<4x78xf32> -> vector<4x78xf32>
    %c1_80 = arith.constant 1 : index
    %c0_81 = arith.constant 0 : index
    %c0_82 = arith.constant 0 : index
    %156 = vector.load %arg7[%c1_80, %c0_81, %c0_82] : memref<9x4x4xf32, #tpu.memory_space<vmem>>, vector<1x4x4xf32>
    %157 = vector.shape_cast %156 : vector<1x4x4xf32> to vector<4x4xf32>
    %158 = vector.extract_strided_slice %151 {offsets = [0, 1], sizes = [4, 78], strides = [1, 1]} : vector<4x100xf32> to vector<4x78xf32>
    %cst_83 = arith.constant dense<0.000000e+00> : vector<4x78xf32>
    %159 = tpu.matmul %157, %158, %cst_83 {dimension_numbers = #tpu.dot_dimension_numbers<[1], [0], [0], [1], [0, 0, 1, 1], [], []>} : vector<4x4xf32>, vector<4x78xf32>, vector<4x78xf32> -> vector<4x78xf32>
    %160 = arith.addf %155, %159 : vector<4x78xf32>
    %c2_84 = arith.constant 2 : index
    %c0_85 = arith.constant 0 : index
    %c0_86 = arith.constant 0 : index
    %161 = vector.load %arg7[%c2_84, %c0_85, %c0_86] : memref<9x4x4xf32, #tpu.memory_space<vmem>>, vector<1x4x4xf32>
    %162 = vector.shape_cast %161 : vector<1x4x4xf32> to vector<4x4xf32>
    %163 = vector.extract_strided_slice %151 {offsets = [0, 2], sizes = [4, 78], strides = [1, 1]} : vector<4x100xf32> to vector<4x78xf32>
    %cst_87 = arith.constant dense<0.000000e+00> : vector<4x78xf32>
    %164 = tpu.matmul %162, %163, %cst_87 {dimension_numbers = #tpu.dot_dimension_numbers<[1], [0], [0], [1], [0, 0, 1, 1], [], []>} : vector<4x4xf32>, vector<4x78xf32>, vector<4x78xf32> -> vector<4x78xf32>
    %165 = arith.addf %160, %164 : vector<4x78xf32>
    %c3_88 = arith.constant 3 : index
    %c0_89 = arith.constant 0 : index
    %c0_90 = arith.constant 0 : index
    %166 = vector.load %arg7[%c3_88, %c0_89, %c0_90] : memref<9x4x4xf32, #tpu.memory_space<vmem>>, vector<1x4x4xf32>
    %167 = vector.shape_cast %166 : vector<1x4x4xf32> to vector<4x4xf32>
    %168 = vector.extract_strided_slice %151 {offsets = [0, 10], sizes = [4, 78], strides = [1, 1]} : vector<4x100xf32> to vector<4x78xf32>
    %cst_91 = arith.constant dense<0.000000e+00> : vector<4x78xf32>
    %169 = tpu.matmul %167, %168, %cst_91 {dimension_numbers = #tpu.dot_dimension_numbers<[1], [0], [0], [1], [0, 0, 1, 1], [], []>} : vector<4x4xf32>, vector<4x78xf32>, vector<4x78xf32> -> vector<4x78xf32>
    %170 = arith.addf %165, %169 : vector<4x78xf32>
    %c4_92 = arith.constant 4 : index
    %c0_93 = arith.constant 0 : index
    %c0_94 = arith.constant 0 : index
    %171 = vector.load %arg7[%c4_92, %c0_93, %c0_94] : memref<9x4x4xf32, #tpu.memory_space<vmem>>, vector<1x4x4xf32>
    %172 = vector.shape_cast %171 : vector<1x4x4xf32> to vector<4x4xf32>
    %173 = vector.extract_strided_slice %151 {offsets = [0, 11], sizes = [4, 78], strides = [1, 1]} : vector<4x100xf32> to vector<4x78xf32>
    %cst_95 = arith.constant dense<0.000000e+00> : vector<4x78xf32>
    %174 = tpu.matmul %172, %173, %cst_95 {dimension_numbers = #tpu.dot_dimension_numbers<[1], [0], [0], [1], [0, 0, 1, 1], [], []>} : vector<4x4xf32>, vector<4x78xf32>, vector<4x78xf32> -> vector<4x78xf32>
    %175 = arith.addf %170, %174 : vector<4x78xf32>
    %c5_96 = arith.constant 5 : index
    %c0_97 = arith.constant 0 : index
    %c0_98 = arith.constant 0 : index
    %176 = vector.load %arg7[%c5_96, %c0_97, %c0_98] : memref<9x4x4xf32, #tpu.memory_space<vmem>>, vector<1x4x4xf32>
    %177 = vector.shape_cast %176 : vector<1x4x4xf32> to vector<4x4xf32>
    %178 = vector.extract_strided_slice %151 {offsets = [0, 12], sizes = [4, 78], strides = [1, 1]} : vector<4x100xf32> to vector<4x78xf32>
    %cst_99 = arith.constant dense<0.000000e+00> : vector<4x78xf32>
    %179 = tpu.matmul %177, %178, %cst_99 {dimension_numbers = #tpu.dot_dimension_numbers<[1], [0], [0], [1], [0, 0, 1, 1], [], []>} : vector<4x4xf32>, vector<4x78xf32>, vector<4x78xf32> -> vector<4x78xf32>
    %180 = arith.addf %175, %179 : vector<4x78xf32>
    %c6_100 = arith.constant 6 : index
    %c0_101 = arith.constant 0 : index
    %c0_102 = arith.constant 0 : index
    %181 = vector.load %arg7[%c6_100, %c0_101, %c0_102] : memref<9x4x4xf32, #tpu.memory_space<vmem>>, vector<1x4x4xf32>
    %182 = vector.shape_cast %181 : vector<1x4x4xf32> to vector<4x4xf32>
    %183 = vector.extract_strided_slice %151 {offsets = [0, 20], sizes = [4, 78], strides = [1, 1]} : vector<4x100xf32> to vector<4x78xf32>
    %cst_103 = arith.constant dense<0.000000e+00> : vector<4x78xf32>
    %184 = tpu.matmul %182, %183, %cst_103 {dimension_numbers = #tpu.dot_dimension_numbers<[1], [0], [0], [1], [0, 0, 1, 1], [], []>} : vector<4x4xf32>, vector<4x78xf32>, vector<4x78xf32> -> vector<4x78xf32>
    %185 = arith.addf %180, %184 : vector<4x78xf32>
    %c7_104 = arith.constant 7 : index
    %c0_105 = arith.constant 0 : index
    %c0_106 = arith.constant 0 : index
    %186 = vector.load %arg7[%c7_104, %c0_105, %c0_106] : memref<9x4x4xf32, #tpu.memory_space<vmem>>, vector<1x4x4xf32>
    %187 = vector.shape_cast %186 : vector<1x4x4xf32> to vector<4x4xf32>
    %188 = vector.extract_strided_slice %151 {offsets = [0, 21], sizes = [4, 78], strides = [1, 1]} : vector<4x100xf32> to vector<4x78xf32>
    %cst_107 = arith.constant dense<0.000000e+00> : vector<4x78xf32>
    %189 = tpu.matmul %187, %188, %cst_107 {dimension_numbers = #tpu.dot_dimension_numbers<[1], [0], [0], [1], [0, 0, 1, 1], [], []>} : vector<4x4xf32>, vector<4x78xf32>, vector<4x78xf32> -> vector<4x78xf32>
    %190 = arith.addf %185, %189 : vector<4x78xf32>
    %c8_108 = arith.constant 8 : index
    %c0_109 = arith.constant 0 : index
    %c0_110 = arith.constant 0 : index
    %191 = vector.load %arg7[%c8_108, %c0_109, %c0_110] : memref<9x4x4xf32, #tpu.memory_space<vmem>>, vector<1x4x4xf32>
    %192 = vector.shape_cast %191 : vector<1x4x4xf32> to vector<4x4xf32>
    %193 = vector.extract_strided_slice %151 {offsets = [0, 22], sizes = [4, 78], strides = [1, 1]} : vector<4x100xf32> to vector<4x78xf32>
    %cst_111 = arith.constant dense<0.000000e+00> : vector<4x78xf32>
    %194 = tpu.matmul %192, %193, %cst_111 {dimension_numbers = #tpu.dot_dimension_numbers<[1], [0], [0], [1], [0, 0, 1, 1], [], []>} : vector<4x4xf32>, vector<4x78xf32>, vector<4x78xf32> -> vector<4x78xf32>
    %195 = arith.addf %190, %194 : vector<4x78xf32>
    %196 = vector.broadcast %0 : vector<1x78xf32> to vector<4x78xf32>
    %197 = arith.mulf %195, %196 : vector<4x78xf32>
    %cst_112 = arith.constant dense<0.000000e+00> : vector<4xf32>
    %198 = vector.multi_reduction <add>, %197, %cst_112 [1] : vector<4x78xf32> to vector<4xf32>
    %199 = vector.shape_cast %198 : vector<4xf32> to vector<4x1xf32>
    %cst_113 = arith.constant 1.562500e-02 : f32
    %200 = vector.broadcast %cst_113 : f32 to vector<4x1xf32>
    %201 = arith.mulf %199, %200 : vector<4x1xf32>
    %202 = arith.mulf %197, %195 : vector<4x78xf32>
    %cst_114 = arith.constant dense<0.000000e+00> : vector<4xf32>
    %203 = vector.multi_reduction <add>, %202, %cst_114 [1] : vector<4x78xf32> to vector<4xf32>
    %204 = vector.shape_cast %203 : vector<4xf32> to vector<4x1xf32>
    %cst_115 = arith.constant 1.562500e-02 : f32
    %205 = vector.broadcast %cst_115 : f32 to vector<4x1xf32>
    %206 = arith.mulf %204, %205 : vector<4x1xf32>
    %207 = arith.mulf %201, %201 : vector<4x1xf32>
    %208 = arith.subf %206, %207 : vector<4x1xf32>
    %cst_116 = arith.constant 0.000000e+00 : f32
    %209 = vector.broadcast %cst_116 : f32 to vector<4x1xf32>
    %210 = arith.maximumf %208, %209 : vector<4x1xf32>
    %211 = vector.broadcast %201 : vector<4x1xf32> to vector<4x78xf32>
    %212 = arith.subf %195, %211 : vector<4x78xf32>
    %cst_117 = arith.constant 9.99999974E-6 : f32
    %213 = vector.broadcast %cst_117 : f32 to vector<4x1xf32>
    %214 = arith.addf %210, %213 : vector<4x1xf32>
    %215 = math.rsqrt %214 : vector<4x1xf32>
    %216 = vector.broadcast %215 : vector<4x1xf32> to vector<4x78xf32>
    %217 = arith.mulf %212, %216 : vector<4x78xf32>
    %c0_118 = arith.constant 0 : index
    %c11_119 = arith.constant 11 : index
    %218 = vector.load %arg11[%c0_118, %c11_119] : memref<4x100xf32, #tpu.memory_space<vmem>>, vector<4x78xf32>
    %219 = arith.addf %218, %217 : vector<4x78xf32>
    %220 = vector.broadcast %0 : vector<1x78xf32> to vector<4x78xf32>
    %221 = arith.mulf %219, %220 : vector<4x78xf32>
    %c0_120 = arith.constant 0 : index
    %c4_121 = arith.constant 4 : index
    %c11_122 = arith.constant 11 : index
    %222 = vector.load %arg10[%c0_120, %c4_121, %c11_122] : memref<1x12x100xf32, #tpu.memory_space<vmem>>, vector<1x4x78xf32>
    %223 = vector.shape_cast %222 : vector<1x4x78xf32> to vector<4x78xf32>
    %224 = vector.shape_cast %221 : vector<4x78xf32> to vector<1x4x78xf32>
    tpu.vector_store %arg10[%c0_120, %c4_121, %c11_122], %224 {strides = array<i32>} : memref<1x12x100xf32, #tpu.memory_space<vmem>>, vector<1x4x78xf32>,
    %c0_123 = arith.constant 0 : index
    %c0_124 = arith.constant 0 : index
    %225 = vector.load %arg11[%c0_123, %c0_124] : memref<4x100xf32, #tpu.memory_space<vmem>>, vector<4x100xf32>
    %cst_125 = arith.constant 0.000000e+00 : f32
    %226 = vector.broadcast %cst_125 : f32 to vector<4x100xf32>
    %227 = arith.cmpf ogt, %225, %226 : vector<4x100xf32>
    %cst_126 = arith.constant 0.00999999977 : f32
    %228 = vector.broadcast %cst_126 : f32 to vector<4x100xf32>
    %229 = arith.mulf %228, %225 : vector<4x100xf32>
    %230 = arith.select %227, %225, %229 : vector<4x100xi1>, vector<4x100xf32>
    %c0_127 = arith.constant 0 : index
    %c0_128 = arith.constant 0 : index
    %c0_129 = arith.constant 0 : index
    %231 = vector.load %arg8[%c0_127, %c0_128, %c0_129] : memref<9x4x4xf32, #tpu.memory_space<vmem>>, vector<1x4x4xf32>
    %232 = vector.shape_cast %231 : vector<1x4x4xf32> to vector<4x4xf32>
    %233 = vector.extract_strided_slice %230 {offsets = [0, 0], sizes = [4, 78], strides = [1, 1]} : vector<4x100xf32> to vector<4x78xf32>
    %cst_130 = arith.constant dense<0.000000e+00> : vector<4x78xf32>
    %234 = tpu.matmul %232, %233, %cst_130 {dimension_numbers = #tpu.dot_dimension_numbers<[1], [0], [0], [1], [0, 0, 1, 1], [], []>} : vector<4x4xf32>, vector<4x78xf32>, vector<4x78xf32> -> vector<4x78xf32>
    %c1_131 = arith.constant 1 : index
    %c0_132 = arith.constant 0 : index
    %c0_133 = arith.constant 0 : index
    %235 = vector.load %arg8[%c1_131, %c0_132, %c0_133] : memref<9x4x4xf32, #tpu.memory_space<vmem>>, vector<1x4x4xf32>
    %236 = vector.shape_cast %235 : vector<1x4x4xf32> to vector<4x4xf32>
    %237 = vector.extract_strided_slice %230 {offsets = [0, 1], sizes = [4, 78], strides = [1, 1]} : vector<4x100xf32> to vector<4x78xf32>
    %cst_134 = arith.constant dense<0.000000e+00> : vector<4x78xf32>
    %238 = tpu.matmul %236, %237, %cst_134 {dimension_numbers = #tpu.dot_dimension_numbers<[1], [0], [0], [1], [0, 0, 1, 1], [], []>} : vector<4x4xf32>, vector<4x78xf32>, vector<4x78xf32> -> vector<4x78xf32>
    %239 = arith.addf %234, %238 : vector<4x78xf32>
    %c2_135 = arith.constant 2 : index
    %c0_136 = arith.constant 0 : index
    %c0_137 = arith.constant 0 : index
    %240 = vector.load %arg8[%c2_135, %c0_136, %c0_137] : memref<9x4x4xf32, #tpu.memory_space<vmem>>, vector<1x4x4xf32>
    %241 = vector.shape_cast %240 : vector<1x4x4xf32> to vector<4x4xf32>
    %242 = vector.extract_strided_slice %230 {offsets = [0, 2], sizes = [4, 78], strides = [1, 1]} : vector<4x100xf32> to vector<4x78xf32>
    %cst_138 = arith.constant dense<0.000000e+00> : vector<4x78xf32>
    %243 = tpu.matmul %241, %242, %cst_138 {dimension_numbers = #tpu.dot_dimension_numbers<[1], [0], [0], [1], [0, 0, 1, 1], [], []>} : vector<4x4xf32>, vector<4x78xf32>, vector<4x78xf32> -> vector<4x78xf32>
    %244 = arith.addf %239, %243 : vector<4x78xf32>
    %c3_139 = arith.constant 3 : index
    %c0_140 = arith.constant 0 : index
    %c0_141 = arith.constant 0 : index
    %245 = vector.load %arg8[%c3_139, %c0_140, %c0_141] : memref<9x4x4xf32, #tpu.memory_space<vmem>>, vector<1x4x4xf32>
    %246 = vector.shape_cast %245 : vector<1x4x4xf32> to vector<4x4xf32>
    %247 = vector.extract_strided_slice %230 {offsets = [0, 10], sizes = [4, 78], strides = [1, 1]} : vector<4x100xf32> to vector<4x78xf32>
    %cst_142 = arith.constant dense<0.000000e+00> : vector<4x78xf32>
    %248 = tpu.matmul %246, %247, %cst_142 {dimension_numbers = #tpu.dot_dimension_numbers<[1], [0], [0], [1], [0, 0, 1, 1], [], []>} : vector<4x4xf32>, vector<4x78xf32>, vector<4x78xf32> -> vector<4x78xf32>
    %249 = arith.addf %244, %248 : vector<4x78xf32>
    %c4_143 = arith.constant 4 : index
    %c0_144 = arith.constant 0 : index
    %c0_145 = arith.constant 0 : index
    %250 = vector.load %arg8[%c4_143, %c0_144, %c0_145] : memref<9x4x4xf32, #tpu.memory_space<vmem>>, vector<1x4x4xf32>
    %251 = vector.shape_cast %250 : vector<1x4x4xf32> to vector<4x4xf32>
    %252 = vector.extract_strided_slice %230 {offsets = [0, 11], sizes = [4, 78], strides = [1, 1]} : vector<4x100xf32> to vector<4x78xf32>
    %cst_146 = arith.constant dense<0.000000e+00> : vector<4x78xf32>
    %253 = tpu.matmul %251, %252, %cst_146 {dimension_numbers = #tpu.dot_dimension_numbers<[1], [0], [0], [1], [0, 0, 1, 1], [], []>} : vector<4x4xf32>, vector<4x78xf32>, vector<4x78xf32> -> vector<4x78xf32>
    %254 = arith.addf %249, %253 : vector<4x78xf32>
    %c5_147 = arith.constant 5 : index
    %c0_148 = arith.constant 0 : index
    %c0_149 = arith.constant 0 : index
    %255 = vector.load %arg8[%c5_147, %c0_148, %c0_149] : memref<9x4x4xf32, #tpu.memory_space<vmem>>, vector<1x4x4xf32>
    %256 = vector.shape_cast %255 : vector<1x4x4xf32> to vector<4x4xf32>
    %257 = vector.extract_strided_slice %230 {offsets = [0, 12], sizes = [4, 78], strides = [1, 1]} : vector<4x100xf32> to vector<4x78xf32>
    %cst_150 = arith.constant dense<0.000000e+00> : vector<4x78xf32>
    %258 = tpu.matmul %256, %257, %cst_150 {dimension_numbers = #tpu.dot_dimension_numbers<[1], [0], [0], [1], [0, 0, 1, 1], [], []>} : vector<4x4xf32>, vector<4x78xf32>, vector<4x78xf32> -> vector<4x78xf32>
    %259 = arith.addf %254, %258 : vector<4x78xf32>
    %c6_151 = arith.constant 6 : index
    %c0_152 = arith.constant 0 : index
    %c0_153 = arith.constant 0 : index
    %260 = vector.load %arg8[%c6_151, %c0_152, %c0_153] : memref<9x4x4xf32, #tpu.memory_space<vmem>>, vector<1x4x4xf32>
    %261 = vector.shape_cast %260 : vector<1x4x4xf32> to vector<4x4xf32>
    %262 = vector.extract_strided_slice %230 {offsets = [0, 20], sizes = [4, 78], strides = [1, 1]} : vector<4x100xf32> to vector<4x78xf32>
    %cst_154 = arith.constant dense<0.000000e+00> : vector<4x78xf32>
    %263 = tpu.matmul %261, %262, %cst_154 {dimension_numbers = #tpu.dot_dimension_numbers<[1], [0], [0], [1], [0, 0, 1, 1], [], []>} : vector<4x4xf32>, vector<4x78xf32>, vector<4x78xf32> -> vector<4x78xf32>
    %264 = arith.addf %259, %263 : vector<4x78xf32>
    %c7_155 = arith.constant 7 : index
    %c0_156 = arith.constant 0 : index
    %c0_157 = arith.constant 0 : index
    %265 = vector.load %arg8[%c7_155, %c0_156, %c0_157] : memref<9x4x4xf32, #tpu.memory_space<vmem>>, vector<1x4x4xf32>
    %266 = vector.shape_cast %265 : vector<1x4x4xf32> to vector<4x4xf32>
    %267 = vector.extract_strided_slice %230 {offsets = [0, 21], sizes = [4, 78], strides = [1, 1]} : vector<4x100xf32> to vector<4x78xf32>
    %cst_158 = arith.constant dense<0.000000e+00> : vector<4x78xf32>
    %268 = tpu.matmul %266, %267, %cst_158 {dimension_numbers = #tpu.dot_dimension_numbers<[1], [0], [0], [1], [0, 0, 1, 1], [], []>} : vector<4x4xf32>, vector<4x78xf32>, vector<4x78xf32> -> vector<4x78xf32>
    %269 = arith.addf %264, %268 : vector<4x78xf32>
    %c8_159 = arith.constant 8 : index
    %c0_160 = arith.constant 0 : index
    %c0_161 = arith.constant 0 : index
    %270 = vector.load %arg8[%c8_159, %c0_160, %c0_161] : memref<9x4x4xf32, #tpu.memory_space<vmem>>, vector<1x4x4xf32>
    %271 = vector.shape_cast %270 : vector<1x4x4xf32> to vector<4x4xf32>
    %272 = vector.extract_strided_slice %230 {offsets = [0, 22], sizes = [4, 78], strides = [1, 1]} : vector<4x100xf32> to vector<4x78xf32>
    %cst_162 = arith.constant dense<0.000000e+00> : vector<4x78xf32>
    %273 = tpu.matmul %271, %272, %cst_162 {dimension_numbers = #tpu.dot_dimension_numbers<[1], [0], [0], [1], [0, 0, 1, 1], [], []>} : vector<4x4xf32>, vector<4x78xf32>, vector<4x78xf32> -> vector<4x78xf32>
    %274 = arith.addf %269, %273 : vector<4x78xf32>
    %275 = vector.broadcast %0 : vector<1x78xf32> to vector<4x78xf32>
    %276 = arith.mulf %274, %275 : vector<4x78xf32>
    %cst_163 = arith.constant dense<0.000000e+00> : vector<4xf32>
    %277 = vector.multi_reduction <add>, %276, %cst_163 [1] : vector<4x78xf32> to vector<4xf32>
    %278 = vector.shape_cast %277 : vector<4xf32> to vector<4x1xf32>
    %cst_164 = arith.constant 1.562500e-02 : f32
    %279 = vector.broadcast %cst_164 : f32 to vector<4x1xf32>
    %280 = arith.mulf %278, %279 : vector<4x1xf32>
    %281 = arith.mulf %276, %274 : vector<4x78xf32>
    %cst_165 = arith.constant dense<0.000000e+00> : vector<4xf32>
    %282 = vector.multi_reduction <add>, %281, %cst_165 [1] : vector<4x78xf32> to vector<4xf32>
    %283 = vector.shape_cast %282 : vector<4xf32> to vector<4x1xf32>
    %cst_166 = arith.constant 1.562500e-02 : f32
    %284 = vector.broadcast %cst_166 : f32 to vector<4x1xf32>
    %285 = arith.mulf %283, %284 : vector<4x1xf32>
    %286 = arith.mulf %280, %280 : vector<4x1xf32>
    %287 = arith.subf %285, %286 : vector<4x1xf32>
    %cst_167 = arith.constant 0.000000e+00 : f32
    %288 = vector.broadcast %cst_167 : f32 to vector<4x1xf32>
    %289 = arith.maximumf %287, %288 : vector<4x1xf32>
    %290 = vector.broadcast %280 : vector<4x1xf32> to vector<4x78xf32>
    %291 = arith.subf %274, %290 : vector<4x78xf32>
    %cst_168 = arith.constant 9.99999974E-6 : f32
    %292 = vector.broadcast %cst_168 : f32 to vector<4x1xf32>
    %293 = arith.addf %289, %292 : vector<4x1xf32>
    %294 = math.rsqrt %293 : vector<4x1xf32>
    %295 = vector.broadcast %294 : vector<4x1xf32> to vector<4x78xf32>
    %296 = arith.mulf %291, %295 : vector<4x78xf32>
    %c0_169 = arith.constant 0 : index
    %c4_170 = arith.constant 4 : index
    %c0_171 = arith.constant 0 : index
    %297 = vector.load %arg10[%c0_169, %c4_170, %c0_171] : memref<1x12x100xf32, #tpu.memory_space<vmem>>, vector<1x4x100xf32>
    %298 = vector.shape_cast %297 : vector<1x4x100xf32> to vector<4x100xf32>
    %299 = vector.extract_strided_slice %298 {offsets = [0, 0], sizes = [4, 78], strides = [1, 1]} : vector<4x100xf32> to vector<4x78xf32>
    %300 = vector.extract_strided_slice %298 {offsets = [0, 1], sizes = [4, 78], strides = [1, 1]} : vector<4x100xf32> to vector<4x78xf32>
    %301 = arith.addf %299, %300 : vector<4x78xf32>
    %302 = vector.extract_strided_slice %298 {offsets = [0, 2], sizes = [4, 78], strides = [1, 1]} : vector<4x100xf32> to vector<4x78xf32>
    %303 = arith.addf %301, %302 : vector<4x78xf32>
    %304 = vector.extract_strided_slice %298 {offsets = [0, 10], sizes = [4, 78], strides = [1, 1]} : vector<4x100xf32> to vector<4x78xf32>
    %305 = arith.addf %303, %304 : vector<4x78xf32>
    %306 = vector.extract_strided_slice %298 {offsets = [0, 11], sizes = [4, 78], strides = [1, 1]} : vector<4x100xf32> to vector<4x78xf32>
    %307 = arith.addf %305, %306 : vector<4x78xf32>
    %308 = vector.extract_strided_slice %298 {offsets = [0, 12], sizes = [4, 78], strides = [1, 1]} : vector<4x100xf32> to vector<4x78xf32>
    %309 = arith.addf %307, %308 : vector<4x78xf32>
    %310 = vector.extract_strided_slice %298 {offsets = [0, 20], sizes = [4, 78], strides = [1, 1]} : vector<4x100xf32> to vector<4x78xf32>
    %311 = arith.addf %309, %310 : vector<4x78xf32>
    %312 = vector.extract_strided_slice %298 {offsets = [0, 21], sizes = [4, 78], strides = [1, 1]} : vector<4x100xf32> to vector<4x78xf32>
    %313 = arith.addf %311, %312 : vector<4x78xf32>
    %314 = vector.extract_strided_slice %298 {offsets = [0, 22], sizes = [4, 78], strides = [1, 1]} : vector<4x100xf32> to vector<4x78xf32>
    %315 = arith.addf %313, %314 : vector<4x78xf32>
    %cst_172 = arith.constant 0.111111112 : f32
    %316 = vector.broadcast %cst_172 : f32 to vector<4x78xf32>
    %317 = arith.mulf %315, %316 : vector<4x78xf32>
    %318 = arith.addf %296, %317 : vector<4x78xf32>
    %319 = vector.broadcast %0 : vector<1x78xf32> to vector<4x78xf32>
    %320 = arith.mulf %318, %319 : vector<4x78xf32>
    %c0_173 = arith.constant 0 : index
    %c8_174 = arith.constant 8 : index
    %c11_175 = arith.constant 11 : index
    %321 = vector.load %arg10[%c0_173, %c8_174, %c11_175] : memref<1x12x100xf32, #tpu.memory_space<vmem>>, vector<1x4x78xf32>
    %322 = vector.shape_cast %321 : vector<1x4x78xf32> to vector<4x78xf32>
    %323 = vector.shape_cast %320 : vector<4x78xf32> to vector<1x4x78xf32>
    tpu.vector_store %arg10[%c0_173, %c8_174, %c11_175], %323 {strides = array<i32>} : memref<1x12x100xf32, #tpu.memory_space<vmem>>, vector<1x4x78xf32>,
    return
  }
  func.func @transform_0(%arg0: i32) -> (i32, i32, i32) {
    %c0_i32 = arith.constant 0 : i32
    %c0_i32_0 = arith.constant 0 : i32
    %c0_i32_1 = arith.constant 0 : i32
    return %arg0, %c0_i32, %c0_i32_0 : i32, i32, i32
  }
  func.func @transform_1(%arg0: i32) -> (i32, i32, i32) {
    %c0_i32 = arith.constant 0 : i32
    %c0_i32_0 = arith.constant 0 : i32
    %c0_i32_1 = arith.constant 0 : i32
    return %arg0, %c0_i32, %c0_i32_0 : i32, i32, i32
  }
  func.func @transform_2(%arg0: i32) -> (i32, i32) {
    %c0_i32 = arith.constant 0 : i32
    %c0_i32_0 = arith.constant 0 : i32
    %c0_i32_1 = arith.constant 0 : i32
    return %c0_i32, %c0_i32_0 : i32, i32
  }
  func.func @transform_3(%arg0: i32) -> (i32, i32) {
    %c0_i32 = arith.constant 0 : i32
    %c0_i32_0 = arith.constant 0 : i32
    %c0_i32_1 = arith.constant 0 : i32
    return %c0_i32, %c0_i32_0 : i32, i32
  }
  func.func @transform_4(%arg0: i32) -> (i32, i32) {
    %c0_i32 = arith.constant 0 : i32
    %c0_i32_0 = arith.constant 0 : i32
    %c0_i32_1 = arith.constant 0 : i32
    return %c0_i32, %c0_i32_0 : i32, i32
  }
  func.func @transform_5(%arg0: i32) -> (i32, i32, i32) {
    %c0_i32 = arith.constant 0 : i32
    %c0_i32_0 = arith.constant 0 : i32
    %c0_i32_1 = arith.constant 0 : i32
    %c0_i32_2 = arith.constant 0 : i32
    return %c0_i32, %c0_i32_0, %c0_i32_1 : i32, i32, i32
  }
  func.func @transform_6(%arg0: i32) -> (i32, i32, i32) {
    %c0_i32 = arith.constant 0 : i32
    %c0_i32_0 = arith.constant 0 : i32
    %c0_i32_1 = arith.constant 0 : i32
    %c0_i32_2 = arith.constant 0 : i32
    return %c0_i32, %c0_i32_0, %c0_i32_1 : i32, i32, i32
  }
  func.func @transform_7(%arg0: i32) -> (i32, i32, i32) {
    %c0_i32 = arith.constant 0 : i32
    %c0_i32_0 = arith.constant 0 : i32
    %c0_i32_1 = arith.constant 0 : i32
    %c0_i32_2 = arith.constant 0 : i32
    return %c0_i32, %c0_i32_0, %c0_i32_1 : i32, i32, i32
  }
  func.func @transform_8(%arg0: i32) -> (i32, i32) {
    %c0_i32 = arith.constant 0 : i32
    %c0_i32_0 = arith.constant 0 : i32
    %c0_i32_1 = arith.constant 0 : i32
    return %c0_i32, %c0_i32_0 : i32, i32
  }
  func.func @transform_9(%arg0: i32) -> (i32, i32, i32) {
    %c0_i32 = arith.constant 0 : i32
    %c0_i32_0 = arith.constant 0 : i32
    %c0_i32_1 = arith.constant 0 : i32
    return %arg0, %c0_i32, %c0_i32_0 : i32, i32, i32
  }
}

</mosaic_0001>

<llo_original>
// kernel: reduction_cell.1
$region0: #{reduction_cell.1}
  #allocation0 [shape = 'u32[]', space=smem, size = 0x4, offset = 0x4, fixed_abs, tag = 'smem constant byte address 0x4 - core index']
  #allocation1 [shape = 'u32[144,128]{1,0:T(1,128)}', space=vmem, size = 0x12000, scoped, tag = 'internal scratch']
  #allocation2 [shape = 'f32[4,100]{1,0:T(4,128)}', space=vmem, size = 0x800, scoped, tag = 'scratch operand']
  %s0 = inlined_call_operand.vmem [shape: f32[2,8,100], index: 0, kind: input, shape index: {}]
  %s1 = inlined_call_operand.vmem [shape: f32[2,4,100], index: 1, kind: input, shape index: {}]
  %s2 = inlined_call_operand.vmem [shape: f32[8,8], index: 2, kind: input, shape index: {}]
  %s3 = inlined_call_operand.vmem [shape: f32[8,1], index: 3, kind: input, shape index: {}]
  %s4 = inlined_call_operand.vmem [shape: f32[8,1], index: 4, kind: input, shape index: {}]
  %s5 = inlined_call_operand.vmem [shape: f32[9,4,4], index: 5, kind: input, shape index: {}]
  %s6 = inlined_call_operand.vmem [shape: f32[9,4,4], index: 6, kind: input, shape index: {}]
  %s7 = inlined_call_operand.vmem [shape: f32[9,4,4], index: 7, kind: input, shape index: {}]
  %s8 = inlined_call_operand.vmem [shape: f32[1,78], index: 8, kind: input, shape index: {}]
  %s9 = inlined_call_operand.vmem [shape: f32[2,12,100], index: 9, kind: output, shape index: {}]
  %s10 = sld [smem:[#allocation0]]
  $region69: #{reduction_cell.1} parent=0
    _
  %s12 = ssub.s32 1, %s10
  %s13 = scalar_select 0, %s12, %s10
  loop: start=0, step=1, limit=4
  $region2: #{reduction_cell.1} parent=0 // loop_pre_header
    _
  $region3: #{reduction_cell.1} parent=0 // loop_header
    %s15 = sphi 0, %s19
    %p16 = scmp.ge.s32.totalorder %s15, 4
    %s25 = sphi 0, %s27
    %s28 = sphi 0, %s25
    %s29 = sphi 0, %s28
    %s45 = sphi 0, %s29
    %s51 = sphi 0, %s53
    %s54 = sphi 0, %s51
    %s55 = sphi 0, %s54
    %s71 = sphi 0, %s55
    %s75 = sphi 0, %s75
    %s77 = sphi 0, %s75
    %s78 = sphi 0, %s77
    %s92 = sphi 0, %s78
    %s96 = sphi 0, %s96
    %s98 = sphi 0, %s96
    %s99 = sphi 0, %s98
    %s113 = sphi 0, %s99
    %s117 = sphi 0, %s117
    %s119 = sphi 0, %s117
    %s120 = sphi 0, %s119
    %s134 = sphi 0, %s120
    %s138 = sphi 0, %s138
    %s140 = sphi 0, %s138
    %s141 = sphi 0, %s140
    %s155 = sphi 0, %s141
    %s159 = sphi 0, %s159
    %s161 = sphi 0, %s159
    %s162 = sphi 0, %s161
    %s176 = sphi 0, %s162
    %s180 = sphi 0, %s180
    %s182 = sphi 0, %s180
    %s183 = sphi 0, %s182
    %s197 = sphi 0, %s183
    %s201 = sphi 0, %s201
    %s203 = sphi 0, %s201
    %s204 = sphi 0, %s203
    %s218 = sphi 0, %s204
    %s224 = sphi 0, %s226
    %s227 = sphi 0, %s224
    %s228 = sphi 0, %s227
    %s244 = sphi 0, %s228
  $region4: #{reduction_cell.1} parent=0 // loop_header_branch
    %18 = sbr.rel (%p16) target = $region8
  $region5: #{reduction_cell.1} parent=0 // loop_body
    %s20 = ssub.s32 %s15, 1
    %s21 = ssub.s32 %s15, 2
    %s22 = sadd.s32 %s15, 1
    %s23 = ssub.s32 %s15, %s22
    %p24 = scmp.eq.s32.totalorder %s23, 0
    %s26 = sadd.s32 %s25, 1
    %s27 = scalar_select %p24, %s25, %s26
    %p30 = pneg %p24
    %p31 = scmp.eq.s32.totalorder %s15, 1
    %p32 = por %p30, %p31
    %p33 = scmp.ne.s32.totalorder %s25, %s28
    %p34 = scmp.eq.s32.totalorder %s15, 0
    %p35 = por %p33, %p34
    %p36 = scmp.ne.s32.totalorder %s25, %s28
    %p37 = scmp.eq.s32.totalorder %s20, 1
    %p38 = por %p36, %p37
    %p39 = scmp.ne.s32.totalorder %s28, %s29
    %p40 = scmp.eq.s32.totalorder %s20, 0
    %p41 = por %p39, %p40
    %p42 = scmp.ne.s32.totalorder %s28, %s29
    %p43 = scmp.eq.s32.totalorder %s21, 1
    %p44 = por %p42, %p43
    %p46 = scmp.ne.s32.totalorder %s29, %s45
    %p47 = scmp.eq.s32.totalorder %s21, 0
    %p48 = por %p46, %p47
    %s49 = ssub.s32 %s15, %s22
    %p50 = scmp.eq.s32.totalorder %s49, 0
    %s52 = sadd.s32 %s51, 1
    %s53 = scalar_select %p50, %s51, %s52
    %p56 = pneg %p50
    %p57 = scmp.eq.s32.totalorder %s15, 1
    %p58 = por %p56, %p57
    %p59 = scmp.ne.s32.totalorder %s51, %s54
    %p60 = scmp.eq.s32.totalorder %s15, 0
    %p61 = por %p59, %p60
    %p62 = scmp.ne.s32.totalorder %s51, %s54
    %p63 = scmp.eq.s32.totalorder %s20, 1
    %p64 = por %p62, %p63
    %p65 = scmp.ne.s32.totalorder %s54, %s55
    %p66 = scmp.eq.s32.totalorder %s20, 0
    %p67 = por %p65, %p66
    %p68 = scmp.ne.s32.totalorder %s54, %s55
    %p69 = scmp.eq.s32.totalorder %s21, 1
    %p70 = por %p68, %p69
    %p72 = scmp.ne.s32.totalorder %s55, %s71
    %p73 = scmp.eq.s32.totalorder %s21, 0
    %p74 = por %p72, %p73
    %s76 = sadd.s32 %s75, 1
    %p79 = scmp.eq.s32.totalorder %s15, 1
    %p80 = scmp.ne.s32.totalorder %s75, %s77
    %p81 = scmp.eq.s32.totalorder %s15, 0
    %p82 = por %p80, %p81
    %p83 = scmp.ne.s32.totalorder %s75, %s77
    %p84 = scmp.eq.s32.totalorder %s20, 1
    %p85 = por %p83, %p84
    %p86 = scmp.ne.s32.totalorder %s77, %s78
    %p87 = scmp.eq.s32.totalorder %s20, 0
    %p88 = por %p86, %p87
    %p89 = scmp.ne.s32.totalorder %s77, %s78
    %p90 = scmp.eq.s32.totalorder %s21, 1
    %p91 = por %p89, %p90
    %p93 = scmp.ne.s32.totalorder %s78, %s92
    %p94 = scmp.eq.s32.totalorder %s21, 0
    %p95 = por %p93, %p94
    %s97 = sadd.s32 %s96, 1
    %p100 = scmp.eq.s32.totalorder %s15, 1
    %p101 = scmp.ne.s32.totalorder %s96, %s98
    %p102 = scmp.eq.s32.totalorder %s15, 0
    %p103 = por %p101, %p102
    %p104 = scmp.ne.s32.totalorder %s96, %s98
    %p105 = scmp.eq.s32.totalorder %s20, 1
    %p106 = por %p104, %p105
    %p107 = scmp.ne.s32.totalorder %s98, %s99
    %p108 = scmp.eq.s32.totalorder %s20, 0
    %p109 = por %p107, %p108
    %p110 = scmp.ne.s32.totalorder %s98, %s99
    %p111 = scmp.eq.s32.totalorder %s21, 1
    %p112 = por %p110, %p111
    %p114 = scmp.ne.s32.totalorder %s99, %s113
    %p115 = scmp.eq.s32.totalorder %s21, 0
    %p116 = por %p114, %p115
    %s118 = sadd.s32 %s117, 1
    %p121 = scmp.eq.s32.totalorder %s15, 1
    %p122 = scmp.ne.s32.totalorder %s117, %s119
    %p123 = scmp.eq.s32.totalorder %s15, 0
    %p124 = por %p122, %p123
    %p125 = scmp.ne.s32.totalorder %s117, %s119
    %p126 = scmp.eq.s32.totalorder %s20, 1
    %p127 = por %p125, %p126
    %p128 = scmp.ne.s32.totalorder %s119, %s120
    %p129 = scmp.eq.s32.totalorder %s20, 0
    %p130 = por %p128, %p129
    %p131 = scmp.ne.s32.totalorder %s119, %s120
    %p132 = scmp.eq.s32.totalorder %s21, 1
    %p133 = por %p131, %p132
    %p135 = scmp.ne.s32.totalorder %s120, %s134
    %p136 = scmp.eq.s32.totalorder %s21, 0
    %p137 = por %p135, %p136
    %s139 = sadd.s32 %s138, 1
    %p142 = scmp.eq.s32.totalorder %s15, 1
    %p143 = scmp.ne.s32.totalorder %s138, %s140
    %p144 = scmp.eq.s32.totalorder %s15, 0
    %p145 = por %p143, %p144
    %p146 = scmp.ne.s32.totalorder %s138, %s140
    %p147 = scmp.eq.s32.totalorder %s20, 1
    %p148 = por %p146, %p147
    %p149 = scmp.ne.s32.totalorder %s140, %s141
    %p150 = scmp.eq.s32.totalorder %s20, 0
    %p151 = por %p149, %p150
    %p152 = scmp.ne.s32.totalorder %s140, %s141
    %p153 = scmp.eq.s32.totalorder %s21, 1
    %p154 = por %p152, %p153
    %p156 = scmp.ne.s32.totalorder %s141, %s155
    %p157 = scmp.eq.s32.totalorder %s21, 0
    %p158 = por %p156, %p157
    %s160 = sadd.s32 %s159, 1
    %p163 = scmp.eq.s32.totalorder %s15, 1
    %p164 = scmp.ne.s32.totalorder %s159, %s161
    %p165 = scmp.eq.s32.totalorder %s15, 0
    %p166 = por %p164, %p165
    %p167 = scmp.ne.s32.totalorder %s159, %s161
    %p168 = scmp.eq.s32.totalorder %s20, 1
    %p169 = por %p167, %p168
    %p170 = scmp.ne.s32.totalorder %s161, %s162
    %p171 = scmp.eq.s32.totalorder %s20, 0
    %p172 = por %p170, %p171
    %p173 = scmp.ne.s32.totalorder %s161, %s162
    %p174 = scmp.eq.s32.totalorder %s21, 1
    %p175 = por %p173, %p174
    %p177 = scmp.ne.s32.totalorder %s162, %s176
    %p178 = scmp.eq.s32.totalorder %s21, 0
    %p179 = por %p177, %p178
    %s181 = sadd.s32 %s180, 1
    %p184 = scmp.eq.s32.totalorder %s15, 1
    %p185 = scmp.ne.s32.totalorder %s180, %s182
    %p186 = scmp.eq.s32.totalorder %s15, 0
    %p187 = por %p185, %p186
    %p188 = scmp.ne.s32.totalorder %s180, %s182
    %p189 = scmp.eq.s32.totalorder %s20, 1
    %p190 = por %p188, %p189
    %p191 = scmp.ne.s32.totalorder %s182, %s183
    %p192 = scmp.eq.s32.totalorder %s20, 0
    %p193 = por %p191, %p192
    %p194 = scmp.ne.s32.totalorder %s182, %s183
    %p195 = scmp.eq.s32.totalorder %s21, 1
    %p196 = por %p194, %p195
    %p198 = scmp.ne.s32.totalorder %s183, %s197
    %p199 = scmp.eq.s32.totalorder %s21, 0
    %p200 = por %p198, %p199
    %s202 = sadd.s32 %s201, 1
    %p205 = scmp.eq.s32.totalorder %s15, 1
    %p206 = scmp.ne.s32.totalorder %s201, %s203
    %p207 = scmp.eq.s32.totalorder %s15, 0
    %p208 = por %p206, %p207
    %p209 = scmp.ne.s32.totalorder %s201, %s203
    %p210 = scmp.eq.s32.totalorder %s20, 1
    %p211 = por %p209, %p210
    %p212 = scmp.ne.s32.totalorder %s203, %s204
    %p213 = scmp.eq.s32.totalorder %s20, 0
    %p214 = por %p212, %p213
    %p215 = scmp.ne.s32.totalorder %s203, %s204
    %p216 = scmp.eq.s32.totalorder %s21, 1
    %p217 = por %p215, %p216
    %p219 = scmp.ne.s32.totalorder %s204, %s218
    %p220 = scmp.eq.s32.totalorder %s21, 0
    %p221 = por %p219, %p220
    %s222 = ssub.s32 %s15, %s22
    %p223 = scmp.eq.s32.totalorder %s222, 0
    %s225 = sadd.s32 %s224, 1
    %s226 = scalar_select %p223, %s224, %s225
    %p229 = pneg %p223
    %p230 = scmp.eq.s32.totalorder %s15, 1
    %p231 = por %p229, %p230
    %p232 = scmp.ne.s32.totalorder %s224, %s227
    %p233 = scmp.eq.s32.totalorder %s15, 0
    %p234 = por %p232, %p233
    %p235 = scmp.ne.s32.totalorder %s224, %s227
    %p236 = scmp.eq.s32.totalorder %s20, 1
    %p237 = por %p235, %p236
    %p238 = scmp.ne.s32.totalorder %s227, %s228
    %p239 = scmp.eq.s32.totalorder %s20, 0
    %p240 = por %p238, %p239
    %p241 = scmp.ne.s32.totalorder %s227, %s228
    %p242 = scmp.eq.s32.totalorder %s21, 1
    %p243 = por %p241, %p242
    %p245 = scmp.ne.s32.totalorder %s228, %s244
    %p246 = scmp.eq.s32.totalorder %s21, 0
    %p247 = por %p245, %p246
    %p248 = scmp.le.s32.totalorder 1, %s15
    %p249 = scmp.lt.s32.totalorder %s15, 3
    %p250 = pnand %p248, %p249
    %p251 = pneg %p250
    // Predicated region
    $region9: #{reduction_cell.1} parent=5 // pred_check
      _
    $region10: #{reduction_cell.1} parent=5 // pred_check_branch
      %253 = sbr.rel (%p250) target = $region12
    $region11: #{reduction_cell.1} parent=5 // pred_region
      %s254 = ssub.s32 %s15, 1
      // Predicated region
      $region13: #{reduction_cell.1} parent=11 // pred_check
        %p255 = pneg %p88
      $region14: #{reduction_cell.1} parent=11 // pred_check_branch
        %257 = sbr.rel (%p255) target = $region16
      $region15: #{reduction_cell.1} parent=11 // pred_region
        _
      $region16: #{reduction_cell.1} parent=11 // pred_fallthru
        _
      // Predicated region
      $region17: #{reduction_cell.1} parent=11 // pred_check
        %p258 = pneg %p109
      $region18: #{reduction_cell.1} parent=11 // pred_check_branch
        %260 = sbr.rel (%p258) target = $region20
      $region19: #{reduction_cell.1} parent=11 // pred_region
        _
      $region20: #{reduction_cell.1} parent=11 // pred_fallthru
        _
      // Predicated region
      $region21: #{reduction_cell.1} parent=11 // pred_check
        %p261 = pneg %p130
      $region22: #{reduction_cell.1} parent=11 // pred_check_branch
        %263 = sbr.rel (%p261) target = $region24
      $region23: #{reduction_cell.1} parent=11 // pred_region
        _
      $region24: #{reduction_cell.1} parent=11 // pred_fallthru
        _
      // Predicated region
      $region25: #{reduction_cell.1} parent=11 // pred_check
        %p264 = pneg %p151
      $region26: #{reduction_cell.1} parent=11 // pred_check_branch
        %266 = sbr.rel (%p264) target = $region28
      $region27: #{reduction_cell.1} parent=11 // pred_region
        _
      $region28: #{reduction_cell.1} parent=11 // pred_fallthru
        _
      // Predicated region
      $region29: #{reduction_cell.1} parent=11 // pred_check
        %p267 = pneg %p172
      $region30: #{reduction_cell.1} parent=11 // pred_check_branch
        %269 = sbr.rel (%p267) target = $region32
      $region31: #{reduction_cell.1} parent=11 // pred_region
        _
      $region32: #{reduction_cell.1} parent=11 // pred_fallthru
        _
      // Predicated region
      $region33: #{reduction_cell.1} parent=11 // pred_check
        %p270 = pneg %p193
      $region34: #{reduction_cell.1} parent=11 // pred_check_branch
        %272 = sbr.rel (%p270) target = $region36
      $region35: #{reduction_cell.1} parent=11 // pred_region
        _
      $region36: #{reduction_cell.1} parent=11 // pred_fallthru
        _
      // Predicated region
      $region37: #{reduction_cell.1} parent=11 // pred_check
        %p273 = pneg %p214
      $region38: #{reduction_cell.1} parent=11 // pred_check_branch
        %275 = sbr.rel (%p273) target = $region40
      $region39: #{reduction_cell.1} parent=11 // pred_region
        _
      $region40: #{reduction_cell.1} parent=11 // pred_fallthru
        _
    $region12: #{reduction_cell.1} parent=5 // pred_fallthru
      _
    %p276 = scmp.lt.s32.totalorder %s15, 2
    // Predicated region
    $region41: #{reduction_cell.1} parent=5 // pred_check
      %p277 = pneg %p276
    $region42: #{reduction_cell.1} parent=5 // pred_check_branch
      %279 = sbr.rel (%p277) target = $region44
    $region43: #{reduction_cell.1} parent=5 // pred_region
      // Predicated region
      $region45: #{reduction_cell.1} parent=43 // pred_check
        %p280 = pneg %p35
      $region46: #{reduction_cell.1} parent=43 // pred_check_branch
        %282 = sbr.rel (%p280) target = $region48
      $region47: #{reduction_cell.1} parent=43 // pred_region
        %p283 = scmp.lt.s32.totalorder %s15, 1
        %s284 = scalar_select %p283, %s15, 1
        %s285 = smul.addr %s284, 8
        %s286 = scalar_lea.vmem %s0, %s285
      $region48: #{reduction_cell.1} parent=43 // pred_fallthru
        _
      // Predicated region
      $region49: #{reduction_cell.1} parent=43 // pred_check
        %p287 = pneg %p61
      $region50: #{reduction_cell.1} parent=43 // pred_check_branch
        %289 = sbr.rel (%p287) target = $region52
      $region51: #{reduction_cell.1} parent=43 // pred_region
        %p290 = scmp.lt.s32.totalorder %s15, 1
        %s291 = scalar_select %p290, %s15, 1
        %s292 = smul.addr %s291, 4
        %s293 = scalar_lea.vmem %s1, %s292
      $region52: #{reduction_cell.1} parent=43 // pred_fallthru
        _
    $region44: #{reduction_cell.1} parent=5 // pred_fallthru
      _
    %p294 = scmp.le.s32.totalorder 1, %s15
    %p295 = scmp.lt.s32.totalorder %s15, 3
    %p296 = pnand %p294, %p295
    %p297 = pneg %p296
    // Predicated region
    $region53: #{reduction_cell.1} parent=5 // pred_check
      _
    $region54: #{reduction_cell.1} parent=5 // pred_check_branch
      %299 = sbr.rel (%p296) target = $region56
    $region55: #{reduction_cell.1} parent=5 // pred_region
      %s300 = ssub.s32 %s15, 1
      %p301 = scmp.lt.s32.totalorder %s20, 1
      %s302 = scalar_select %p301, %s20, 1
      %s303 = smul.addr %s302, 8
      %s304 = scalar_lea.vmem %s0, %s303
      %p305 = pneg %p41
      %p306 = pneg %p38
      %p307 = scmp.lt.s32.totalorder %s20, 1
      %s308 = scalar_select %p307, %s20, 1
      %s309 = smul.addr %s308, 4
      %s310 = scalar_lea.vmem %s1, %s309
      %p311 = pneg %p67
      %p312 = pneg %p64
      %p313 = pneg %p88
      %p314 = pneg %p85
      %p315 = pneg %p109
      %p316 = pneg %p106
      %p317 = pneg %p130
      %p318 = pneg %p127
      %p319 = pneg %p151
      %p320 = pneg %p148
      %p321 = pneg %p172
      %p322 = pneg %p169
      %p323 = pneg %p193
      %p324 = pneg %p190
      %p325 = pneg %p214
      %p326 = pneg %p211
      %p327 = pneg %p240
      %p328 = pneg %p237
      %p329 = scmp.lt.s32.totalorder %s20, 1
      %s330 = scalar_select %p329, %s20, 1
      %s331 = smul.addr %s330, 2
      %s332 = smul.addr %s331, 8
      %s333 = scalar_lea.vmem %s9, %s332
      %p334 = scmp.lt.s32.totalorder %s20, 1
      %s335 = scalar_select %p334, %s20, 1
      %s336 = smul.addr %s335, 8
      %s337 = scalar_lea.vmem %s0, %s336
      %p338 = scmp.lt.s32.totalorder %s20, 1
      %s339 = scalar_select %p338, %s20, 1
      %s340 = smul.addr %s339, 4
      %s341 = scalar_lea.vmem %s1, %s340
      %p342 = scmp.lt.s32.totalorder %s20, 1
      %s343 = scalar_select %p342, %s20, 1
      %s344 = smul.addr %s343, 2
      %s345 = smul.addr %s344, 8
      %s346 = scalar_lea.vmem %s9, %s345
      %v347 = vld [vmem:[%s8] sm:$0x1]
      %vm348 = vcmask 818176
      %349 = vst.msk [vmem:[%s346] sm:$0xff] %vm348, 0.0
      %vm350 = vcmask 814080
      %351 = vst.msk [vmem:[%s346 + $0x8] sm:$0xf] %vm350, 0.0
      %352 = vst.msk [vmem:[#allocation2] sm:$0xf] %vm350, 0.0
      %v353 = vld [vmem:[%s337] sm:$0xff]
      %vm354 = vcmp.gt.f32.partialorder %v353, 0.0
      %v355 = vmul.f32 %v353, 0.01
      %v356 = vsel %vm354, %v353, %v355
      %v357 = vld [vmem:[%s2] sm:$0xff]
      %vm358 = vcmask 64512
      %v360 = vsel %vm358, %v357, 0
      %362 = vmatprep.subr.mxu0 0.0
      %363 = vmatpush1.msra.mxu0 %v356
      %364 = vmatprep.subr.mxu0 0.0
      %365 = vmatpush1.msra.mxu0 0.0
      %366 = vmatprep.subr.mxu0 0.0
      %367 = vmatpush1.msra.mxu0 0.0
      %368 = vmatprep.subr.mxu0 0.0
      %369 = vmatpush1.msra.mxu0 0.0
      %370 = vmatprep.subr.mxu0 0.0
      %371 = vmatpush1.msra.mxu0 0.0
      %372 = vmatprep.subr.mxu0 0.0
      %373 = vmatpush1.msra.mxu0 0.0
      %374 = vmatprep.subr.mxu0 0.0
      %375 = vmatpush1.msra.mxu0 0.0
      %376 = vmatprep.subr.mxu0 0.0
      %377 = vmatpush1.msra.mxu0 0.0
      %378 = vmatprep.subr.mxu0 0.0
      %379 = vmatpush1.msra.mxu0 0.0
      %380 = vmatprep.subr.mxu0 0.0
      %381 = vmatpush1.msra.mxu0 0.0
      %382 = vmatprep.subr.mxu0 0.0
      %383 = vmatpush1.msra.mxu0 0.0
      %384 = vmatprep.subr.mxu0 0.0
      %385 = vmatpush1.msra.mxu0 0.0
      %386 = vmatprep.subr.mxu0 0.0
      %387 = vmatpush1.msra.mxu0 0.0
      %388 = vmatprep.subr.mxu0 0.0
      %389 = vmatpush1.msra.mxu0 0.0
      %390 = vmatprep.subr.mxu0 0.0
      %391 = vmatpush1.msra.mxu0 0.0
      %392 = vmatprep.subr.mxu0 0.0
      %393 = vmatpush1.msra.mxu0 0.0
      %394 = vmatprep.subr.mxu0 0.0
      %395 = vmatpush1.msra.mxu0 0.0
      %396 = vmatprep.subr.mxu0 0.0
      %397 = vmatpush1.msra.mxu0 0.0
      %398 = vmatprep.subr.mxu0 0.0
      %399 = vmatpush1.msra.mxu0 0.0
      %400 = vmatprep.subr.mxu0 0.0
      %401 = vmatpush1.msra.mxu0 0.0
      %402 = vmatprep.subr.mxu0 0.0
      %403 = vmatpush1.msra.mxu0 0.0
      %404 = vmatprep.subr.mxu0 0.0
      %405 = vmatpush1.msra.mxu0 0.0
      %406 = vmatprep.subr.mxu0 0.0
      %407 = vmatpush1.msra.mxu0 0.0
      %408 = vmatprep.subr.mxu0 0.0
      %409 = vmatpush1.msra.mxu0 0.0
      %410 = vmatprep.subr.mxu0 0.0
      %411 = vmatpush1.msra.mxu0 0.0
      %412 = vmatprep.subr.mxu0 0.0
      %413 = vmatpush1.msra.mxu0 0.0
      %414 = vmatprep.subr.mxu0 0.0
      %415 = vmatpush1.msra.mxu0 0.0
      %416 = vmatprep.subr.mxu0 0.0
      %417 = vmatpush1.msra.mxu0 0.0
      %418 = vmatprep.subr.mxu0 0.0
      %419 = vmatpush1.msra.mxu0 0.0
      %420 = vmatprep.subr.mxu0 0.0
      %421 = vmatpush1.msra.mxu0 0.0
      %422 = vmatprep.subr.mxu0 0.0
      %423 = vmatpush1.msra.mxu0 0.0
      %424 = vmatprep.subr.mxu0 0.0
      %425 = vmatpush1.msra.mxu0 0.0
      %426 = vmatprep.mubr.f32.mxu0 0.0
      %427 = vmatmul.mubr.f32.gmra.mrb[0].mxu0 %v360
      %v428 = vpop.f32.mrb[0].mxu0
      %v429 = vadd.f32 0.0, %v428
      %v430 = vpop.f32.mrb[0].mxu0
      %431 = vdwg.mxu0
      %v432 = vsel %vm348, %v429, 0.0
      %433 = vadd.xlane.f32.xlu0 %v432
      %v434 = vpop.xlane.xlu0 %433
      %v435 = vmul.f32 %v434, 0.015625
      %v436 = vmul.f32 %v429, %v429
      %v437 = vsel %vm348, %v436, 0.0
      %438 = vadd.xlane.f32.xlu0 %v437
      %v439 = vpop.xlane.xlu0 %438
      %v440 = vmul.f32 %v439, 0.015625
      %v441 = vmul.f32 %v435, %v435
      %v442 = vsub.f32 %v440, %v441
      %v443 = vmax.f32 %v442, 0.0
      %v444 = vsub.f32 %v429, %v435
      %v445 = vadd.f32 %v443, 1e-05
      %v446 = vrsqrt.pop %v445
      %v447 = vmul.f32 %v444, %v446
      %v448 = vld [vmem:[%s3] sm:$0xff]
      %450 = vset.pattern.permute.xlu0 0
      %451 = vperm.xlu0 %450, %v448
      %v452 = vpop.permute.xlu0 %451
      %v454 = vmul.f32 %v447, %v452
      %v455 = vld [vmem:[%s4] sm:$0xff]
      %457 = vset.pattern.permute.xlu0 0
      %458 = vperm.xlu0 %457, %v455
      %v459 = vpop.permute.xlu0 %458
      %v461 = vadd.f32 %v454, %v459
      %v462 = vld [vmem:[%s341] sm:$0xf]
      %vm463 = vcmp.gt.f32.partialorder %v462, 0.0
      %v464 = vmul.f32 %v462, 0.01
      %v465 = vsel %vm463, %v462, %v464
      %v466 = vld [vmem:[%s5] sm:$0xf]
      %s467 = scalar_lea.vmem %s5, 4
      %v468 = vld [vmem:[%s467] sm:$0xf]
      %470 = vrot.lane.b32.xlu0 %v465, 127
      %v471 = vpop.permute.xlu0 %470
      %vm472 = vcmask 31744
      %v474 = vsel %vm472, %v468, 0
      %vm476 = vcmask 1043456
      %v477 = vsel %vm476, %v471, 0
      %479 = vmatprep.subr.mxu0 0.0
      %480 = vmatpush1.msra.mxu0 %v477
      %481 = vmatprep.subr.mxu0 0.0
      %482 = vmatpush1.msra.mxu0 0.0
      %483 = vmatprep.subr.mxu0 0.0
      %484 = vmatpush1.msra.mxu0 0.0
      %485 = vmatprep.subr.mxu0 0.0
      %486 = vmatpush1.msra.mxu0 0.0
      %487 = vmatprep.subr.mxu0 0.0
      %488 = vmatpush1.msra.mxu0 0.0
      %489 = vmatprep.subr.mxu0 0.0
      %490 = vmatpush1.msra.mxu0 0.0
      %491 = vmatprep.subr.mxu0 0.0
      %492 = vmatpush1.msra.mxu0 0.0
      %493 = vmatprep.subr.mxu0 0.0
      %494 = vmatpush1.msra.mxu0 0.0
      %495 = vmatprep.subr.mxu0 0.0
      %496 = vmatpush1.msra.mxu0 0.0
      %497 = vmatprep.subr.mxu0 0.0
      %498 = vmatpush1.msra.mxu0 0.0
      %499 = vmatprep.subr.mxu0 0.0
      %500 = vmatpush1.msra.mxu0 0.0
      %501 = vmatprep.subr.mxu0 0.0
      %502 = vmatpush1.msra.mxu0 0.0
      %503 = vmatprep.subr.mxu0 0.0
      %504 = vmatpush1.msra.mxu0 0.0
      %505 = vmatprep.subr.mxu0 0.0
      %506 = vmatpush1.msra.mxu0 0.0
      %507 = vmatprep.subr.mxu0 0.0
      %508 = vmatpush1.msra.mxu0 0.0
      %509 = vmatprep.subr.mxu0 0.0
      %510 = vmatpush1.msra.mxu0 0.0
      %511 = vmatprep.subr.mxu0 0.0
      %512 = vmatpush1.msra.mxu0 0.0
      %513 = vmatprep.subr.mxu0 0.0
      %514 = vmatpush1.msra.mxu0 0.0
      %515 = vmatprep.subr.mxu0 0.0
      %516 = vmatpush1.msra.mxu0 0.0
      %517 = vmatprep.subr.mxu0 0.0
      %518 = vmatpush1.msra.mxu0 0.0
      %519 = vmatprep.subr.mxu0 0.0
      %520 = vmatpush1.msra.mxu0 0.0
      %521 = vmatprep.subr.mxu0 0.0
      %522 = vmatpush1.msra.mxu0 0.0
      %523 = vmatprep.subr.mxu0 0.0
      %524 = vmatpush1.msra.mxu0 0.0
      %525 = vmatprep.subr.mxu0 0.0
      %526 = vmatpush1.msra.mxu0 0.0
      %527 = vmatprep.subr.mxu0 0.0
      %528 = vmatpush1.msra.mxu0 0.0
      %529 = vmatprep.subr.mxu0 0.0
      %530 = vmatpush1.msra.mxu0 0.0
      %531 = vmatprep.subr.mxu0 0.0
      %532 = vmatpush1.msra.mxu0 0.0
      %533 = vmatprep.subr.mxu0 0.0
      %534 = vmatpush1.msra.mxu0 0.0
      %535 = vmatprep.subr.mxu0 0.0
      %536 = vmatpush1.msra.mxu0 0.0
      %537 = vmatprep.subr.mxu0 0.0
      %538 = vmatpush1.msra.mxu0 0.0
      %539 = vmatprep.subr.mxu0 0.0
      %540 = vmatpush1.msra.mxu0 0.0
      %541 = vmatprep.subr.mxu0 0.0
      %542 = vmatpush1.msra.mxu0 0.0
      %543 = vmatprep.mubr.f32.mxu0 0.0
      %544 = vmatmul.mubr.f32.gmra.mrb[0].mxu0 %v474
      %v545 = vpop.f32.mrb[0].mxu0
      %v546 = vadd.f32 0.0, %v545
      %v547 = vpop.f32.mrb[0].mxu0
      %548 = vdwg.mxu0
      %v550 = vsel %vm472, %v466, 0
      %v552 = vsel %vm476, %v465, 0
      %554 = vmatprep.subr.mxu0 0.0
      %555 = vmatpush1.msra.mxu0 %v552
      %556 = vmatprep.subr.mxu0 0.0
      %557 = vmatpush1.msra.mxu0 0.0
      %558 = vmatprep.subr.mxu0 0.0
      %559 = vmatpush1.msra.mxu0 0.0
      %560 = vmatprep.subr.mxu0 0.0
      %561 = vmatpush1.msra.mxu0 0.0
      %562 = vmatprep.subr.mxu0 0.0
      %563 = vmatpush1.msra.mxu0 0.0
      %564 = vmatprep.subr.mxu0 0.0
      %565 = vmatpush1.msra.mxu0 0.0
      %566 = vmatprep.subr.mxu0 0.0
      %567 = vmatpush1.msra.mxu0 0.0
      %568 = vmatprep.subr.mxu0 0.0
      %569 = vmatpush1.msra.mxu0 0.0
      %570 = vmatprep.subr.mxu0 0.0
      %571 = vmatpush1.msra.mxu0 0.0
      %572 = vmatprep.subr.mxu0 0.0
      %573 = vmatpush1.msra.mxu0 0.0
      %574 = vmatprep.subr.mxu0 0.0
      %575 = vmatpush1.msra.mxu0 0.0
      %576 = vmatprep.subr.mxu0 0.0
      %577 = vmatpush1.msra.mxu0 0.0
      %578 = vmatprep.subr.mxu0 0.0
      %579 = vmatpush1.msra.mxu0 0.0
      %580 = vmatprep.subr.mxu0 0.0
      %581 = vmatpush1.msra.mxu0 0.0
      %582 = vmatprep.subr.mxu0 0.0
      %583 = vmatpush1.msra.mxu0 0.0
      %584 = vmatprep.subr.mxu0 0.0
      %585 = vmatpush1.msra.mxu0 0.0
      %586 = vmatprep.subr.mxu0 0.0
      %587 = vmatpush1.msra.mxu0 0.0
      %588 = vmatprep.subr.mxu0 0.0
      %589 = vmatpush1.msra.mxu0 0.0
      %590 = vmatprep.subr.mxu0 0.0
      %591 = vmatpush1.msra.mxu0 0.0
      %592 = vmatprep.subr.mxu0 0.0
      %593 = vmatpush1.msra.mxu0 0.0
      %594 = vmatprep.subr.mxu0 0.0
      %595 = vmatpush1.msra.mxu0 0.0
      %596 = vmatprep.subr.mxu0 0.0
      %597 = vmatpush1.msra.mxu0 0.0
      %598 = vmatprep.subr.mxu0 0.0
      %599 = vmatpush1.msra.mxu0 0.0
      %600 = vmatprep.subr.mxu0 0.0
      %601 = vmatpush1.msra.mxu0 0.0
      %602 = vmatprep.subr.mxu0 0.0
      %603 = vmatpush1.msra.mxu0 0.0
      %604 = vmatprep.subr.mxu0 0.0
      %605 = vmatpush1.msra.mxu0 0.0
      %606 = vmatprep.subr.mxu0 0.0
      %607 = vmatpush1.msra.mxu0 0.0
      %608 = vmatprep.subr.mxu0 0.0
      %609 = vmatpush1.msra.mxu0 0.0
      %610 = vmatprep.subr.mxu0 0.0
      %611 = vmatpush1.msra.mxu0 0.0
      %612 = vmatprep.subr.mxu0 0.0
      %613 = vmatpush1.msra.mxu0 0.0
      %614 = vmatprep.subr.mxu0 0.0
      %615 = vmatpush1.msra.mxu0 0.0
      %616 = vmatprep.subr.mxu0 0.0
      %617 = vmatpush1.msra.mxu0 0.0
      %618 = vmatprep.mubr.f32.mxu0 0.0
      %619 = vmatmul.mubr.f32.gmra.mrb[0].mxu0 %v550
      %v620 = vpop.f32.mrb[0].mxu0
      %v621 = vadd.f32 %v546, %v620
      %v622 = vpop.f32.mrb[0].mxu0
      %623 = vdwg.mxu0
      %s624 = scalar_lea.vmem %s5, 8
      %v625 = vld [vmem:[%s624] sm:$0xf]
      %626 = vrot.lane.b32.xlu0 %v465, 126
      %v627 = vpop.permute.xlu0 %626
      %v629 = vsel %vm472, %v625, 0
      %v631 = vsel %vm476, %v627, 0
      %633 = vmatprep.subr.mxu0 0.0
      %634 = vmatpush1.msra.mxu0 %v631
      %635 = vmatprep.subr.mxu0 0.0
      %636 = vmatpush1.msra.mxu0 0.0
      %637 = vmatprep.subr.mxu0 0.0
      %638 = vmatpush1.msra.mxu0 0.0
      %639 = vmatprep.subr.mxu0 0.0
      %640 = vmatpush1.msra.mxu0 0.0
      %641 = vmatprep.subr.mxu0 0.0
      %642 = vmatpush1.msra.mxu0 0.0
      %643 = vmatprep.subr.mxu0 0.0
      %644 = vmatpush1.msra.mxu0 0.0
      %645 = vmatprep.subr.mxu0 0.0
      %646 = vmatpush1.msra.mxu0 0.0
      %647 = vmatprep.subr.mxu0 0.0
      %648 = vmatpush1.msra.mxu0 0.0
      %649 = vmatprep.subr.mxu0 0.0
      %650 = vmatpush1.msra.mxu0 0.0
      %651 = vmatprep.subr.mxu0 0.0
      %652 = vmatpush1.msra.mxu0 0.0
      %653 = vmatprep.subr.mxu0 0.0
      %654 = vmatpush1.msra.mxu0 0.0
      %655 = vmatprep.subr.mxu0 0.0
      %656 = vmatpush1.msra.mxu0 0.0
      %657 = vmatprep.subr.mxu0 0.0
      %658 = vmatpush1.msra.mxu0 0.0
      %659 = vmatprep.subr.mxu0 0.0
      %660 = vmatpush1.msra.mxu0 0.0
      %661 = vmatprep.subr.mxu0 0.0
      %662 = vmatpush1.msra.mxu0 0.0
      %663 = vmatprep.subr.mxu0 0.0
      %664 = vmatpush1.msra.mxu0 0.0
      %665 = vmatprep.subr.mxu0 0.0
      %666 = vmatpush1.msra.mxu0 0.0
      %667 = vmatprep.subr.mxu0 0.0
      %668 = vmatpush1.msra.mxu0 0.0
      %669 = vmatprep.subr.mxu0 0.0
      %670 = vmatpush1.msra.mxu0 0.0
      %671 = vmatprep.subr.mxu0 0.0
      %672 = vmatpush1.msra.mxu0 0.0
      %673 = vmatprep.subr.mxu0 0.0
      %674 = vmatpush1.msra.mxu0 0.0
      %675 = vmatprep.subr.mxu0 0.0
      %676 = vmatpush1.msra.mxu0 0.0
      %677 = vmatprep.subr.mxu0 0.0
      %678 = vmatpush1.msra.mxu0 0.0
      %679 = vmatprep.subr.mxu0 0.0
      %680 = vmatpush1.msra.mxu0 0.0
      %681 = vmatprep.subr.mxu0 0.0
      %682 = vmatpush1.msra.mxu0 0.0
      %683 = vmatprep.subr.mxu0 0.0
      %684 = vmatpush1.msra.mxu0 0.0
      %685 = vmatprep.subr.mxu0 0.0
      %686 = vmatpush1.msra.mxu0 0.0
      %687 = vmatprep.subr.mxu0 0.0
      %688 = vmatpush1.msra.mxu0 0.0
      %689 = vmatprep.subr.mxu0 0.0
      %690 = vmatpush1.msra.mxu0 0.0
      %691 = vmatprep.subr.mxu0 0.0
      %692 = vmatpush1.msra.mxu0 0.0
      %693 = vmatprep.subr.mxu0 0.0
      %694 = vmatpush1.msra.mxu0 0.0
      %695 = vmatprep.subr.mxu0 0.0
      %696 = vmatpush1.msra.mxu0 0.0
      %697 = vmatprep.mubr.f32.mxu0 0.0
      %698 = vmatmul.mubr.f32.gmra.mrb[0].mxu0 %v629
      %v699 = vpop.f32.mrb[0].mxu0
      %v700 = vadd.f32 0.0, %v699
      %v701 = vpop.f32.mrb[0].mxu0
      %702 = vdwg.mxu0
      %v703 = vadd.f32 %v621, %v700
      %s704 = scalar_lea.vmem %s5, 12
      %v705 = vld [vmem:[%s704] sm:$0xf]
      %706 = vrot.lane.b32.xlu0 %v465, 118
      %v707 = vpop.permute.xlu0 %706
      %v709 = vsel %vm472, %v705, 0
      %v711 = vsel %vm476, %v707, 0
      %713 = vmatprep.subr.mxu0 0.0
      %714 = vmatpush1.msra.mxu0 %v711
      %715 = vmatprep.subr.mxu0 0.0
      %716 = vmatpush1.msra.mxu0 0.0
      %717 = vmatprep.subr.mxu0 0.0
      %718 = vmatpush1.msra.mxu0 0.0
      %719 = vmatprep.subr.mxu0 0.0
      %720 = vmatpush1.msra.mxu0 0.0
      %721 = vmatprep.subr.mxu0 0.0
      %722 = vmatpush1.msra.mxu0 0.0
      %723 = vmatprep.subr.mxu0 0.0
      %724 = vmatpush1.msra.mxu0 0.0
      %725 = vmatprep.subr.mxu0 0.0
      %726 = vmatpush1.msra.mxu0 0.0
      %727 = vmatprep.subr.mxu0 0.0
      %728 = vmatpush1.msra.mxu0 0.0
      %729 = vmatprep.subr.mxu0 0.0
      %730 = vmatpush1.msra.mxu0 0.0
      %731 = vmatprep.subr.mxu0 0.0
      %732 = vmatpush1.msra.mxu0 0.0
      %733 = vmatprep.subr.mxu0 0.0
      %734 = vmatpush1.msra.mxu0 0.0
      %735 = vmatprep.subr.mxu0 0.0
      %736 = vmatpush1.msra.mxu0 0.0
      %737 = vmatprep.subr.mxu0 0.0
      %738 = vmatpush1.msra.mxu0 0.0
      %739 = vmatprep.subr.mxu0 0.0
      %740 = vmatpush1.msra.mxu0 0.0
      %741 = vmatprep.subr.mxu0 0.0
      %742 = vmatpush1.msra.mxu0 0.0
      %743 = vmatprep.subr.mxu0 0.0
      %744 = vmatpush1.msra.mxu0 0.0
      %745 = vmatprep.subr.mxu0 0.0
      %746 = vmatpush1.msra.mxu0 0.0
      %747 = vmatprep.subr.mxu0 0.0
      %748 = vmatpush1.msra.mxu0 0.0
      %749 = vmatprep.subr.mxu0 0.0
      %750 = vmatpush1.msra.mxu0 0.0
      %751 = vmatprep.subr.mxu0 0.0
      %752 = vmatpush1.msra.mxu0 0.0
      %753 = vmatprep.subr.mxu0 0.0
      %754 = vmatpush1.msra.mxu0 0.0
      %755 = vmatprep.subr.mxu0 0.0
      %756 = vmatpush1.msra.mxu0 0.0
      %757 = vmatprep.subr.mxu0 0.0
      %758 = vmatpush1.msra.mxu0 0.0
      %759 = vmatprep.subr.mxu0 0.0
      %760 = vmatpush1.msra.mxu0 0.0
      %761 = vmatprep.subr.mxu0 0.0
      %762 = vmatpush1.msra.mxu0 0.0
      %763 = vmatprep.subr.mxu0 0.0
      %764 = vmatpush1.msra.mxu0 0.0
      %765 = vmatprep.subr.mxu0 0.0
      %766 = vmatpush1.msra.mxu0 0.0
      %767 = vmatprep.subr.mxu0 0.0
      %768 = vmatpush1.msra.mxu0 0.0
      %769 = vmatprep.subr.mxu0 0.0
      %770 = vmatpush1.msra.mxu0 0.0
      %771 = vmatprep.subr.mxu0 0.0
      %772 = vmatpush1.msra.mxu0 0.0
      %773 = vmatprep.subr.mxu0 0.0
      %774 = vmatpush1.msra.mxu0 0.0
      %775 = vmatprep.subr.mxu0 0.0
      %776 = vmatpush1.msra.mxu0 0.0
      %777 = vmatprep.mubr.f32.mxu0 0.0
      %778 = vmatmul.mubr.f32.gmra.mrb[0].mxu0 %v709
      %v779 = vpop.f32.mrb[0].mxu0
      %v780 = vadd.f32 0.0, %v779
      %v781 = vpop.f32.mrb[0].mxu0
      %782 = vdwg.mxu0
      %v783 = vadd.f32 %v703, %v780
      %s784 = scalar_lea.vmem %s5, 16
      %v785 = vld [vmem:[%s784] sm:$0xf]
      %786 = vrot.lane.b32.xlu0 %v465, 117
      %v787 = vpop.permute.xlu0 %786
      %v789 = vsel %vm472, %v785, 0
      %v791 = vsel %vm476, %v787, 0
      %793 = vmatprep.subr.mxu0 0.0
      %794 = vmatpush1.msra.mxu0 %v791
      %795 = vmatprep.subr.mxu0 0.0
      %796 = vmatpush1.msra.mxu0 0.0
      %797 = vmatprep.subr.mxu0 0.0
      %798 = vmatpush1.msra.mxu0 0.0
      %799 = vmatprep.subr.mxu0 0.0
      %800 = vmatpush1.msra.mxu0 0.0
      %801 = vmatprep.subr.mxu0 0.0
      %802 = vmatpush1.msra.mxu0 0.0
      %803 = vmatprep.subr.mxu0 0.0
      %804 = vmatpush1.msra.mxu0 0.0
      %805 = vmatprep.subr.mxu0 0.0
      %806 = vmatpush1.msra.mxu0 0.0
      %807 = vmatprep.subr.mxu0 0.0
      %808 = vmatpush1.msra.mxu0 0.0
      %809 = vmatprep.subr.mxu0 0.0
      %810 = vmatpush1.msra.mxu0 0.0
      %811 = vmatprep.subr.mxu0 0.0
      %812 = vmatpush1.msra.mxu0 0.0
      %813 = vmatprep.subr.mxu0 0.0
      %814 = vmatpush1.msra.mxu0 0.0
      %815 = vmatprep.subr.mxu0 0.0
      %816 = vmatpush1.msra.mxu0 0.0
      %817 = vmatprep.subr.mxu0 0.0
      %818 = vmatpush1.msra.mxu0 0.0
      %819 = vmatprep.subr.mxu0 0.0
      %820 = vmatpush1.msra.mxu0 0.0
      %821 = vmatprep.subr.mxu0 0.0
      %822 = vmatpush1.msra.mxu0 0.0
      %823 = vmatprep.subr.mxu0 0.0
      %824 = vmatpush1.msra.mxu0 0.0
      %825 = vmatprep.subr.mxu0 0.0
      %826 = vmatpush1.msra.mxu0 0.0
      %827 = vmatprep.subr.mxu0 0.0
      %828 = vmatpush1.msra.mxu0 0.0
      %829 = vmatprep.subr.mxu0 0.0
      %830 = vmatpush1.msra.mxu0 0.0
      %831 = vmatprep.subr.mxu0 0.0
      %832 = vmatpush1.msra.mxu0 0.0
      %833 = vmatprep.subr.mxu0 0.0
      %834 = vmatpush1.msra.mxu0 0.0
      %835 = vmatprep.subr.mxu0 0.0
      %836 = vmatpush1.msra.mxu0 0.0
      %837 = vmatprep.subr.mxu0 0.0
      %838 = vmatpush1.msra.mxu0 0.0
      %839 = vmatprep.subr.mxu0 0.0
      %840 = vmatpush1.msra.mxu0 0.0
      %841 = vmatprep.subr.mxu0 0.0
      %842 = vmatpush1.msra.mxu0 0.0
      %843 = vmatprep.subr.mxu0 0.0
      %844 = vmatpush1.msra.mxu0 0.0
      %845 = vmatprep.subr.mxu0 0.0
      %846 = vmatpush1.msra.mxu0 0.0
      %847 = vmatprep.subr.mxu0 0.0
      %848 = vmatpush1.msra.mxu0 0.0
      %849 = vmatprep.subr.mxu0 0.0
      %850 = vmatpush1.msra.mxu0 0.0
      %851 = vmatprep.subr.mxu0 0.0
      %852 = vmatpush1.msra.mxu0 0.0
      %853 = vmatprep.subr.mxu0 0.0
      %854 = vmatpush1.msra.mxu0 0.0
      %855 = vmatprep.subr.mxu0 0.0
      %856 = vmatpush1.msra.mxu0 0.0
      %857 = vmatprep.mubr.f32.mxu0 0.0
      %858 = vmatmul.mubr.f32.gmra.mrb[0].mxu0 %v789
      %v859 = vpop.f32.mrb[0].mxu0
      %v860 = vadd.f32 0.0, %v859
      %v861 = vpop.f32.mrb[0].mxu0
      %862 = vdwg.mxu0
      %v863 = vadd.f32 %v783, %v860
      %s864 = scalar_lea.vmem %s5, 20
      %v865 = vld [vmem:[%s864] sm:$0xf]
      %866 = vrot.lane.b32.xlu0 %v465, 116
      %v867 = vpop.permute.xlu0 %866
      %v869 = vsel %vm472, %v865, 0
      %v871 = vsel %vm476, %v867, 0
      %873 = vmatprep.subr.mxu0 0.0
      %874 = vmatpush1.msra.mxu0 %v871
      %875 = vmatprep.subr.mxu0 0.0
      %876 = vmatpush1.msra.mxu0 0.0
      %877 = vmatprep.subr.mxu0 0.0
      %878 = vmatpush1.msra.mxu0 0.0
      %879 = vmatprep.subr.mxu0 0.0
      %880 = vmatpush1.msra.mxu0 0.0
      %881 = vmatprep.subr.mxu0 0.0
      %882 = vmatpush1.msra.mxu0 0.0
      %883 = vmatprep.subr.mxu0 0.0
      %884 = vmatpush1.msra.mxu0 0.0
      %885 = vmatprep.subr.mxu0 0.0
      %886 = vmatpush1.msra.mxu0 0.0
      %887 = vmatprep.subr.mxu0 0.0
      %888 = vmatpush1.msra.mxu0 0.0
      %889 = vmatprep.subr.mxu0 0.0
      %890 = vmatpush1.msra.mxu0 0.0
      %891 = vmatprep.subr.mxu0 0.0
      %892 = vmatpush1.msra.mxu0 0.0
      %893 = vmatprep.subr.mxu0 0.0
      %894 = vmatpush1.msra.mxu0 0.0
      %895 = vmatprep.subr.mxu0 0.0
      %896 = vmatpush1.msra.mxu0 0.0
      %897 = vmatprep.subr.mxu0 0.0
      %898 = vmatpush1.msra.mxu0 0.0
      %899 = vmatprep.subr.mxu0 0.0
      %900 = vmatpush1.msra.mxu0 0.0
      %901 = vmatprep.subr.mxu0 0.0
      %902 = vmatpush1.msra.mxu0 0.0
      %903 = vmatprep.subr.mxu0 0.0
      %904 = vmatpush1.msra.mxu0 0.0
      %905 = vmatprep.subr.mxu0 0.0
      %906 = vmatpush1.msra.mxu0 0.0
      %907 = vmatprep.subr.mxu0 0.0
      %908 = vmatpush1.msra.mxu0 0.0
      %909 = vmatprep.subr.mxu0 0.0
      %910 = vmatpush1.msra.mxu0 0.0
      %911 = vmatprep.subr.mxu0 0.0
      %912 = vmatpush1.msra.mxu0 0.0
      %913 = vmatprep.subr.mxu0 0.0
      %914 = vmatpush1.msra.mxu0 0.0
      %915 = vmatprep.subr.mxu0 0.0
      %916 = vmatpush1.msra.mxu0 0.0
      %917 = vmatprep.subr.mxu0 0.0
      %918 = vmatpush1.msra.mxu0 0.0
      %919 = vmatprep.subr.mxu0 0.0
      %920 = vmatpush1.msra.mxu0 0.0
      %921 = vmatprep.subr.mxu0 0.0
      %922 = vmatpush1.msra.mxu0 0.0
      %923 = vmatprep.subr.mxu0 0.0
      %924 = vmatpush1.msra.mxu0 0.0
      %925 = vmatprep.subr.mxu0 0.0
      %926 = vmatpush1.msra.mxu0 0.0
      %927 = vmatprep.subr.mxu0 0.0
      %928 = vmatpush1.msra.mxu0 0.0
      %929 = vmatprep.subr.mxu0 0.0
      %930 = vmatpush1.msra.mxu0 0.0
      %931 = vmatprep.subr.mxu0 0.0
      %932 = vmatpush1.msra.mxu0 0.0
      %933 = vmatprep.subr.mxu0 0.0
      %934 = vmatpush1.msra.mxu0 0.0
      %935 = vmatprep.subr.mxu0 0.0
      %936 = vmatpush1.msra.mxu0 0.0
      %937 = vmatprep.mubr.f32.mxu0 0.0
      %938 = vmatmul.mubr.f32.gmra.mrb[0].mxu0 %v869
      %v939 = vpop.f32.mrb[0].mxu0
      %v940 = vadd.f32 0.0, %v939
      %v941 = vpop.f32.mrb[0].mxu0
      %942 = vdwg.mxu0
      %v943 = vadd.f32 %v863, %v940
      %s944 = scalar_lea.vmem %s5, 24
      %v945 = vld [vmem:[%s944] sm:$0xf]
      %946 = vrot.lane.b32.xlu0 %v465, 108
      %v947 = vpop.permute.xlu0 %946
      %v949 = vsel %vm472, %v945, 0
      %v951 = vsel %vm476, %v947, 0
      %953 = vmatprep.subr.mxu0 0.0
      %954 = vmatpush1.msra.mxu0 %v951
      %955 = vmatprep.subr.mxu0 0.0
      %956 = vmatpush1.msra.mxu0 0.0
      %957 = vmatprep.subr.mxu0 0.0
      %958 = vmatpush1.msra.mxu0 0.0
      %959 = vmatprep.subr.mxu0 0.0
      %960 = vmatpush1.msra.mxu0 0.0
      %961 = vmatprep.subr.mxu0 0.0
      %962 = vmatpush1.msra.mxu0 0.0
      %963 = vmatprep.subr.mxu0 0.0
      %964 = vmatpush1.msra.mxu0 0.0
      %965 = vmatprep.subr.mxu0 0.0
      %966 = vmatpush1.msra.mxu0 0.0
      %967 = vmatprep.subr.mxu0 0.0
      %968 = vmatpush1.msra.mxu0 0.0
      %969 = vmatprep.subr.mxu0 0.0
      %970 = vmatpush1.msra.mxu0 0.0
      %971 = vmatprep.subr.mxu0 0.0
      %972 = vmatpush1.msra.mxu0 0.0
      %973 = vmatprep.subr.mxu0 0.0
      %974 = vmatpush1.msra.mxu0 0.0
      %975 = vmatprep.subr.mxu0 0.0
      %976 = vmatpush1.msra.mxu0 0.0
      %977 = vmatprep.subr.mxu0 0.0
      %978 = vmatpush1.msra.mxu0 0.0
      %979 = vmatprep.subr.mxu0 0.0
      %980 = vmatpush1.msra.mxu0 0.0
      %981 = vmatprep.subr.mxu0 0.0
      %982 = vmatpush1.msra.mxu0 0.0
      %983 = vmatprep.subr.mxu0 0.0
      %984 = vmatpush1.msra.mxu0 0.0
      %985 = vmatprep.subr.mxu0 0.0
      %986 = vmatpush1.msra.mxu0 0.0
      %987 = vmatprep.subr.mxu0 0.0
      %988 = vmatpush1.msra.mxu0 0.0
      %989 = vmatprep.subr.mxu0 0.0
      %990 = vmatpush1.msra.mxu0 0.0
      %991 = vmatprep.subr.mxu0 0.0
      %992 = vmatpush1.msra.mxu0 0.0
      %993 = vmatprep.subr.mxu0 0.0
      %994 = vmatpush1.msra.mxu0 0.0
      %995 = vmatprep.subr.mxu0 0.0
      %996 = vmatpush1.msra.mxu0 0.0
      %997 = vmatprep.subr.mxu0 0.0
      %998 = vmatpush1.msra.mxu0 0.0
      %999 = vmatprep.subr.mxu0 0.0
      %1000 = vmatpush1.msra.mxu0 0.0
      %1001 = vmatprep.subr.mxu0 0.0
      %1002 = vmatpush1.msra.mxu0 0.0
      %1003 = vmatprep.subr.mxu0 0.0
      %1004 = vmatpush1.msra.mxu0 0.0
      %1005 = vmatprep.subr.mxu0 0.0
      %1006 = vmatpush1.msra.mxu0 0.0
      %1007 = vmatprep.subr.mxu0 0.0
      %1008 = vmatpush1.msra.mxu0 0.0
      %1009 = vmatprep.subr.mxu0 0.0
      %1010 = vmatpush1.msra.mxu0 0.0
      %1011 = vmatprep.subr.mxu0 0.0
      %1012 = vmatpush1.msra.mxu0 0.0
      %1013 = vmatprep.subr.mxu0 0.0
      %1014 = vmatpush1.msra.mxu0 0.0
      %1015 = vmatprep.subr.mxu0 0.0
      %1016 = vmatpush1.msra.mxu0 0.0
      %1017 = vmatprep.mubr.f32.mxu0 0.0
      %1018 = vmatmul.mubr.f32.gmra.mrb[0].mxu0 %v949
      %v1019 = vpop.f32.mrb[0].mxu0
      %v1020 = vadd.f32 0.0, %v1019
      %v1021 = vpop.f32.mrb[0].mxu0
      %1022 = vdwg.mxu0
      %v1023 = vadd.f32 %v943, %v1020
      %s1024 = scalar_lea.vmem %s5, 28
      %v1025 = vld [vmem:[%s1024] sm:$0xf]
      %1026 = vrot.lane.b32.xlu0 %v465, 107
      %v1027 = vpop.permute.xlu0 %1026
      %v1029 = vsel %vm472, %v1025, 0
      %v1031 = vsel %vm476, %v1027, 0
      %1033 = vmatprep.subr.mxu0 0.0
      %1034 = vmatpush1.msra.mxu0 %v1031
      %1035 = vmatprep.subr.mxu0 0.0
      %1036 = vmatpush1.msra.mxu0 0.0
      %1037 = vmatprep.subr.mxu0 0.0
      %1038 = vmatpush1.msra.mxu0 0.0
      %1039 = vmatprep.subr.mxu0 0.0
      %1040 = vmatpush1.msra.mxu0 0.0
      %1041 = vmatprep.subr.mxu0 0.0
      %1042 = vmatpush1.msra.mxu0 0.0
      %1043 = vmatprep.subr.mxu0 0.0
      %1044 = vmatpush1.msra.mxu0 0.0
      %1045 = vmatprep.subr.mxu0 0.0
      %1046 = vmatpush1.msra.mxu0 0.0
      %1047 = vmatprep.subr.mxu0 0.0
      %1048 = vmatpush1.msra.mxu0 0.0
      %1049 = vmatprep.subr.mxu0 0.0
      %1050 = vmatpush1.msra.mxu0 0.0
      %1051 = vmatprep.subr.mxu0 0.0
      %1052 = vmatpush1.msra.mxu0 0.0
      %1053 = vmatprep.subr.mxu0 0.0
      %1054 = vmatpush1.msra.mxu0 0.0
      %1055 = vmatprep.subr.mxu0 0.0
      %1056 = vmatpush1.msra.mxu0 0.0
      %1057 = vmatprep.subr.mxu0 0.0
      %1058 = vmatpush1.msra.mxu0 0.0
      %1059 = vmatprep.subr.mxu0 0.0
      %1060 = vmatpush1.msra.mxu0 0.0
      %1061 = vmatprep.subr.mxu0 0.0
      %1062 = vmatpush1.msra.mxu0 0.0
      %1063 = vmatprep.subr.mxu0 0.0
      %1064 = vmatpush1.msra.mxu0 0.0
      %1065 = vmatprep.subr.mxu0 0.0
      %1066 = vmatpush1.msra.mxu0 0.0
      %1067 = vmatprep.subr.mxu0 0.0
      %1068 = vmatpush1.msra.mxu0 0.0
      %1069 = vmatprep.subr.mxu0 0.0
      %1070 = vmatpush1.msra.mxu0 0.0
      %1071 = vmatprep.subr.mxu0 0.0
      %1072 = vmatpush1.msra.mxu0 0.0
      %1073 = vmatprep.subr.mxu0 0.0
      %1074 = vmatpush1.msra.mxu0 0.0
      %1075 = vmatprep.subr.mxu0 0.0
      %1076 = vmatpush1.msra.mxu0 0.0
      %1077 = vmatprep.subr.mxu0 0.0
      %1078 = vmatpush1.msra.mxu0 0.0
      %1079 = vmatprep.subr.mxu0 0.0
      %1080 = vmatpush1.msra.mxu0 0.0
      %1081 = vmatprep.subr.mxu0 0.0
      %1082 = vmatpush1.msra.mxu0 0.0
      %1083 = vmatprep.subr.mxu0 0.0
      %1084 = vmatpush1.msra.mxu0 0.0
      %1085 = vmatprep.subr.mxu0 0.0
      %1086 = vmatpush1.msra.mxu0 0.0
      %1087 = vmatprep.subr.mxu0 0.0
      %1088 = vmatpush1.msra.mxu0 0.0
      %1089 = vmatprep.subr.mxu0 0.0
      %1090 = vmatpush1.msra.mxu0 0.0
      %1091 = vmatprep.subr.mxu0 0.0
      %1092 = vmatpush1.msra.mxu0 0.0
      %1093 = vmatprep.subr.mxu0 0.0
      %1094 = vmatpush1.msra.mxu0 0.0
      %1095 = vmatprep.subr.mxu0 0.0
      %1096 = vmatpush1.msra.mxu0 0.0
      %1097 = vmatprep.mubr.f32.mxu0 0.0
      %1098 = vmatmul.mubr.f32.gmra.mrb[0].mxu0 %v1029
      %v1099 = vpop.f32.mrb[0].mxu0
      %v1100 = vadd.f32 0.0, %v1099
      %v1101 = vpop.f32.mrb[0].mxu0
      %1102 = vdwg.mxu0
      %v1103 = vadd.f32 %v1023, %v1100
      %s1104 = scalar_lea.vmem %s5, 32
      %v1105 = vld [vmem:[%s1104] sm:$0xf]
      %1106 = vrot.lane.b32.xlu0 %v465, 106
      %v1107 = vpop.permute.xlu0 %1106
      %v1109 = vsel %vm472, %v1105, 0
      %v1111 = vsel %vm476, %v1107, 0
      %1113 = vmatprep.subr.mxu0 0.0
      %1114 = vmatpush1.msra.mxu0 %v1111
      %1115 = vmatprep.subr.mxu0 0.0
      %1116 = vmatpush1.msra.mxu0 0.0
      %1117 = vmatprep.subr.mxu0 0.0
      %1118 = vmatpush1.msra.mxu0 0.0
      %1119 = vmatprep.subr.mxu0 0.0
      %1120 = vmatpush1.msra.mxu0 0.0
      %1121 = vmatprep.subr.mxu0 0.0
      %1122 = vmatpush1.msra.mxu0 0.0
      %1123 = vmatprep.subr.mxu0 0.0
      %1124 = vmatpush1.msra.mxu0 0.0
      %1125 = vmatprep.subr.mxu0 0.0
      %1126 = vmatpush1.msra.mxu0 0.0
      %1127 = vmatprep.subr.mxu0 0.0
      %1128 = vmatpush1.msra.mxu0 0.0
      %1129 = vmatprep.subr.mxu0 0.0
      %1130 = vmatpush1.msra.mxu0 0.0
      %1131 = vmatprep.subr.mxu0 0.0
      %1132 = vmatpush1.msra.mxu0 0.0
      %1133 = vmatprep.subr.mxu0 0.0
      %1134 = vmatpush1.msra.mxu0 0.0
      %1135 = vmatprep.subr.mxu0 0.0
      %1136 = vmatpush1.msra.mxu0 0.0
      %1137 = vmatprep.subr.mxu0 0.0
      %1138 = vmatpush1.msra.mxu0 0.0
      %1139 = vmatprep.subr.mxu0 0.0
      %1140 = vmatpush1.msra.mxu0 0.0
      %1141 = vmatprep.subr.mxu0 0.0
      %1142 = vmatpush1.msra.mxu0 0.0
      %1143 = vmatprep.subr.mxu0 0.0
      %1144 = vmatpush1.msra.mxu0 0.0
      %1145 = vmatprep.subr.mxu0 0.0
      %1146 = vmatpush1.msra.mxu0 0.0
      %1147 = vmatprep.subr.mxu0 0.0
      %1148 = vmatpush1.msra.mxu0 0.0
      %1149 = vmatprep.subr.mxu0 0.0
      %1150 = vmatpush1.msra.mxu0 0.0
      %1151 = vmatprep.subr.mxu0 0.0
      %1152 = vmatpush1.msra.mxu0 0.0
      %1153 = vmatprep.subr.mxu0 0.0
      %1154 = vmatpush1.msra.mxu0 0.0
      %1155 = vmatprep.subr.mxu0 0.0
      %1156 = vmatpush1.msra.mxu0 0.0
      %1157 = vmatprep.subr.mxu0 0.0
      %1158 = vmatpush1.msra.mxu0 0.0
      %1159 = vmatprep.subr.mxu0 0.0
      %1160 = vmatpush1.msra.mxu0 0.0
      %1161 = vmatprep.subr.mxu0 0.0
      %1162 = vmatpush1.msra.mxu0 0.0
      %1163 = vmatprep.subr.mxu0 0.0
      %1164 = vmatpush1.msra.mxu0 0.0
      %1165 = vmatprep.subr.mxu0 0.0
      %1166 = vmatpush1.msra.mxu0 0.0
      %1167 = vmatprep.subr.mxu0 0.0
      %1168 = vmatpush1.msra.mxu0 0.0
      %1169 = vmatprep.subr.mxu0 0.0
      %1170 = vmatpush1.msra.mxu0 0.0
      %1171 = vmatprep.subr.mxu0 0.0
      %1172 = vmatpush1.msra.mxu0 0.0
      %1173 = vmatprep.subr.mxu0 0.0
      %1174 = vmatpush1.msra.mxu0 0.0
      %1175 = vmatprep.subr.mxu0 0.0
      %1176 = vmatpush1.msra.mxu0 0.0
      %1177 = vmatprep.mubr.f32.mxu0 0.0
      %1178 = vmatmul.mubr.f32.gmra.mrb[0].mxu0 %v1109
      %v1179 = vpop.f32.mrb[0].mxu0
      %v1180 = vadd.f32 0.0, %v1179
      %v1181 = vpop.f32.mrb[0].mxu0
      %1182 = vdwg.mxu0
      %v1183 = vadd.f32 %v1103, %v1180
      %v1185 = vlaneseq
      %v1186 = vshrl.u32 %v1185, 7
      %v1187 = vsub.s32 0, %v1186
      %v1188 = vrot.slane %v347, %v1187
      %v1190 = vmul.f32 %v1183, %v1188
      %vm1191 = vcmask 633856
      %v1192 = vsel %vm1191, %v1190, 0.0
      %1193 = vadd.xlane.f32.xlu0 %v1192
      %v1194 = vpop.xlane.xlu0 %1193
      %v1195 = vmul.f32 %v1194, 0.015625
      %v1196 = vmul.f32 %v1190, %v1183
      %v1197 = vsel %vm1191, %v1196, 0.0
      %1198 = vadd.xlane.f32.xlu0 %v1197
      %v1199 = vpop.xlane.xlu0 %1198
      %v1200 = vmul.f32 %v1199, 0.015625
      %v1201 = vmul.f32 %v1195, %v1195
      %v1202 = vsub.f32 %v1200, %v1201
      %v1203 = vmax.f32 %v1202, 0.0
      %v1204 = vsub.f32 %v1183, %v1195
      %v1205 = vadd.f32 %v1203, 1e-05
      %v1206 = vrsqrt.pop %v1205
      %v1207 = vmul.f32 %v1204, %v1206
      %1209 = vrot.lane.b32.xlu0 %v1207, 11
      %v1210 = vpop.permute.xlu0 %1209
      %v1212 = vadd.f32 %v461, %v1210
      %1213 = vrot.lane.b32.xlu0 %v1188, 11
      %v1214 = vpop.permute.xlu0 %1213
      %v1216 = vmul.f32 %v1212, %v1214
      %vm1217 = vcmask 724056
      %1218 = vst.msk [vmem:[#allocation2] sm:$0xf] %vm1217, %v1216
      %v1219 = vld [vmem:[#allocation2] sm:$0xf]
      %1221 = vrot.lane.b32.xlu0 %v1219, 127
      %v1222 = vpop.permute.xlu0 %1221
      %v1224 = vadd.f32 %v1219, %v1222
      %1225 = vrot.lane.b32.xlu0 %v1219, 126
      %v1226 = vpop.permute.xlu0 %1225
      %v1228 = vadd.f32 %v1224, %v1226
      %1229 = vrot.lane.b32.xlu0 %v1219, 118
      %v1230 = vpop.permute.xlu0 %1229
      %v1232 = vadd.f32 %v1228, %v1230
      %1233 = vrot.lane.b32.xlu0 %v1219, 117
      %v1234 = vpop.permute.xlu0 %1233
      %v1236 = vadd.f32 %v1232, %v1234
      %1237 = vrot.lane.b32.xlu0 %v1219, 116
      %v1238 = vpop.permute.xlu0 %1237
      %v1240 = vadd.f32 %v1236, %v1238
      %1241 = vrot.lane.b32.xlu0 %v1219, 108
      %v1242 = vpop.permute.xlu0 %1241
      %v1244 = vadd.f32 %v1240, %v1242
      %1245 = vrot.lane.b32.xlu0 %v1219, 107
      %v1246 = vpop.permute.xlu0 %1245
      %v1248 = vadd.f32 %v1244, %v1246
      %1249 = vrot.lane.b32.xlu0 %v1219, 106
      %v1250 = vpop.permute.xlu0 %1249
      %v1252 = vadd.f32 %v1248, %v1250
      %v1253 = vmul.f32 %v1252, 0.11111111
      %v1255 = vrot.slane %v1253, 4
      %1256 = vrot.lane.b32.xlu0 %v1255, 11
      %v1257 = vpop.permute.xlu0 %1256
      %v1259 = vadd.f32 %v461, %v1257
      %v1260 = vmul.f32 %v1259, %v1214
      %vm1261 = vcmask 728156
      %1262 = vst.msk [vmem:[%s346 - $0x4] sm:$0xf0] %vm1261, %v1260
      %v1263 = vld [vmem:[%s346] sm:$0xf]
      %vm1264 = vcmp.gt.f32.partialorder %v1263, 0.0
      %v1265 = vmul.f32 %v1263, 0.01
      %v1266 = vsel %vm1264, %v1263, %v1265
      %v1267 = vld [vmem:[%s6] sm:$0xf]
      %s1268 = scalar_lea.vmem %s6, 4
      %v1269 = vld [vmem:[%s1268] sm:$0xf]
      %1271 = vrot.lane.b32.xlu0 %v1266, 127
      %v1272 = vpop.permute.xlu0 %1271
      %v1274 = vsel %vm472, %v1269, 0
      %v1276 = vsel %vm476, %v1272, 0
      %1278 = vmatprep.subr.mxu0 0.0
      %1279 = vmatpush1.msra.mxu0 %v1276
      %1280 = vmatprep.subr.mxu0 0.0
      %1281 = vmatpush1.msra.mxu0 0.0
      %1282 = vmatprep.subr.mxu0 0.0
      %1283 = vmatpush1.msra.mxu0 0.0
      %1284 = vmatprep.subr.mxu0 0.0
      %1285 = vmatpush1.msra.mxu0 0.0
      %1286 = vmatprep.subr.mxu0 0.0
      %1287 = vmatpush1.msra.mxu0 0.0
      %1288 = vmatprep.subr.mxu0 0.0
      %1289 = vmatpush1.msra.mxu0 0.0
      %1290 = vmatprep.subr.mxu0 0.0
      %1291 = vmatpush1.msra.mxu0 0.0
      %1292 = vmatprep.subr.mxu0 0.0
      %1293 = vmatpush1.msra.mxu0 0.0
      %1294 = vmatprep.subr.mxu0 0.0
      %1295 = vmatpush1.msra.mxu0 0.0
      %1296 = vmatprep.subr.mxu0 0.0
      %1297 = vmatpush1.msra.mxu0 0.0
      %1298 = vmatprep.subr.mxu0 0.0
      %1299 = vmatpush1.msra.mxu0 0.0
      %1300 = vmatprep.subr.mxu0 0.0
      %1301 = vmatpush1.msra.mxu0 0.0
      %1302 = vmatprep.subr.mxu0 0.0
      %1303 = vmatpush1.msra.mxu0 0.0
      %1304 = vmatprep.subr.mxu0 0.0
      %1305 = vmatpush1.msra.mxu0 0.0
      %1306 = vmatprep.subr.mxu0 0.0
      %1307 = vmatpush1.msra.mxu0 0.0
      %1308 = vmatprep.subr.mxu0 0.0
      %1309 = vmatpush1.msra.mxu0 0.0
      %1310 = vmatprep.subr.mxu0 0.0
      %1311 = vmatpush1.msra.mxu0 0.0
      %1312 = vmatprep.subr.mxu0 0.0
      %1313 = vmatpush1.msra.mxu0 0.0
      %1314 = vmatprep.subr.mxu0 0.0
      %1315 = vmatpush1.msra.mxu0 0.0
      %1316 = vmatprep.subr.mxu0 0.0
      %1317 = vmatpush1.msra.mxu0 0.0
      %1318 = vmatprep.subr.mxu0 0.0
      %1319 = vmatpush1.msra.mxu0 0.0
      %1320 = vmatprep.subr.mxu0 0.0
      %1321 = vmatpush1.msra.mxu0 0.0
      %1322 = vmatprep.subr.mxu0 0.0
      %1323 = vmatpush1.msra.mxu0 0.0
      %1324 = vmatprep.subr.mxu0 0.0
      %1325 = vmatpush1.msra.mxu0 0.0
      %1326 = vmatprep.subr.mxu0 0.0
      %1327 = vmatpush1.msra.mxu0 0.0
      %1328 = vmatprep.subr.mxu0 0.0
      %1329 = vmatpush1.msra.mxu0 0.0
      %1330 = vmatprep.subr.mxu0 0.0
      %1331 = vmatpush1.msra.mxu0 0.0
      %1332 = vmatprep.subr.mxu0 0.0
      %1333 = vmatpush1.msra.mxu0 0.0
      %1334 = vmatprep.subr.mxu0 0.0
      %1335 = vmatpush1.msra.mxu0 0.0
      %1336 = vmatprep.subr.mxu0 0.0
      %1337 = vmatpush1.msra.mxu0 0.0
      %1338 = vmatprep.subr.mxu0 0.0
      %1339 = vmatpush1.msra.mxu0 0.0
      %1340 = vmatprep.subr.mxu0 0.0
      %1341 = vmatpush1.msra.mxu0 0.0
      %1342 = vmatprep.mubr.f32.mxu0 0.0
      %1343 = vmatmul.mubr.f32.gmra.mrb[0].mxu0 %v1274
      %v1344 = vpop.f32.mrb[0].mxu0
      %v1345 = vadd.f32 0.0, %v1344
      %v1346 = vpop.f32.mrb[0].mxu0
      %1347 = vdwg.mxu0
      %v1349 = vsel %vm472, %v1267, 0
      %v1351 = vsel %vm476, %v1266, 0
      %1353 = vmatprep.subr.mxu0 0.0
      %1354 = vmatpush1.msra.mxu0 %v1351
      %1355 = vmatprep.subr.mxu0 0.0
      %1356 = vmatpush1.msra.mxu0 0.0
      %1357 = vmatprep.subr.mxu0 0.0
      %1358 = vmatpush1.msra.mxu0 0.0
      %1359 = vmatprep.subr.mxu0 0.0
      %1360 = vmatpush1.msra.mxu0 0.0
      %1361 = vmatprep.subr.mxu0 0.0
      %1362 = vmatpush1.msra.mxu0 0.0
      %1363 = vmatprep.subr.mxu0 0.0
      %1364 = vmatpush1.msra.mxu0 0.0
      %1365 = vmatprep.subr.mxu0 0.0
      %1366 = vmatpush1.msra.mxu0 0.0
      %1367 = vmatprep.subr.mxu0 0.0
      %1368 = vmatpush1.msra.mxu0 0.0
      %1369 = vmatprep.subr.mxu0 0.0
      %1370 = vmatpush1.msra.mxu0 0.0
      %1371 = vmatprep.subr.mxu0 0.0
      %1372 = vmatpush1.msra.mxu0 0.0
      %1373 = vmatprep.subr.mxu0 0.0
      %1374 = vmatpush1.msra.mxu0 0.0
      %1375 = vmatprep.subr.mxu0 0.0
      %1376 = vmatpush1.msra.mxu0 0.0
      %1377 = vmatprep.subr.mxu0 0.0
      %1378 = vmatpush1.msra.mxu0 0.0
      %1379 = vmatprep.subr.mxu0 0.0
      %1380 = vmatpush1.msra.mxu0 0.0
      %1381 = vmatprep.subr.mxu0 0.0
      %1382 = vmatpush1.msra.mxu0 0.0
      %1383 = vmatprep.subr.mxu0 0.0
      %1384 = vmatpush1.msra.mxu0 0.0
      %1385 = vmatprep.subr.mxu0 0.0
      %1386 = vmatpush1.msra.mxu0 0.0
      %1387 = vmatprep.subr.mxu0 0.0
      %1388 = vmatpush1.msra.mxu0 0.0
      %1389 = vmatprep.subr.mxu0 0.0
      %1390 = vmatpush1.msra.mxu0 0.0
      %1391 = vmatprep.subr.mxu0 0.0
      %1392 = vmatpush1.msra.mxu0 0.0
      %1393 = vmatprep.subr.mxu0 0.0
      %1394 = vmatpush1.msra.mxu0 0.0
      %1395 = vmatprep.subr.mxu0 0.0
      %1396 = vmatpush1.msra.mxu0 0.0
      %1397 = vmatprep.subr.mxu0 0.0
      %1398 = vmatpush1.msra.mxu0 0.0
      %1399 = vmatprep.subr.mxu0 0.0
      %1400 = vmatpush1.msra.mxu0 0.0
      %1401 = vmatprep.subr.mxu0 0.0
      %1402 = vmatpush1.msra.mxu0 0.0
      %1403 = vmatprep.subr.mxu0 0.0
      %1404 = vmatpush1.msra.mxu0 0.0
      %1405 = vmatprep.subr.mxu0 0.0
      %1406 = vmatpush1.msra.mxu0 0.0
      %1407 = vmatprep.subr.mxu0 0.0
      %1408 = vmatpush1.msra.mxu0 0.0
      %1409 = vmatprep.subr.mxu0 0.0
      %1410 = vmatpush1.msra.mxu0 0.0
      %1411 = vmatprep.subr.mxu0 0.0
      %1412 = vmatpush1.msra.mxu0 0.0
      %1413 = vmatprep.subr.mxu0 0.0
      %1414 = vmatpush1.msra.mxu0 0.0
      %1415 = vmatprep.subr.mxu0 0.0
      %1416 = vmatpush1.msra.mxu0 0.0
      %1417 = vmatprep.mubr.f32.mxu0 0.0
      %1418 = vmatmul.mubr.f32.gmra.mrb[0].mxu0 %v1349
      %v1419 = vpop.f32.mrb[0].mxu0
      %v1420 = vadd.f32 %v1345, %v1419
      %v1421 = vpop.f32.mrb[0].mxu0
      %1422 = vdwg.mxu0
      %s1423 = scalar_lea.vmem %s6, 8
      %v1424 = vld [vmem:[%s1423] sm:$0xf]
      %1425 = vrot.lane.b32.xlu0 %v1266, 126
      %v1426 = vpop.permute.xlu0 %1425
      %v1428 = vsel %vm472, %v1424, 0
      %v1430 = vsel %vm476, %v1426, 0
      %1432 = vmatprep.subr.mxu0 0.0
      %1433 = vmatpush1.msra.mxu0 %v1430
      %1434 = vmatprep.subr.mxu0 0.0
      %1435 = vmatpush1.msra.mxu0 0.0
      %1436 = vmatprep.subr.mxu0 0.0
      %1437 = vmatpush1.msra.mxu0 0.0
      %1438 = vmatprep.subr.mxu0 0.0
      %1439 = vmatpush1.msra.mxu0 0.0
      %1440 = vmatprep.subr.mxu0 0.0
      %1441 = vmatpush1.msra.mxu0 0.0
      %1442 = vmatprep.subr.mxu0 0.0
      %1443 = vmatpush1.msra.mxu0 0.0
      %1444 = vmatprep.subr.mxu0 0.0
      %1445 = vmatpush1.msra.mxu0 0.0
      %1446 = vmatprep.subr.mxu0 0.0
      %1447 = vmatpush1.msra.mxu0 0.0
      %1448 = vmatprep.subr.mxu0 0.0
      %1449 = vmatpush1.msra.mxu0 0.0
      %1450 = vmatprep.subr.mxu0 0.0
      %1451 = vmatpush1.msra.mxu0 0.0
      %1452 = vmatprep.subr.mxu0 0.0
      %1453 = vmatpush1.msra.mxu0 0.0
      %1454 = vmatprep.subr.mxu0 0.0
      %1455 = vmatpush1.msra.mxu0 0.0
      %1456 = vmatprep.subr.mxu0 0.0
      %1457 = vmatpush1.msra.mxu0 0.0
      %1458 = vmatprep.subr.mxu0 0.0
      %1459 = vmatpush1.msra.mxu0 0.0
      %1460 = vmatprep.subr.mxu0 0.0
      %1461 = vmatpush1.msra.mxu0 0.0
      %1462 = vmatprep.subr.mxu0 0.0
      %1463 = vmatpush1.msra.mxu0 0.0
      %1464 = vmatprep.subr.mxu0 0.0
      %1465 = vmatpush1.msra.mxu0 0.0
      %1466 = vmatprep.subr.mxu0 0.0
      %1467 = vmatpush1.msra.mxu0 0.0
      %1468 = vmatprep.subr.mxu0 0.0
      %1469 = vmatpush1.msra.mxu0 0.0
      %1470 = vmatprep.subr.mxu0 0.0
      %1471 = vmatpush1.msra.mxu0 0.0
      %1472 = vmatprep.subr.mxu0 0.0
      %1473 = vmatpush1.msra.mxu0 0.0
      %1474 = vmatprep.subr.mxu0 0.0
      %1475 = vmatpush1.msra.mxu0 0.0
      %1476 = vmatprep.subr.mxu0 0.0
      %1477 = vmatpush1.msra.mxu0 0.0
      %1478 = vmatprep.subr.mxu0 0.0
      %1479 = vmatpush1.msra.mxu0 0.0
      %1480 = vmatprep.subr.mxu0 0.0
      %1481 = vmatpush1.msra.mxu0 0.0
      %1482 = vmatprep.subr.mxu0 0.0
      %1483 = vmatpush1.msra.mxu0 0.0
      %1484 = vmatprep.subr.mxu0 0.0
      %1485 = vmatpush1.msra.mxu0 0.0
      %1486 = vmatprep.subr.mxu0 0.0
      %1487 = vmatpush1.msra.mxu0 0.0
      %1488 = vmatprep.subr.mxu0 0.0
      %1489 = vmatpush1.msra.mxu0 0.0
      %1490 = vmatprep.subr.mxu0 0.0
      %1491 = vmatpush1.msra.mxu0 0.0
      %1492 = vmatprep.subr.mxu0 0.0
      %1493 = vmatpush1.msra.mxu0 0.0
      %1494 = vmatprep.subr.mxu0 0.0
      %1495 = vmatpush1.msra.mxu0 0.0
      %1496 = vmatprep.mubr.f32.mxu0 0.0
      %1497 = vmatmul.mubr.f32.gmra.mrb[0].mxu0 %v1428
      %v1498 = vpop.f32.mrb[0].mxu0
      %v1499 = vadd.f32 0.0, %v1498
      %v1500 = vpop.f32.mrb[0].mxu0
      %1501 = vdwg.mxu0
      %v1502 = vadd.f32 %v1420, %v1499
      %s1503 = scalar_lea.vmem %s6, 12
      %v1504 = vld [vmem:[%s1503] sm:$0xf]
      %1505 = vrot.lane.b32.xlu0 %v1266, 118
      %v1506 = vpop.permute.xlu0 %1505
      %v1508 = vsel %vm472, %v1504, 0
      %v1510 = vsel %vm476, %v1506, 0
      %1512 = vmatprep.subr.mxu0 0.0
      %1513 = vmatpush1.msra.mxu0 %v1510
      %1514 = vmatprep.subr.mxu0 0.0
      %1515 = vmatpush1.msra.mxu0 0.0
      %1516 = vmatprep.subr.mxu0 0.0
      %1517 = vmatpush1.msra.mxu0 0.0
      %1518 = vmatprep.subr.mxu0 0.0
      %1519 = vmatpush1.msra.mxu0 0.0
      %1520 = vmatprep.subr.mxu0 0.0
      %1521 = vmatpush1.msra.mxu0 0.0
      %1522 = vmatprep.subr.mxu0 0.0
      %1523 = vmatpush1.msra.mxu0 0.0
      %1524 = vmatprep.subr.mxu0 0.0
      %1525 = vmatpush1.msra.mxu0 0.0
      %1526 = vmatprep.subr.mxu0 0.0
      %1527 = vmatpush1.msra.mxu0 0.0
      %1528 = vmatprep.subr.mxu0 0.0
      %1529 = vmatpush1.msra.mxu0 0.0
      %1530 = vmatprep.subr.mxu0 0.0
      %1531 = vmatpush1.msra.mxu0 0.0
      %1532 = vmatprep.subr.mxu0 0.0
      %1533 = vmatpush1.msra.mxu0 0.0
      %1534 = vmatprep.subr.mxu0 0.0
      %1535 = vmatpush1.msra.mxu0 0.0
      %1536 = vmatprep.subr.mxu0 0.0
      %1537 = vmatpush1.msra.mxu0 0.0
      %1538 = vmatprep.subr.mxu0 0.0
      %1539 = vmatpush1.msra.mxu0 0.0
      %1540 = vmatprep.subr.mxu0 0.0
      %1541 = vmatpush1.msra.mxu0 0.0
      %1542 = vmatprep.subr.mxu0 0.0
      %1543 = vmatpush1.msra.mxu0 0.0
      %1544 = vmatprep.subr.mxu0 0.0
      %1545 = vmatpush1.msra.mxu0 0.0
      %1546 = vmatprep.subr.mxu0 0.0
      %1547 = vmatpush1.msra.mxu0 0.0
      %1548 = vmatprep.subr.mxu0 0.0
      %1549 = vmatpush1.msra.mxu0 0.0
      %1550 = vmatprep.subr.mxu0 0.0
      %1551 = vmatpush1.msra.mxu0 0.0
      %1552 = vmatprep.subr.mxu0 0.0
      %1553 = vmatpush1.msra.mxu0 0.0
      %1554 = vmatprep.subr.mxu0 0.0
      %1555 = vmatpush1.msra.mxu0 0.0
      %1556 = vmatprep.subr.mxu0 0.0
      %1557 = vmatpush1.msra.mxu0 0.0
      %1558 = vmatprep.subr.mxu0 0.0
      %1559 = vmatpush1.msra.mxu0 0.0
      %1560 = vmatprep.subr.mxu0 0.0
      %1561 = vmatpush1.msra.mxu0 0.0
      %1562 = vmatprep.subr.mxu0 0.0
      %1563 = vmatpush1.msra.mxu0 0.0
      %1564 = vmatprep.subr.mxu0 0.0
      %1565 = vmatpush1.msra.mxu0 0.0
      %1566 = vmatprep.subr.mxu0 0.0
      %1567 = vmatpush1.msra.mxu0 0.0
      %1568 = vmatprep.subr.mxu0 0.0
      %1569 = vmatpush1.msra.mxu0 0.0
      %1570 = vmatprep.subr.mxu0 0.0
      %1571 = vmatpush1.msra.mxu0 0.0
      %1572 = vmatprep.subr.mxu0 0.0
      %1573 = vmatpush1.msra.mxu0 0.0
      %1574 = vmatprep.subr.mxu0 0.0
      %1575 = vmatpush1.msra.mxu0 0.0
      %1576 = vmatprep.mubr.f32.mxu0 0.0
      %1577 = vmatmul.mubr.f32.gmra.mrb[0].mxu0 %v1508
      %v1578 = vpop.f32.mrb[0].mxu0
      %v1579 = vadd.f32 0.0, %v1578
      %v1580 = vpop.f32.mrb[0].mxu0
      %1581 = vdwg.mxu0
      %v1582 = vadd.f32 %v1502, %v1579
      %s1583 = scalar_lea.vmem %s6, 16
      %v1584 = vld [vmem:[%s1583] sm:$0xf]
      %1585 = vrot.lane.b32.xlu0 %v1266, 117
      %v1586 = vpop.permute.xlu0 %1585
      %v1588 = vsel %vm472, %v1584, 0
      %v1590 = vsel %vm476, %v1586, 0
      %1592 = vmatprep.subr.mxu0 0.0
      %1593 = vmatpush1.msra.mxu0 %v1590
      %1594 = vmatprep.subr.mxu0 0.0
      %1595 = vmatpush1.msra.mxu0 0.0
      %1596 = vmatprep.subr.mxu0 0.0
      %1597 = vmatpush1.msra.mxu0 0.0
      %1598 = vmatprep.subr.mxu0 0.0
      %1599 = vmatpush1.msra.mxu0 0.0
      %1600 = vmatprep.subr.mxu0 0.0
      %1601 = vmatpush1.msra.mxu0 0.0
      %1602 = vmatprep.subr.mxu0 0.0
      %1603 = vmatpush1.msra.mxu0 0.0
      %1604 = vmatprep.subr.mxu0 0.0
      %1605 = vmatpush1.msra.mxu0 0.0
      %1606 = vmatprep.subr.mxu0 0.0
      %1607 = vmatpush1.msra.mxu0 0.0
      %1608 = vmatprep.subr.mxu0 0.0
      %1609 = vmatpush1.msra.mxu0 0.0
      %1610 = vmatprep.subr.mxu0 0.0
      %1611 = vmatpush1.msra.mxu0 0.0
      %1612 = vmatprep.subr.mxu0 0.0
      %1613 = vmatpush1.msra.mxu0 0.0
      %1614 = vmatprep.subr.mxu0 0.0
      %1615 = vmatpush1.msra.mxu0 0.0
      %1616 = vmatprep.subr.mxu0 0.0
      %1617 = vmatpush1.msra.mxu0 0.0
      %1618 = vmatprep.subr.mxu0 0.0
      %1619 = vmatpush1.msra.mxu0 0.0
      %1620 = vmatprep.subr.mxu0 0.0
      %1621 = vmatpush1.msra.mxu0 0.0
      %1622 = vmatprep.subr.mxu0 0.0
      %1623 = vmatpush1.msra.mxu0 0.0
      %1624 = vmatprep.subr.mxu0 0.0
      %1625 = vmatpush1.msra.mxu0 0.0
      %1626 = vmatprep.subr.mxu0 0.0
      %1627 = vmatpush1.msra.mxu0 0.0
      %1628 = vmatprep.subr.mxu0 0.0
      %1629 = vmatpush1.msra.mxu0 0.0
      %1630 = vmatprep.subr.mxu0 0.0
      %1631 = vmatpush1.msra.mxu0 0.0
      %1632 = vmatprep.subr.mxu0 0.0
      %1633 = vmatpush1.msra.mxu0 0.0
      %1634 = vmatprep.subr.mxu0 0.0
      %1635 = vmatpush1.msra.mxu0 0.0
      %1636 = vmatprep.subr.mxu0 0.0
      %1637 = vmatpush1.msra.mxu0 0.0
      %1638 = vmatprep.subr.mxu0 0.0
      %1639 = vmatpush1.msra.mxu0 0.0
      %1640 = vmatprep.subr.mxu0 0.0
      %1641 = vmatpush1.msra.mxu0 0.0
      %1642 = vmatprep.subr.mxu0 0.0
      %1643 = vmatpush1.msra.mxu0 0.0
      %1644 = vmatprep.subr.mxu0 0.0
      %1645 = vmatpush1.msra.mxu0 0.0
      %1646 = vmatprep.subr.mxu0 0.0
      %1647 = vmatpush1.msra.mxu0 0.0
      %1648 = vmatprep.subr.mxu0 0.0
      %1649 = vmatpush1.msra.mxu0 0.0
      %1650 = vmatprep.subr.mxu0 0.0
      %1651 = vmatpush1.msra.mxu0 0.0
      %1652 = vmatprep.subr.mxu0 0.0
      %1653 = vmatpush1.msra.mxu0 0.0
      %1654 = vmatprep.subr.mxu0 0.0
      %1655 = vmatpush1.msra.mxu0 0.0
      %1656 = vmatprep.mubr.f32.mxu0 0.0
      %1657 = vmatmul.mubr.f32.gmra.mrb[0].mxu0 %v1588
      %v1658 = vpop.f32.mrb[0].mxu0
      %v1659 = vadd.f32 0.0, %v1658
      %v1660 = vpop.f32.mrb[0].mxu0
      %1661 = vdwg.mxu0
      %v1662 = vadd.f32 %v1582, %v1659
      %s1663 = scalar_lea.vmem %s6, 20
      %v1664 = vld [vmem:[%s1663] sm:$0xf]
      %1665 = vrot.lane.b32.xlu0 %v1266, 116
      %v1666 = vpop.permute.xlu0 %1665
      %v1668 = vsel %vm472, %v1664, 0
      %v1670 = vsel %vm476, %v1666, 0
      %1672 = vmatprep.subr.mxu0 0.0
      %1673 = vmatpush1.msra.mxu0 %v1670
      %1674 = vmatprep.subr.mxu0 0.0
      %1675 = vmatpush1.msra.mxu0 0.0
      %1676 = vmatprep.subr.mxu0 0.0
      %1677 = vmatpush1.msra.mxu0 0.0
      %1678 = vmatprep.subr.mxu0 0.0
      %1679 = vmatpush1.msra.mxu0 0.0
      %1680 = vmatprep.subr.mxu0 0.0
      %1681 = vmatpush1.msra.mxu0 0.0
      %1682 = vmatprep.subr.mxu0 0.0
      %1683 = vmatpush1.msra.mxu0 0.0
      %1684 = vmatprep.subr.mxu0 0.0
      %1685 = vmatpush1.msra.mxu0 0.0
      %1686 = vmatprep.subr.mxu0 0.0
      %1687 = vmatpush1.msra.mxu0 0.0
      %1688 = vmatprep.subr.mxu0 0.0
      %1689 = vmatpush1.msra.mxu0 0.0
      %1690 = vmatprep.subr.mxu0 0.0
      %1691 = vmatpush1.msra.mxu0 0.0
      %1692 = vmatprep.subr.mxu0 0.0
      %1693 = vmatpush1.msra.mxu0 0.0
      %1694 = vmatprep.subr.mxu0 0.0
      %1695 = vmatpush1.msra.mxu0 0.0
      %1696 = vmatprep.subr.mxu0 0.0
      %1697 = vmatpush1.msra.mxu0 0.0
      %1698 = vmatprep.subr.mxu0 0.0
      %1699 = vmatpush1.msra.mxu0 0.0
      %1700 = vmatprep.subr.mxu0 0.0
      %1701 = vmatpush1.msra.mxu0 0.0
      %1702 = vmatprep.subr.mxu0 0.0
      %1703 = vmatpush1.msra.mxu0 0.0
      %1704 = vmatprep.subr.mxu0 0.0
      %1705 = vmatpush1.msra.mxu0 0.0
      %1706 = vmatprep.subr.mxu0 0.0
      %1707 = vmatpush1.msra.mxu0 0.0
      %1708 = vmatprep.subr.mxu0 0.0
      %1709 = vmatpush1.msra.mxu0 0.0
      %1710 = vmatprep.subr.mxu0 0.0
      %1711 = vmatpush1.msra.mxu0 0.0
      %1712 = vmatprep.subr.mxu0 0.0
      %1713 = vmatpush1.msra.mxu0 0.0
      %1714 = vmatprep.subr.mxu0 0.0
      %1715 = vmatpush1.msra.mxu0 0.0
      %1716 = vmatprep.subr.mxu0 0.0
      %1717 = vmatpush1.msra.mxu0 0.0
      %1718 = vmatprep.subr.mxu0 0.0
      %1719 = vmatpush1.msra.mxu0 0.0
      %1720 = vmatprep.subr.mxu0 0.0
      %1721 = vmatpush1.msra.mxu0 0.0
      %1722 = vmatprep.subr.mxu0 0.0
      %1723 = vmatpush1.msra.mxu0 0.0
      %1724 = vmatprep.subr.mxu0 0.0
      %1725 = vmatpush1.msra.mxu0 0.0
      %1726 = vmatprep.subr.mxu0 0.0
      %1727 = vmatpush1.msra.mxu0 0.0
      %1728 = vmatprep.subr.mxu0 0.0
      %1729 = vmatpush1.msra.mxu0 0.0
      %1730 = vmatprep.subr.mxu0 0.0
      %1731 = vmatpush1.msra.mxu0 0.0
      %1732 = vmatprep.subr.mxu0 0.0
      %1733 = vmatpush1.msra.mxu0 0.0
      %1734 = vmatprep.subr.mxu0 0.0
      %1735 = vmatpush1.msra.mxu0 0.0
      %1736 = vmatprep.mubr.f32.mxu0 0.0
      %1737 = vmatmul.mubr.f32.gmra.mrb[0].mxu0 %v1668
      %v1738 = vpop.f32.mrb[0].mxu0
      %v1739 = vadd.f32 0.0, %v1738
      %v1740 = vpop.f32.mrb[0].mxu0
      %1741 = vdwg.mxu0
      %v1742 = vadd.f32 %v1662, %v1739
      %s1743 = scalar_lea.vmem %s6, 24
      %v1744 = vld [vmem:[%s1743] sm:$0xf]
      %1745 = vrot.lane.b32.xlu0 %v1266, 108
      %v1746 = vpop.permute.xlu0 %1745
      %v1748 = vsel %vm472, %v1744, 0
      %v1750 = vsel %vm476, %v1746, 0
      %1752 = vmatprep.subr.mxu0 0.0
      %1753 = vmatpush1.msra.mxu0 %v1750
      %1754 = vmatprep.subr.mxu0 0.0
      %1755 = vmatpush1.msra.mxu0 0.0
      %1756 = vmatprep.subr.mxu0 0.0
      %1757 = vmatpush1.msra.mxu0 0.0
      %1758 = vmatprep.subr.mxu0 0.0
      %1759 = vmatpush1.msra.mxu0 0.0
      %1760 = vmatprep.subr.mxu0 0.0
      %1761 = vmatpush1.msra.mxu0 0.0
      %1762 = vmatprep.subr.mxu0 0.0
      %1763 = vmatpush1.msra.mxu0 0.0
      %1764 = vmatprep.subr.mxu0 0.0
      %1765 = vmatpush1.msra.mxu0 0.0
      %1766 = vmatprep.subr.mxu0 0.0
      %1767 = vmatpush1.msra.mxu0 0.0
      %1768 = vmatprep.subr.mxu0 0.0
      %1769 = vmatpush1.msra.mxu0 0.0
      %1770 = vmatprep.subr.mxu0 0.0
      %1771 = vmatpush1.msra.mxu0 0.0
      %1772 = vmatprep.subr.mxu0 0.0
      %1773 = vmatpush1.msra.mxu0 0.0
      %1774 = vmatprep.subr.mxu0 0.0
      %1775 = vmatpush1.msra.mxu0 0.0
      %1776 = vmatprep.subr.mxu0 0.0
      %1777 = vmatpush1.msra.mxu0 0.0
      %1778 = vmatprep.subr.mxu0 0.0
      %1779 = vmatpush1.msra.mxu0 0.0
      %1780 = vmatprep.subr.mxu0 0.0
      %1781 = vmatpush1.msra.mxu0 0.0
      %1782 = vmatprep.subr.mxu0 0.0
      %1783 = vmatpush1.msra.mxu0 0.0
      %1784 = vmatprep.subr.mxu0 0.0
      %1785 = vmatpush1.msra.mxu0 0.0
      %1786 = vmatprep.subr.mxu0 0.0
      %1787 = vmatpush1.msra.mxu0 0.0
      %1788 = vmatprep.subr.mxu0 0.0
      %1789 = vmatpush1.msra.mxu0 0.0
      %1790 = vmatprep.subr.mxu0 0.0
      %1791 = vmatpush1.msra.mxu0 0.0
      %1792 = vmatprep.subr.mxu0 0.0
      %1793 = vmatpush1.msra.mxu0 0.0
      %1794 = vmatprep.subr.mxu0 0.0
      %1795 = vmatpush1.msra.mxu0 0.0
      %1796 = vmatprep.subr.mxu0 0.0
      %1797 = vmatpush1.msra.mxu0 0.0
      %1798 = vmatprep.subr.mxu0 0.0
      %1799 = vmatpush1.msra.mxu0 0.0
      %1800 = vmatprep.subr.mxu0 0.0
      %1801 = vmatpush1.msra.mxu0 0.0
      %1802 = vmatprep.subr.mxu0 0.0
      %1803 = vmatpush1.msra.mxu0 0.0
      %1804 = vmatprep.subr.mxu0 0.0
      %1805 = vmatpush1.msra.mxu0 0.0
      %1806 = vmatprep.subr.mxu0 0.0
      %1807 = vmatpush1.msra.mxu0 0.0
      %1808 = vmatprep.subr.mxu0 0.0
      %1809 = vmatpush1.msra.mxu0 0.0
      %1810 = vmatprep.subr.mxu0 0.0
      %1811 = vmatpush1.msra.mxu0 0.0
      %1812 = vmatprep.subr.mxu0 0.0
      %1813 = vmatpush1.msra.mxu0 0.0
      %1814 = vmatprep.subr.mxu0 0.0
      %1815 = vmatpush1.msra.mxu0 0.0
      %1816 = vmatprep.mubr.f32.mxu0 0.0
      %1817 = vmatmul.mubr.f32.gmra.mrb[0].mxu0 %v1748
      %v1818 = vpop.f32.mrb[0].mxu0
      %v1819 = vadd.f32 0.0, %v1818
      %v1820 = vpop.f32.mrb[0].mxu0
      %1821 = vdwg.mxu0
      %v1822 = vadd.f32 %v1742, %v1819
      %s1823 = scalar_lea.vmem %s6, 28
      %v1824 = vld [vmem:[%s1823] sm:$0xf]
      %1825 = vrot.lane.b32.xlu0 %v1266, 107
      %v1826 = vpop.permute.xlu0 %1825
      %v1828 = vsel %vm472, %v1824, 0
      %v1830 = vsel %vm476, %v1826, 0
      %1832 = vmatprep.subr.mxu0 0.0
      %1833 = vmatpush1.msra.mxu0 %v1830
      %1834 = vmatprep.subr.mxu0 0.0
      %1835 = vmatpush1.msra.mxu0 0.0
      %1836 = vmatprep.subr.mxu0 0.0
      %1837 = vmatpush1.msra.mxu0 0.0
      %1838 = vmatprep.subr.mxu0 0.0
      %1839 = vmatpush1.msra.mxu0 0.0
      %1840 = vmatprep.subr.mxu0 0.0
      %1841 = vmatpush1.msra.mxu0 0.0
      %1842 = vmatprep.subr.mxu0 0.0
      %1843 = vmatpush1.msra.mxu0 0.0
      %1844 = vmatprep.subr.mxu0 0.0
      %1845 = vmatpush1.msra.mxu0 0.0
      %1846 = vmatprep.subr.mxu0 0.0
      %1847 = vmatpush1.msra.mxu0 0.0
      %1848 = vmatprep.subr.mxu0 0.0
      %1849 = vmatpush1.msra.mxu0 0.0
      %1850 = vmatprep.subr.mxu0 0.0
      %1851 = vmatpush1.msra.mxu0 0.0
      %1852 = vmatprep.subr.mxu0 0.0
      %1853 = vmatpush1.msra.mxu0 0.0
      %1854 = vmatprep.subr.mxu0 0.0
      %1855 = vmatpush1.msra.mxu0 0.0
      %1856 = vmatprep.subr.mxu0 0.0
      %1857 = vmatpush1.msra.mxu0 0.0
      %1858 = vmatprep.subr.mxu0 0.0
      %1859 = vmatpush1.msra.mxu0 0.0
      %1860 = vmatprep.subr.mxu0 0.0
      %1861 = vmatpush1.msra.mxu0 0.0
      %1862 = vmatprep.subr.mxu0 0.0
      %1863 = vmatpush1.msra.mxu0 0.0
      %1864 = vmatprep.subr.mxu0 0.0
      %1865 = vmatpush1.msra.mxu0 0.0
      %1866 = vmatprep.subr.mxu0 0.0
      %1867 = vmatpush1.msra.mxu0 0.0
      %1868 = vmatprep.subr.mxu0 0.0
      %1869 = vmatpush1.msra.mxu0 0.0
      %1870 = vmatprep.subr.mxu0 0.0
      %1871 = vmatpush1.msra.mxu0 0.0
      %1872 = vmatprep.subr.mxu0 0.0
      %1873 = vmatpush1.msra.mxu0 0.0
      %1874 = vmatprep.subr.mxu0 0.0
      %1875 = vmatpush1.msra.mxu0 0.0
      %1876 = vmatprep.subr.mxu0 0.0
      %1877 = vmatpush1.msra.mxu0 0.0
      %1878 = vmatprep.subr.mxu0 0.0
      %1879 = vmatpush1.msra.mxu0 0.0
      %1880 = vmatprep.subr.mxu0 0.0
      %1881 = vmatpush1.msra.mxu0 0.0
      %1882 = vmatprep.subr.mxu0 0.0
      %1883 = vmatpush1.msra.mxu0 0.0
      %1884 = vmatprep.subr.mxu0 0.0
      %1885 = vmatpush1.msra.mxu0 0.0
      %1886 = vmatprep.subr.mxu0 0.0
      %1887 = vmatpush1.msra.mxu0 0.0
      %1888 = vmatprep.subr.mxu0 0.0
      %1889 = vmatpush1.msra.mxu0 0.0
      %1890 = vmatprep.subr.mxu0 0.0
      %1891 = vmatpush1.msra.mxu0 0.0
      %1892 = vmatprep.subr.mxu0 0.0
      %1893 = vmatpush1.msra.mxu0 0.0
      %1894 = vmatprep.subr.mxu0 0.0
      %1895 = vmatpush1.msra.mxu0 0.0
      %1896 = vmatprep.mubr.f32.mxu0 0.0
      %1897 = vmatmul.mubr.f32.gmra.mrb[0].mxu0 %v1828
      %v1898 = vpop.f32.mrb[0].mxu0
      %v1899 = vadd.f32 0.0, %v1898
      %v1900 = vpop.f32.mrb[0].mxu0
      %1901 = vdwg.mxu0
      %v1902 = vadd.f32 %v1822, %v1899
      %s1903 = scalar_lea.vmem %s6, 32
      %v1904 = vld [vmem:[%s1903] sm:$0xf]
      %1905 = vrot.lane.b32.xlu0 %v1266, 106
      %v1906 = vpop.permute.xlu0 %1905
      %v1908 = vsel %vm472, %v1904, 0
      %v1910 = vsel %vm476, %v1906, 0
      %1912 = vmatprep.subr.mxu0 0.0
      %1913 = vmatpush1.msra.mxu0 %v1910
      %1914 = vmatprep.subr.mxu0 0.0
      %1915 = vmatpush1.msra.mxu0 0.0
      %1916 = vmatprep.subr.mxu0 0.0
      %1917 = vmatpush1.msra.mxu0 0.0
      %1918 = vmatprep.subr.mxu0 0.0
      %1919 = vmatpush1.msra.mxu0 0.0
      %1920 = vmatprep.subr.mxu0 0.0
      %1921 = vmatpush1.msra.mxu0 0.0
      %1922 = vmatprep.subr.mxu0 0.0
      %1923 = vmatpush1.msra.mxu0 0.0
      %1924 = vmatprep.subr.mxu0 0.0
      %1925 = vmatpush1.msra.mxu0 0.0
      %1926 = vmatprep.subr.mxu0 0.0
      %1927 = vmatpush1.msra.mxu0 0.0
      %1928 = vmatprep.subr.mxu0 0.0
      %1929 = vmatpush1.msra.mxu0 0.0
      %1930 = vmatprep.subr.mxu0 0.0
      %1931 = vmatpush1.msra.mxu0 0.0
      %1932 = vmatprep.subr.mxu0 0.0
      %1933 = vmatpush1.msra.mxu0 0.0
      %1934 = vmatprep.subr.mxu0 0.0
      %1935 = vmatpush1.msra.mxu0 0.0
      %1936 = vmatprep.subr.mxu0 0.0
      %1937 = vmatpush1.msra.mxu0 0.0
      %1938 = vmatprep.subr.mxu0 0.0
      %1939 = vmatpush1.msra.mxu0 0.0
      %1940 = vmatprep.subr.mxu0 0.0
      %1941 = vmatpush1.msra.mxu0 0.0
      %1942 = vmatprep.subr.mxu0 0.0
      %1943 = vmatpush1.msra.mxu0 0.0
      %1944 = vmatprep.subr.mxu0 0.0
      %1945 = vmatpush1.msra.mxu0 0.0
      %1946 = vmatprep.subr.mxu0 0.0
      %1947 = vmatpush1.msra.mxu0 0.0
      %1948 = vmatprep.subr.mxu0 0.0
      %1949 = vmatpush1.msra.mxu0 0.0
      %1950 = vmatprep.subr.mxu0 0.0
      %1951 = vmatpush1.msra.mxu0 0.0
      %1952 = vmatprep.subr.mxu0 0.0
      %1953 = vmatpush1.msra.mxu0 0.0
      %1954 = vmatprep.subr.mxu0 0.0
      %1955 = vmatpush1.msra.mxu0 0.0
      %1956 = vmatprep.subr.mxu0 0.0
      %1957 = vmatpush1.msra.mxu0 0.0
      %1958 = vmatprep.subr.mxu0 0.0
      %1959 = vmatpush1.msra.mxu0 0.0
      %1960 = vmatprep.subr.mxu0 0.0
      %1961 = vmatpush1.msra.mxu0 0.0
      %1962 = vmatprep.subr.mxu0 0.0
      %1963 = vmatpush1.msra.mxu0 0.0
      %1964 = vmatprep.subr.mxu0 0.0
      %1965 = vmatpush1.msra.mxu0 0.0
      %1966 = vmatprep.subr.mxu0 0.0
      %1967 = vmatpush1.msra.mxu0 0.0
      %1968 = vmatprep.subr.mxu0 0.0
      %1969 = vmatpush1.msra.mxu0 0.0
      %1970 = vmatprep.subr.mxu0 0.0
      %1971 = vmatpush1.msra.mxu0 0.0
      %1972 = vmatprep.subr.mxu0 0.0
      %1973 = vmatpush1.msra.mxu0 0.0
      %1974 = vmatprep.subr.mxu0 0.0
      %1975 = vmatpush1.msra.mxu0 0.0
      %1976 = vmatprep.mubr.f32.mxu0 0.0
      %1977 = vmatmul.mubr.f32.gmra.mrb[0].mxu0 %v1908
      %v1978 = vpop.f32.mrb[0].mxu0
      %v1979 = vadd.f32 0.0, %v1978
      %v1980 = vpop.f32.mrb[0].mxu0
      %1981 = vdwg.mxu0
      %v1982 = vadd.f32 %v1902, %v1979
      %v1983 = vmul.f32 %v1982, %v1188
      %v1984 = vsel %vm1191, %v1983, 0.0
      %1985 = vadd.xlane.f32.xlu0 %v1984
      %v1986 = vpop.xlane.xlu0 %1985
      %v1987 = vmul.f32 %v1986, 0.015625
      %v1988 = vmul.f32 %v1983, %v1982
      %v1989 = vsel %vm1191, %v1988, 0.0
      %1990 = vadd.xlane.f32.xlu0 %v1989
      %v1991 = vpop.xlane.xlu0 %1990
      %v1992 = vmul.f32 %v1991, 0.015625
      %v1993 = vmul.f32 %v1987, %v1987
      %v1994 = vsub.f32 %v1992, %v1993
      %v1995 = vmax.f32 %v1994, 0.0
      %v1996 = vsub.f32 %v1982, %v1987
      %v1997 = vadd.f32 %v1995, 1e-05
      %v1998 = vrsqrt.pop %v1997
      %v1999 = vmul.f32 %v1996, %v1998
      %v2000 = vld [vmem:[#allocation2] sm:$0xf]
      %2002 = vrot.lane.b32.xlu0 %v1999, 11
      %v2003 = vpop.permute.xlu0 %2002
      %v2005 = vadd.f32 %v2000, %v2003
      %v2006 = vmul.f32 %v2005, %v1214
      %2007 = vst.msk [vmem:[%s346 + $0x4] sm:$0xf] %vm1217, %v2006
      %v2008 = vld [vmem:[#allocation2] sm:$0xf]
      %vm2009 = vcmp.gt.f32.partialorder %v2008, 0.0
      %v2010 = vmul.f32 %v2008, 0.01
      %v2011 = vsel %vm2009, %v2008, %v2010
      %v2012 = vld [vmem:[%s7] sm:$0xf]
      %s2013 = scalar_lea.vmem %s7, 4
      %v2014 = vld [vmem:[%s2013] sm:$0xf]
      %2016 = vrot.lane.b32.xlu0 %v2011, 127
      %v2017 = vpop.permute.xlu0 %2016
      %v2019 = vsel %vm472, %v2014, 0
      %v2021 = vsel %vm476, %v2017, 0
      %2023 = vmatprep.subr.mxu0 0.0
      %2024 = vmatpush1.msra.mxu0 %v2021
      %2025 = vmatprep.subr.mxu0 0.0
      %2026 = vmatpush1.msra.mxu0 0.0
      %2027 = vmatprep.subr.mxu0 0.0
      %2028 = vmatpush1.msra.mxu0 0.0
      %2029 = vmatprep.subr.mxu0 0.0
      %2030 = vmatpush1.msra.mxu0 0.0
      %2031 = vmatprep.subr.mxu0 0.0
      %2032 = vmatpush1.msra.mxu0 0.0
      %2033 = vmatprep.subr.mxu0 0.0
      %2034 = vmatpush1.msra.mxu0 0.0
      %2035 = vmatprep.subr.mxu0 0.0
      %2036 = vmatpush1.msra.mxu0 0.0
      %2037 = vmatprep.subr.mxu0 0.0
      %2038 = vmatpush1.msra.mxu0 0.0
      %2039 = vmatprep.subr.mxu0 0.0
      %2040 = vmatpush1.msra.mxu0 0.0
      %2041 = vmatprep.subr.mxu0 0.0
      %2042 = vmatpush1.msra.mxu0 0.0
      %2043 = vmatprep.subr.mxu0 0.0
      %2044 = vmatpush1.msra.mxu0 0.0
      %2045 = vmatprep.subr.mxu0 0.0
      %2046 = vmatpush1.msra.mxu0 0.0
      %2047 = vmatprep.subr.mxu0 0.0
      %2048 = vmatpush1.msra.mxu0 0.0
      %2049 = vmatprep.subr.mxu0 0.0
      %2050 = vmatpush1.msra.mxu0 0.0
      %2051 = vmatprep.subr.mxu0 0.0
      %2052 = vmatpush1.msra.mxu0 0.0
      %2053 = vmatprep.subr.mxu0 0.0
      %2054 = vmatpush1.msra.mxu0 0.0
      %2055 = vmatprep.subr.mxu0 0.0
      %2056 = vmatpush1.msra.mxu0 0.0
      %2057 = vmatprep.subr.mxu0 0.0
      %2058 = vmatpush1.msra.mxu0 0.0
      %2059 = vmatprep.subr.mxu0 0.0
      %2060 = vmatpush1.msra.mxu0 0.0
      %2061 = vmatprep.subr.mxu0 0.0
      %2062 = vmatpush1.msra.mxu0 0.0
      %2063 = vmatprep.subr.mxu0 0.0
      %2064 = vmatpush1.msra.mxu0 0.0
      %2065 = vmatprep.subr.mxu0 0.0
      %2066 = vmatpush1.msra.mxu0 0.0
      %2067 = vmatprep.subr.mxu0 0.0
      %2068 = vmatpush1.msra.mxu0 0.0
      %2069 = vmatprep.subr.mxu0 0.0
      %2070 = vmatpush1.msra.mxu0 0.0
      %2071 = vmatprep.subr.mxu0 0.0
      %2072 = vmatpush1.msra.mxu0 0.0
      %2073 = vmatprep.subr.mxu0 0.0
      %2074 = vmatpush1.msra.mxu0 0.0
      %2075 = vmatprep.subr.mxu0 0.0
      %2076 = vmatpush1.msra.mxu0 0.0
      %2077 = vmatprep.subr.mxu0 0.0
      %2078 = vmatpush1.msra.mxu0 0.0
      %2079 = vmatprep.subr.mxu0 0.0
      %2080 = vmatpush1.msra.mxu0 0.0
      %2081 = vmatprep.subr.mxu0 0.0
      %2082 = vmatpush1.msra.mxu0 0.0
      %2083 = vmatprep.subr.mxu0 0.0
      %2084 = vmatpush1.msra.mxu0 0.0
      %2085 = vmatprep.subr.mxu0 0.0
      %2086 = vmatpush1.msra.mxu0 0.0
      %2087 = vmatprep.mubr.f32.mxu0 0.0
      %2088 = vmatmul.mubr.f32.gmra.mrb[0].mxu0 %v2019
      %v2089 = vpop.f32.mrb[0].mxu0
      %v2090 = vadd.f32 0.0, %v2089
      %v2091 = vpop.f32.mrb[0].mxu0
      %2092 = vdwg.mxu0
      %v2094 = vsel %vm472, %v2012, 0
      %v2096 = vsel %vm476, %v2011, 0
      %2098 = vmatprep.subr.mxu0 0.0
      %2099 = vmatpush1.msra.mxu0 %v2096
      %2100 = vmatprep.subr.mxu0 0.0
      %2101 = vmatpush1.msra.mxu0 0.0
      %2102 = vmatprep.subr.mxu0 0.0
      %2103 = vmatpush1.msra.mxu0 0.0
      %2104 = vmatprep.subr.mxu0 0.0
      %2105 = vmatpush1.msra.mxu0 0.0
      %2106 = vmatprep.subr.mxu0 0.0
      %2107 = vmatpush1.msra.mxu0 0.0
      %2108 = vmatprep.subr.mxu0 0.0
      %2109 = vmatpush1.msra.mxu0 0.0
      %2110 = vmatprep.subr.mxu0 0.0
      %2111 = vmatpush1.msra.mxu0 0.0
      %2112 = vmatprep.subr.mxu0 0.0
      %2113 = vmatpush1.msra.mxu0 0.0
      %2114 = vmatprep.subr.mxu0 0.0
      %2115 = vmatpush1.msra.mxu0 0.0
      %2116 = vmatprep.subr.mxu0 0.0
      %2117 = vmatpush1.msra.mxu0 0.0
      %2118 = vmatprep.subr.mxu0 0.0
      %2119 = vmatpush1.msra.mxu0 0.0
      %2120 = vmatprep.subr.mxu0 0.0
      %2121 = vmatpush1.msra.mxu0 0.0
      %2122 = vmatprep.subr.mxu0 0.0
      %2123 = vmatpush1.msra.mxu0 0.0
      %2124 = vmatprep.subr.mxu0 0.0
      %2125 = vmatpush1.msra.mxu0 0.0
      %2126 = vmatprep.subr.mxu0 0.0
      %2127 = vmatpush1.msra.mxu0 0.0
      %2128 = vmatprep.subr.mxu0 0.0
      %2129 = vmatpush1.msra.mxu0 0.0
      %2130 = vmatprep.subr.mxu0 0.0
      %2131 = vmatpush1.msra.mxu0 0.0
      %2132 = vmatprep.subr.mxu0 0.0
      %2133 = vmatpush1.msra.mxu0 0.0
      %2134 = vmatprep.subr.mxu0 0.0
      %2135 = vmatpush1.msra.mxu0 0.0
      %2136 = vmatprep.subr.mxu0 0.0
      %2137 = vmatpush1.msra.mxu0 0.0
      %2138 = vmatprep.subr.mxu0 0.0
      %2139 = vmatpush1.msra.mxu0 0.0
      %2140 = vmatprep.subr.mxu0 0.0
      %2141 = vmatpush1.msra.mxu0 0.0
      %2142 = vmatprep.subr.mxu0 0.0
      %2143 = vmatpush1.msra.mxu0 0.0
      %2144 = vmatprep.subr.mxu0 0.0
      %2145 = vmatpush1.msra.mxu0 0.0
      %2146 = vmatprep.subr.mxu0 0.0
      %2147 = vmatpush1.msra.mxu0 0.0
      %2148 = vmatprep.subr.mxu0 0.0
      %2149 = vmatpush1.msra.mxu0 0.0
      %2150 = vmatprep.subr.mxu0 0.0
      %2151 = vmatpush1.msra.mxu0 0.0
      %2152 = vmatprep.subr.mxu0 0.0
      %2153 = vmatpush1.msra.mxu0 0.0
      %2154 = vmatprep.subr.mxu0 0.0
      %2155 = vmatpush1.msra.mxu0 0.0
      %2156 = vmatprep.subr.mxu0 0.0
      %2157 = vmatpush1.msra.mxu0 0.0
      %2158 = vmatprep.subr.mxu0 0.0
      %2159 = vmatpush1.msra.mxu0 0.0
      %2160 = vmatprep.subr.mxu0 0.0
      %2161 = vmatpush1.msra.mxu0 0.0
      %2162 = vmatprep.mubr.f32.mxu0 0.0
      %2163 = vmatmul.mubr.f32.gmra.mrb[0].mxu0 %v2094
      %v2164 = vpop.f32.mrb[0].mxu0
      %v2165 = vadd.f32 %v2090, %v2164
      %v2166 = vpop.f32.mrb[0].mxu0
      %2167 = vdwg.mxu0
      %s2168 = scalar_lea.vmem %s7, 8
      %v2169 = vld [vmem:[%s2168] sm:$0xf]
      %2170 = vrot.lane.b32.xlu0 %v2011, 126
      %v2171 = vpop.permute.xlu0 %2170
      %v2173 = vsel %vm472, %v2169, 0
      %v2175 = vsel %vm476, %v2171, 0
      %2177 = vmatprep.subr.mxu0 0.0
      %2178 = vmatpush1.msra.mxu0 %v2175
      %2179 = vmatprep.subr.mxu0 0.0
      %2180 = vmatpush1.msra.mxu0 0.0
      %2181 = vmatprep.subr.mxu0 0.0
      %2182 = vmatpush1.msra.mxu0 0.0
      %2183 = vmatprep.subr.mxu0 0.0
      %2184 = vmatpush1.msra.mxu0 0.0
      %2185 = vmatprep.subr.mxu0 0.0
      %2186 = vmatpush1.msra.mxu0 0.0
      %2187 = vmatprep.subr.mxu0 0.0
      %2188 = vmatpush1.msra.mxu0 0.0
      %2189 = vmatprep.subr.mxu0 0.0
      %2190 = vmatpush1.msra.mxu0 0.0
      %2191 = vmatprep.subr.mxu0 0.0
      %2192 = vmatpush1.msra.mxu0 0.0
      %2193 = vmatprep.subr.mxu0 0.0
      %2194 = vmatpush1.msra.mxu0 0.0
      %2195 = vmatprep.subr.mxu0 0.0
      %2196 = vmatpush1.msra.mxu0 0.0
      %2197 = vmatprep.subr.mxu0 0.0
      %2198 = vmatpush1.msra.mxu0 0.0
      %2199 = vmatprep.subr.mxu0 0.0
      %2200 = vmatpush1.msra.mxu0 0.0
      %2201 = vmatprep.subr.mxu0 0.0
      %2202 = vmatpush1.msra.mxu0 0.0
      %2203 = vmatprep.subr.mxu0 0.0
      %2204 = vmatpush1.msra.mxu0 0.0
      %2205 = vmatprep.subr.mxu0 0.0
      %2206 = vmatpush1.msra.mxu0 0.0
      %2207 = vmatprep.subr.mxu0 0.0
      %2208 = vmatpush1.msra.mxu0 0.0
      %2209 = vmatprep.subr.mxu0 0.0
      %2210 = vmatpush1.msra.mxu0 0.0
      %2211 = vmatprep.subr.mxu0 0.0
      %2212 = vmatpush1.msra.mxu0 0.0
      %2213 = vmatprep.subr.mxu0 0.0
      %2214 = vmatpush1.msra.mxu0 0.0
      %2215 = vmatprep.subr.mxu0 0.0
      %2216 = vmatpush1.msra.mxu0 0.0
      %2217 = vmatprep.subr.mxu0 0.0
      %2218 = vmatpush1.msra.mxu0 0.0
      %2219 = vmatprep.subr.mxu0 0.0
      %2220 = vmatpush1.msra.mxu0 0.0
      %2221 = vmatprep.subr.mxu0 0.0
      %2222 = vmatpush1.msra.mxu0 0.0
      %2223 = vmatprep.subr.mxu0 0.0
      %2224 = vmatpush1.msra.mxu0 0.0
      %2225 = vmatprep.subr.mxu0 0.0
      %2226 = vmatpush1.msra.mxu0 0.0
      %2227 = vmatprep.subr.mxu0 0.0
      %2228 = vmatpush1.msra.mxu0 0.0
      %2229 = vmatprep.subr.mxu0 0.0
      %2230 = vmatpush1.msra.mxu0 0.0
      %2231 = vmatprep.subr.mxu0 0.0
      %2232 = vmatpush1.msra.mxu0 0.0
      %2233 = vmatprep.subr.mxu0 0.0
      %2234 = vmatpush1.msra.mxu0 0.0
      %2235 = vmatprep.subr.mxu0 0.0
      %2236 = vmatpush1.msra.mxu0 0.0
      %2237 = vmatprep.subr.mxu0 0.0
      %2238 = vmatpush1.msra.mxu0 0.0
      %2239 = vmatprep.subr.mxu0 0.0
      %2240 = vmatpush1.msra.mxu0 0.0
      %2241 = vmatprep.mubr.f32.mxu0 0.0
      %2242 = vmatmul.mubr.f32.gmra.mrb[0].mxu0 %v2173
      %v2243 = vpop.f32.mrb[0].mxu0
      %v2244 = vadd.f32 0.0, %v2243
      %v2245 = vpop.f32.mrb[0].mxu0
      %2246 = vdwg.mxu0
      %v2247 = vadd.f32 %v2165, %v2244
      %s2248 = scalar_lea.vmem %s7, 12
      %v2249 = vld [vmem:[%s2248] sm:$0xf]
      %2250 = vrot.lane.b32.xlu0 %v2011, 118
      %v2251 = vpop.permute.xlu0 %2250
      %v2253 = vsel %vm472, %v2249, 0
      %v2255 = vsel %vm476, %v2251, 0
      %2257 = vmatprep.subr.mxu0 0.0
      %2258 = vmatpush1.msra.mxu0 %v2255
      %2259 = vmatprep.subr.mxu0 0.0
      %2260 = vmatpush1.msra.mxu0 0.0
      %2261 = vmatprep.subr.mxu0 0.0
      %2262 = vmatpush1.msra.mxu0 0.0
      %2263 = vmatprep.subr.mxu0 0.0
      %2264 = vmatpush1.msra.mxu0 0.0
      %2265 = vmatprep.subr.mxu0 0.0
      %2266 = vmatpush1.msra.mxu0 0.0
      %2267 = vmatprep.subr.mxu0 0.0
      %2268 = vmatpush1.msra.mxu0 0.0
      %2269 = vmatprep.subr.mxu0 0.0
      %2270 = vmatpush1.msra.mxu0 0.0
      %2271 = vmatprep.subr.mxu0 0.0
      %2272 = vmatpush1.msra.mxu0 0.0
      %2273 = vmatprep.subr.mxu0 0.0
      %2274 = vmatpush1.msra.mxu0 0.0
      %2275 = vmatprep.subr.mxu0 0.0
      %2276 = vmatpush1.msra.mxu0 0.0
      %2277 = vmatprep.subr.mxu0 0.0
      %2278 = vmatpush1.msra.mxu0 0.0
      %2279 = vmatprep.subr.mxu0 0.0
      %2280 = vmatpush1.msra.mxu0 0.0
      %2281 = vmatprep.subr.mxu0 0.0
      %2282 = vmatpush1.msra.mxu0 0.0
      %2283 = vmatprep.subr.mxu0 0.0
      %2284 = vmatpush1.msra.mxu0 0.0
      %2285 = vmatprep.subr.mxu0 0.0
      %2286 = vmatpush1.msra.mxu0 0.0
      %2287 = vmatprep.subr.mxu0 0.0
      %2288 = vmatpush1.msra.mxu0 0.0
      %2289 = vmatprep.subr.mxu0 0.0
      %2290 = vmatpush1.msra.mxu0 0.0
      %2291 = vmatprep.subr.mxu0 0.0
      %2292 = vmatpush1.msra.mxu0 0.0
      %2293 = vmatprep.subr.mxu0 0.0
      %2294 = vmatpush1.msra.mxu0 0.0
      %2295 = vmatprep.subr.mxu0 0.0
      %2296 = vmatpush1.msra.mxu0 0.0
      %2297 = vmatprep.subr.mxu0 0.0
      %2298 = vmatpush1.msra.mxu0 0.0
      %2299 = vmatprep.subr.mxu0 0.0
      %2300 = vmatpush1.msra.mxu0 0.0
      %2301 = vmatprep.subr.mxu0 0.0
      %2302 = vmatpush1.msra.mxu0 0.0
      %2303 = vmatprep.subr.mxu0 0.0
      %2304 = vmatpush1.msra.mxu0 0.0
      %2305 = vmatprep.subr.mxu0 0.0
      %2306 = vmatpush1.msra.mxu0 0.0
      %2307 = vmatprep.subr.mxu0 0.0
      %2308 = vmatpush1.msra.mxu0 0.0
      %2309 = vmatprep.subr.mxu0 0.0
      %2310 = vmatpush1.msra.mxu0 0.0
      %2311 = vmatprep.subr.mxu0 0.0
      %2312 = vmatpush1.msra.mxu0 0.0
      %2313 = vmatprep.subr.mxu0 0.0
      %2314 = vmatpush1.msra.mxu0 0.0
      %2315 = vmatprep.subr.mxu0 0.0
      %2316 = vmatpush1.msra.mxu0 0.0
      %2317 = vmatprep.subr.mxu0 0.0
      %2318 = vmatpush1.msra.mxu0 0.0
      %2319 = vmatprep.subr.mxu0 0.0
      %2320 = vmatpush1.msra.mxu0 0.0
      %2321 = vmatprep.mubr.f32.mxu0 0.0
      %2322 = vmatmul.mubr.f32.gmra.mrb[0].mxu0 %v2253
      %v2323 = vpop.f32.mrb[0].mxu0
      %v2324 = vadd.f32 0.0, %v2323
      %v2325 = vpop.f32.mrb[0].mxu0
      %2326 = vdwg.mxu0
      %v2327 = vadd.f32 %v2247, %v2324
      %s2328 = scalar_lea.vmem %s7, 16
      %v2329 = vld [vmem:[%s2328] sm:$0xf]
      %2330 = vrot.lane.b32.xlu0 %v2011, 117
      %v2331 = vpop.permute.xlu0 %2330
      %v2333 = vsel %vm472, %v2329, 0
      %v2335 = vsel %vm476, %v2331, 0
      %2337 = vmatprep.subr.mxu0 0.0
      %2338 = vmatpush1.msra.mxu0 %v2335
      %2339 = vmatprep.subr.mxu0 0.0
      %2340 = vmatpush1.msra.mxu0 0.0
      %2341 = vmatprep.subr.mxu0 0.0
      %2342 = vmatpush1.msra.mxu0 0.0
      %2343 = vmatprep.subr.mxu0 0.0
      %2344 = vmatpush1.msra.mxu0 0.0
      %2345 = vmatprep.subr.mxu0 0.0
      %2346 = vmatpush1.msra.mxu0 0.0
      %2347 = vmatprep.subr.mxu0 0.0
      %2348 = vmatpush1.msra.mxu0 0.0
      %2349 = vmatprep.subr.mxu0 0.0
      %2350 = vmatpush1.msra.mxu0 0.0
      %2351 = vmatprep.subr.mxu0 0.0
      %2352 = vmatpush1.msra.mxu0 0.0
      %2353 = vmatprep.subr.mxu0 0.0
      %2354 = vmatpush1.msra.mxu0 0.0
      %2355 = vmatprep.subr.mxu0 0.0
      %2356 = vmatpush1.msra.mxu0 0.0
      %2357 = vmatprep.subr.mxu0 0.0
      %2358 = vmatpush1.msra.mxu0 0.0
      %2359 = vmatprep.subr.mxu0 0.0
      %2360 = vmatpush1.msra.mxu0 0.0
      %2361 = vmatprep.subr.mxu0 0.0
      %2362 = vmatpush1.msra.mxu0 0.0
      %2363 = vmatprep.subr.mxu0 0.0
      %2364 = vmatpush1.msra.mxu0 0.0
      %2365 = vmatprep.subr.mxu0 0.0
      %2366 = vmatpush1.msra.mxu0 0.0
      %2367 = vmatprep.subr.mxu0 0.0
      %2368 = vmatpush1.msra.mxu0 0.0
      %2369 = vmatprep.subr.mxu0 0.0
      %2370 = vmatpush1.msra.mxu0 0.0
      %2371 = vmatprep.subr.mxu0 0.0
      %2372 = vmatpush1.msra.mxu0 0.0
      %2373 = vmatprep.subr.mxu0 0.0
      %2374 = vmatpush1.msra.mxu0 0.0
      %2375 = vmatprep.subr.mxu0 0.0
      %2376 = vmatpush1.msra.mxu0 0.0
      %2377 = vmatprep.subr.mxu0 0.0
      %2378 = vmatpush1.msra.mxu0 0.0
      %2379 = vmatprep.subr.mxu0 0.0
      %2380 = vmatpush1.msra.mxu0 0.0
      %2381 = vmatprep.subr.mxu0 0.0
      %2382 = vmatpush1.msra.mxu0 0.0
      %2383 = vmatprep.subr.mxu0 0.0
      %2384 = vmatpush1.msra.mxu0 0.0
      %2385 = vmatprep.subr.mxu0 0.0
      %2386 = vmatpush1.msra.mxu0 0.0
      %2387 = vmatprep.subr.mxu0 0.0
      %2388 = vmatpush1.msra.mxu0 0.0
      %2389 = vmatprep.subr.mxu0 0.0
      %2390 = vmatpush1.msra.mxu0 0.0
      %2391 = vmatprep.subr.mxu0 0.0
      %2392 = vmatpush1.msra.mxu0 0.0
      %2393 = vmatprep.subr.mxu0 0.0
      %2394 = vmatpush1.msra.mxu0 0.0
      %2395 = vmatprep.subr.mxu0 0.0
      %2396 = vmatpush1.msra.mxu0 0.0
      %2397 = vmatprep.subr.mxu0 0.0
      %2398 = vmatpush1.msra.mxu0 0.0
      %2399 = vmatprep.subr.mxu0 0.0
      %2400 = vmatpush1.msra.mxu0 0.0
      %2401 = vmatprep.mubr.f32.mxu0 0.0
      %2402 = vmatmul.mubr.f32.gmra.mrb[0].mxu0 %v2333
      %v2403 = vpop.f32.mrb[0].mxu0
      %v2404 = vadd.f32 0.0, %v2403
      %v2405 = vpop.f32.mrb[0].mxu0
      %2406 = vdwg.mxu0
      %v2407 = vadd.f32 %v2327, %v2404
      %s2408 = scalar_lea.vmem %s7, 20
      %v2409 = vld [vmem:[%s2408] sm:$0xf]
      %2410 = vrot.lane.b32.xlu0 %v2011, 116
      %v2411 = vpop.permute.xlu0 %2410
      %v2413 = vsel %vm472, %v2409, 0
      %v2415 = vsel %vm476, %v2411, 0
      %2417 = vmatprep.subr.mxu0 0.0
      %2418 = vmatpush1.msra.mxu0 %v2415
      %2419 = vmatprep.subr.mxu0 0.0
      %2420 = vmatpush1.msra.mxu0 0.0
      %2421 = vmatprep.subr.mxu0 0.0
      %2422 = vmatpush1.msra.mxu0 0.0
      %2423 = vmatprep.subr.mxu0 0.0
      %2424 = vmatpush1.msra.mxu0 0.0
      %2425 = vmatprep.subr.mxu0 0.0
      %2426 = vmatpush1.msra.mxu0 0.0
      %2427 = vmatprep.subr.mxu0 0.0
      %2428 = vmatpush1.msra.mxu0 0.0
      %2429 = vmatprep.subr.mxu0 0.0
      %2430 = vmatpush1.msra.mxu0 0.0
      %2431 = vmatprep.subr.mxu0 0.0
      %2432 = vmatpush1.msra.mxu0 0.0
      %2433 = vmatprep.subr.mxu0 0.0
      %2434 = vmatpush1.msra.mxu0 0.0
      %2435 = vmatprep.subr.mxu0 0.0
      %2436 = vmatpush1.msra.mxu0 0.0
      %2437 = vmatprep.subr.mxu0 0.0
      %2438 = vmatpush1.msra.mxu0 0.0
      %2439 = vmatprep.subr.mxu0 0.0
      %2440 = vmatpush1.msra.mxu0 0.0
      %2441 = vmatprep.subr.mxu0 0.0
      %2442 = vmatpush1.msra.mxu0 0.0
      %2443 = vmatprep.subr.mxu0 0.0
      %2444 = vmatpush1.msra.mxu0 0.0
      %2445 = vmatprep.subr.mxu0 0.0
      %2446 = vmatpush1.msra.mxu0 0.0
      %2447 = vmatprep.subr.mxu0 0.0
      %2448 = vmatpush1.msra.mxu0 0.0
      %2449 = vmatprep.subr.mxu0 0.0
      %2450 = vmatpush1.msra.mxu0 0.0
      %2451 = vmatprep.subr.mxu0 0.0
      %2452 = vmatpush1.msra.mxu0 0.0
      %2453 = vmatprep.subr.mxu0 0.0
      %2454 = vmatpush1.msra.mxu0 0.0
      %2455 = vmatprep.subr.mxu0 0.0
      %2456 = vmatpush1.msra.mxu0 0.0
      %2457 = vmatprep.subr.mxu0 0.0
      %2458 = vmatpush1.msra.mxu0 0.0
      %2459 = vmatprep.subr.mxu0 0.0
      %2460 = vmatpush1.msra.mxu0 0.0
      %2461 = vmatprep.subr.mxu0 0.0
      %2462 = vmatpush1.msra.mxu0 0.0
      %2463 = vmatprep.subr.mxu0 0.0
      %2464 = vmatpush1.msra.mxu0 0.0
      %2465 = vmatprep.subr.mxu0 0.0
      %2466 = vmatpush1.msra.mxu0 0.0
      %2467 = vmatprep.subr.mxu0 0.0
      %2468 = vmatpush1.msra.mxu0 0.0
      %2469 = vmatprep.subr.mxu0 0.0
      %2470 = vmatpush1.msra.mxu0 0.0
      %2471 = vmatprep.subr.mxu0 0.0
      %2472 = vmatpush1.msra.mxu0 0.0
      %2473 = vmatprep.subr.mxu0 0.0
      %2474 = vmatpush1.msra.mxu0 0.0
      %2475 = vmatprep.subr.mxu0 0.0
      %2476 = vmatpush1.msra.mxu0 0.0
      %2477 = vmatprep.subr.mxu0 0.0
      %2478 = vmatpush1.msra.mxu0 0.0
      %2479 = vmatprep.subr.mxu0 0.0
      %2480 = vmatpush1.msra.mxu0 0.0
      %2481 = vmatprep.mubr.f32.mxu0 0.0
      %2482 = vmatmul.mubr.f32.gmra.mrb[0].mxu0 %v2413
      %v2483 = vpop.f32.mrb[0].mxu0
      %v2484 = vadd.f32 0.0, %v2483
      %v2485 = vpop.f32.mrb[0].mxu0
      %2486 = vdwg.mxu0
      %v2487 = vadd.f32 %v2407, %v2484
      %s2488 = scalar_lea.vmem %s7, 24
      %v2489 = vld [vmem:[%s2488] sm:$0xf]
      %2490 = vrot.lane.b32.xlu0 %v2011, 108
      %v2491 = vpop.permute.xlu0 %2490
      %v2493 = vsel %vm472, %v2489, 0
      %v2495 = vsel %vm476, %v2491, 0
      %2497 = vmatprep.subr.mxu0 0.0
      %2498 = vmatpush1.msra.mxu0 %v2495
      %2499 = vmatprep.subr.mxu0 0.0
      %2500 = vmatpush1.msra.mxu0 0.0
      %2501 = vmatprep.subr.mxu0 0.0
      %2502 = vmatpush1.msra.mxu0 0.0
      %2503 = vmatprep.subr.mxu0 0.0
      %2504 = vmatpush1.msra.mxu0 0.0
      %2505 = vmatprep.subr.mxu0 0.0
      %2506 = vmatpush1.msra.mxu0 0.0
      %2507 = vmatprep.subr.mxu0 0.0
      %2508 = vmatpush1.msra.mxu0 0.0
      %2509 = vmatprep.subr.mxu0 0.0
      %2510 = vmatpush1.msra.mxu0 0.0
      %2511 = vmatprep.subr.mxu0 0.0
      %2512 = vmatpush1.msra.mxu0 0.0
      %2513 = vmatprep.subr.mxu0 0.0
      %2514 = vmatpush1.msra.mxu0 0.0
      %2515 = vmatprep.subr.mxu0 0.0
      %2516 = vmatpush1.msra.mxu0 0.0
      %2517 = vmatprep.subr.mxu0 0.0
      %2518 = vmatpush1.msra.mxu0 0.0
      %2519 = vmatprep.subr.mxu0 0.0
      %2520 = vmatpush1.msra.mxu0 0.0
      %2521 = vmatprep.subr.mxu0 0.0
      %2522 = vmatpush1.msra.mxu0 0.0
      %2523 = vmatprep.subr.mxu0 0.0
      %2524 = vmatpush1.msra.mxu0 0.0
      %2525 = vmatprep.subr.mxu0 0.0
      %2526 = vmatpush1.msra.mxu0 0.0
      %2527 = vmatprep.subr.mxu0 0.0
      %2528 = vmatpush1.msra.mxu0 0.0
      %2529 = vmatprep.subr.mxu0 0.0
      %2530 = vmatpush1.msra.mxu0 0.0
      %2531 = vmatprep.subr.mxu0 0.0
      %2532 = vmatpush1.msra.mxu0 0.0
      %2533 = vmatprep.subr.mxu0 0.0
      %2534 = vmatpush1.msra.mxu0 0.0
      %2535 = vmatprep.subr.mxu0 0.0
      %2536 = vmatpush1.msra.mxu0 0.0
      %2537 = vmatprep.subr.mxu0 0.0
      %2538 = vmatpush1.msra.mxu0 0.0
      %2539 = vmatprep.subr.mxu0 0.0
      %2540 = vmatpush1.msra.mxu0 0.0
      %2541 = vmatprep.subr.mxu0 0.0
      %2542 = vmatpush1.msra.mxu0 0.0
      %2543 = vmatprep.subr.mxu0 0.0
      %2544 = vmatpush1.msra.mxu0 0.0
      %2545 = vmatprep.subr.mxu0 0.0
      %2546 = vmatpush1.msra.mxu0 0.0
      %2547 = vmatprep.subr.mxu0 0.0
      %2548 = vmatpush1.msra.mxu0 0.0
      %2549 = vmatprep.subr.mxu0 0.0
      %2550 = vmatpush1.msra.mxu0 0.0
      %2551 = vmatprep.subr.mxu0 0.0
      %2552 = vmatpush1.msra.mxu0 0.0
      %2553 = vmatprep.subr.mxu0 0.0
      %2554 = vmatpush1.msra.mxu0 0.0
      %2555 = vmatprep.subr.mxu0 0.0
      %2556 = vmatpush1.msra.mxu0 0.0
      %2557 = vmatprep.subr.mxu0 0.0
      %2558 = vmatpush1.msra.mxu0 0.0
      %2559 = vmatprep.subr.mxu0 0.0
      %2560 = vmatpush1.msra.mxu0 0.0
      %2561 = vmatprep.mubr.f32.mxu0 0.0
      %2562 = vmatmul.mubr.f32.gmra.mrb[0].mxu0 %v2493
      %v2563 = vpop.f32.mrb[0].mxu0
      %v2564 = vadd.f32 0.0, %v2563
      %v2565 = vpop.f32.mrb[0].mxu0
      %2566 = vdwg.mxu0
      %v2567 = vadd.f32 %v2487, %v2564
      %s2568 = scalar_lea.vmem %s7, 28
      %v2569 = vld [vmem:[%s2568] sm:$0xf]
      %2570 = vrot.lane.b32.xlu0 %v2011, 107
      %v2571 = vpop.permute.xlu0 %2570
      %v2573 = vsel %vm472, %v2569, 0
      %v2575 = vsel %vm476, %v2571, 0
      %2577 = vmatprep.subr.mxu0 0.0
      %2578 = vmatpush1.msra.mxu0 %v2575
      %2579 = vmatprep.subr.mxu0 0.0
      %2580 = vmatpush1.msra.mxu0 0.0
      %2581 = vmatprep.subr.mxu0 0.0
      %2582 = vmatpush1.msra.mxu0 0.0
      %2583 = vmatprep.subr.mxu0 0.0
      %2584 = vmatpush1.msra.mxu0 0.0
      %2585 = vmatprep.subr.mxu0 0.0
      %2586 = vmatpush1.msra.mxu0 0.0
      %2587 = vmatprep.subr.mxu0 0.0
      %2588 = vmatpush1.msra.mxu0 0.0
      %2589 = vmatprep.subr.mxu0 0.0
      %2590 = vmatpush1.msra.mxu0 0.0
      %2591 = vmatprep.subr.mxu0 0.0
      %2592 = vmatpush1.msra.mxu0 0.0
      %2593 = vmatprep.subr.mxu0 0.0
      %2594 = vmatpush1.msra.mxu0 0.0
      %2595 = vmatprep.subr.mxu0 0.0
      %2596 = vmatpush1.msra.mxu0 0.0
      %2597 = vmatprep.subr.mxu0 0.0
      %2598 = vmatpush1.msra.mxu0 0.0
      %2599 = vmatprep.subr.mxu0 0.0
      %2600 = vmatpush1.msra.mxu0 0.0
      %2601 = vmatprep.subr.mxu0 0.0
      %2602 = vmatpush1.msra.mxu0 0.0
      %2603 = vmatprep.subr.mxu0 0.0
      %2604 = vmatpush1.msra.mxu0 0.0
      %2605 = vmatprep.subr.mxu0 0.0
      %2606 = vmatpush1.msra.mxu0 0.0
      %2607 = vmatprep.subr.mxu0 0.0
      %2608 = vmatpush1.msra.mxu0 0.0
      %2609 = vmatprep.subr.mxu0 0.0
      %2610 = vmatpush1.msra.mxu0 0.0
      %2611 = vmatprep.subr.mxu0 0.0
      %2612 = vmatpush1.msra.mxu0 0.0
      %2613 = vmatprep.subr.mxu0 0.0
      %2614 = vmatpush1.msra.mxu0 0.0
      %2615 = vmatprep.subr.mxu0 0.0
      %2616 = vmatpush1.msra.mxu0 0.0
      %2617 = vmatprep.subr.mxu0 0.0
      %2618 = vmatpush1.msra.mxu0 0.0
      %2619 = vmatprep.subr.mxu0 0.0
      %2620 = vmatpush1.msra.mxu0 0.0
      %2621 = vmatprep.subr.mxu0 0.0
      %2622 = vmatpush1.msra.mxu0 0.0
      %2623 = vmatprep.subr.mxu0 0.0
      %2624 = vmatpush1.msra.mxu0 0.0
      %2625 = vmatprep.subr.mxu0 0.0
      %2626 = vmatpush1.msra.mxu0 0.0
      %2627 = vmatprep.subr.mxu0 0.0
      %2628 = vmatpush1.msra.mxu0 0.0
      %2629 = vmatprep.subr.mxu0 0.0
      %2630 = vmatpush1.msra.mxu0 0.0
      %2631 = vmatprep.subr.mxu0 0.0
      %2632 = vmatpush1.msra.mxu0 0.0
      %2633 = vmatprep.subr.mxu0 0.0
      %2634 = vmatpush1.msra.mxu0 0.0
      %2635 = vmatprep.subr.mxu0 0.0
      %2636 = vmatpush1.msra.mxu0 0.0
      %2637 = vmatprep.subr.mxu0 0.0
      %2638 = vmatpush1.msra.mxu0 0.0
      %2639 = vmatprep.subr.mxu0 0.0
      %2640 = vmatpush1.msra.mxu0 0.0
      %2641 = vmatprep.mubr.f32.mxu0 0.0
      %2642 = vmatmul.mubr.f32.gmra.mrb[0].mxu0 %v2573
      %v2643 = vpop.f32.mrb[0].mxu0
      %v2644 = vadd.f32 0.0, %v2643
      %v2645 = vpop.f32.mrb[0].mxu0
      %2646 = vdwg.mxu0
      %v2647 = vadd.f32 %v2567, %v2644
      %s2648 = scalar_lea.vmem %s7, 32
      %v2649 = vld [vmem:[%s2648] sm:$0xf]
      %2650 = vrot.lane.b32.xlu0 %v2011, 106
      %v2651 = vpop.permute.xlu0 %2650
      %v2653 = vsel %vm472, %v2649, 0
      %v2655 = vsel %vm476, %v2651, 0
      %2657 = vmatprep.subr.mxu0 0.0
      %2658 = vmatpush1.msra.mxu0 %v2655
      %2659 = vmatprep.subr.mxu0 0.0
      %2660 = vmatpush1.msra.mxu0 0.0
      %2661 = vmatprep.subr.mxu0 0.0
      %2662 = vmatpush1.msra.mxu0 0.0
      %2663 = vmatprep.subr.mxu0 0.0
      %2664 = vmatpush1.msra.mxu0 0.0
      %2665 = vmatprep.subr.mxu0 0.0
      %2666 = vmatpush1.msra.mxu0 0.0
      %2667 = vmatprep.subr.mxu0 0.0
      %2668 = vmatpush1.msra.mxu0 0.0
      %2669 = vmatprep.subr.mxu0 0.0
      %2670 = vmatpush1.msra.mxu0 0.0
      %2671 = vmatprep.subr.mxu0 0.0
      %2672 = vmatpush1.msra.mxu0 0.0
      %2673 = vmatprep.subr.mxu0 0.0
      %2674 = vmatpush1.msra.mxu0 0.0
      %2675 = vmatprep.subr.mxu0 0.0
      %2676 = vmatpush1.msra.mxu0 0.0
      %2677 = vmatprep.subr.mxu0 0.0
      %2678 = vmatpush1.msra.mxu0 0.0
      %2679 = vmatprep.subr.mxu0 0.0
      %2680 = vmatpush1.msra.mxu0 0.0
      %2681 = vmatprep.subr.mxu0 0.0
      %2682 = vmatpush1.msra.mxu0 0.0
      %2683 = vmatprep.subr.mxu0 0.0
      %2684 = vmatpush1.msra.mxu0 0.0
      %2685 = vmatprep.subr.mxu0 0.0
      %2686 = vmatpush1.msra.mxu0 0.0
      %2687 = vmatprep.subr.mxu0 0.0
      %2688 = vmatpush1.msra.mxu0 0.0
      %2689 = vmatprep.subr.mxu0 0.0
      %2690 = vmatpush1.msra.mxu0 0.0
      %2691 = vmatprep.subr.mxu0 0.0
      %2692 = vmatpush1.msra.mxu0 0.0
      %2693 = vmatprep.subr.mxu0 0.0
      %2694 = vmatpush1.msra.mxu0 0.0
      %2695 = vmatprep.subr.mxu0 0.0
      %2696 = vmatpush1.msra.mxu0 0.0
      %2697 = vmatprep.subr.mxu0 0.0
      %2698 = vmatpush1.msra.mxu0 0.0
      %2699 = vmatprep.subr.mxu0 0.0
      %2700 = vmatpush1.msra.mxu0 0.0
      %2701 = vmatprep.subr.mxu0 0.0
      %2702 = vmatpush1.msra.mxu0 0.0
      %2703 = vmatprep.subr.mxu0 0.0
      %2704 = vmatpush1.msra.mxu0 0.0
      %2705 = vmatprep.subr.mxu0 0.0
      %2706 = vmatpush1.msra.mxu0 0.0
      %2707 = vmatprep.subr.mxu0 0.0
      %2708 = vmatpush1.msra.mxu0 0.0
      %2709 = vmatprep.subr.mxu0 0.0
      %2710 = vmatpush1.msra.mxu0 0.0
      %2711 = vmatprep.subr.mxu0 0.0
      %2712 = vmatpush1.msra.mxu0 0.0
      %2713 = vmatprep.subr.mxu0 0.0
      %2714 = vmatpush1.msra.mxu0 0.0
      %2715 = vmatprep.subr.mxu0 0.0
      %2716 = vmatpush1.msra.mxu0 0.0
      %2717 = vmatprep.subr.mxu0 0.0
      %2718 = vmatpush1.msra.mxu0 0.0
      %2719 = vmatprep.subr.mxu0 0.0
      %2720 = vmatpush1.msra.mxu0 0.0
      %2721 = vmatprep.mubr.f32.mxu0 0.0
      %2722 = vmatmul.mubr.f32.gmra.mrb[0].mxu0 %v2653
      %v2723 = vpop.f32.mrb[0].mxu0
      %v2724 = vadd.f32 0.0, %v2723
      %v2725 = vpop.f32.mrb[0].mxu0
      %2726 = vdwg.mxu0
      %v2727 = vadd.f32 %v2647, %v2724
      %v2728 = vmul.f32 %v2727, %v1188
      %v2729 = vsel %vm1191, %v2728, 0.0
      %2730 = vadd.xlane.f32.xlu0 %v2729
      %v2731 = vpop.xlane.xlu0 %2730
      %v2732 = vmul.f32 %v2731, 0.015625
      %v2733 = vmul.f32 %v2728, %v2727
      %v2734 = vsel %vm1191, %v2733, 0.0
      %2735 = vadd.xlane.f32.xlu0 %v2734
      %v2736 = vpop.xlane.xlu0 %2735
      %v2737 = vmul.f32 %v2736, 0.015625
      %v2738 = vmul.f32 %v2732, %v2732
      %v2739 = vsub.f32 %v2737, %v2738
      %v2740 = vmax.f32 %v2739, 0.0
      %v2741 = vsub.f32 %v2727, %v2732
      %v2742 = vadd.f32 %v2740, 1e-05
      %v2743 = vrsqrt.pop %v2742
      %v2744 = vmul.f32 %v2741, %v2743
      %v2745 = vld [vmem:[%s346 + $0x4] sm:$0xf]
      %2747 = vrot.lane.b32.xlu0 %v2745, 127
      %v2748 = vpop.permute.xlu0 %2747
      %v2750 = vadd.f32 %v2745, %v2748
      %2751 = vrot.lane.b32.xlu0 %v2745, 126
      %v2752 = vpop.permute.xlu0 %2751
      %v2754 = vadd.f32 %v2750, %v2752
      %2755 = vrot.lane.b32.xlu0 %v2745, 118
      %v2756 = vpop.permute.xlu0 %2755
      %v2758 = vadd.f32 %v2754, %v2756
      %2759 = vrot.lane.b32.xlu0 %v2745, 117
      %v2760 = vpop.permute.xlu0 %2759
      %v2762 = vadd.f32 %v2758, %v2760
      %2763 = vrot.lane.b32.xlu0 %v2745, 116
      %v2764 = vpop.permute.xlu0 %2763
      %v2766 = vadd.f32 %v2762, %v2764
      %2767 = vrot.lane.b32.xlu0 %v2745, 108
      %v2768 = vpop.permute.xlu0 %2767
      %v2770 = vadd.f32 %v2766, %v2768
      %2771 = vrot.lane.b32.xlu0 %v2745, 107
      %v2772 = vpop.permute.xlu0 %2771
      %v2774 = vadd.f32 %v2770, %v2772
      %2775 = vrot.lane.b32.xlu0 %v2745, 106
      %v2776 = vpop.permute.xlu0 %2775
      %v2778 = vadd.f32 %v2774, %v2776
      %v2779 = vmul.f32 %v2778, 0.11111111
      %v2780 = vadd.f32 %v2744, %v2779
      %v2781 = vmul.f32 %v2780, %v1188
      %2783 = vrot.lane.b32.xlu0 %v2781, 11
      %v2784 = vpop.permute.xlu0 %2783
      %2786 = vst.msk [vmem:[%s346 + $0x8] sm:$0xf] %vm1217, %v2784
      %p2787 = scmp.lt.s32.totalorder %s20, 1
      %s2788 = scalar_select %p2787, %s20, 1
      %s2789 = smul.addr %s2788, 2
      %s2790 = smul.addr %s2789, 8
      %s2791 = scalar_lea.vmem %s9, %s2790
      // Predicated region
      $region57: #{reduction_cell.1} parent=55 // pred_check
        %p2792 = pneg %p237
      $region58: #{reduction_cell.1} parent=55 // pred_check_branch
        %2794 = sbr.rel (%p2792) target = $region60
      $region59: #{reduction_cell.1} parent=55 // pred_region
        _
      $region60: #{reduction_cell.1} parent=55 // pred_fallthru
        _
    $region56: #{reduction_cell.1} parent=5 // pred_fallthru
      _
    %p2795 = scmp.le.s32.totalorder 2, %s15
    // Predicated region
    $region61: #{reduction_cell.1} parent=5 // pred_check
      %p2796 = pneg %p2795
    $region62: #{reduction_cell.1} parent=5 // pred_check_branch
      %2798 = sbr.rel (%p2796) target = $region64
    $region63: #{reduction_cell.1} parent=5 // pred_region
      %s2799 = ssub.s32 %s15, 2
      // Predicated region
      $region65: #{reduction_cell.1} parent=63 // pred_check
        %p2800 = pneg %p243
      $region66: #{reduction_cell.1} parent=63 // pred_check_branch
        %2802 = sbr.rel (%p2800) target = $region68
      $region67: #{reduction_cell.1} parent=63 // pred_region
        %p2803 = scmp.lt.s32.totalorder %s21, 1
        %s2804 = scalar_select %p2803, %s21, 1
        %s2805 = smul.addr %s2804, 2
        %s2806 = smul.addr %s2805, 8
        %s2807 = scalar_lea.vmem %s9, %s2806
      $region68: #{reduction_cell.1} parent=63 // pred_fallthru
        _
    $region64: #{reduction_cell.1} parent=5 // pred_fallthru
      _
  $region6: #{reduction_cell.1} parent=0 // loop_footer
    %s19 = sadd.s32 1, %s15
  $region7: #{reduction_cell.1} parent=0 // loop_footer_branch
    %14 = sbr.rel target = $region3
  $region8: #{reduction_cell.1} parent=0 // loop_exit
    _

</llo_original>
